<compile_context>
chip_gen: v6e
topology: v6e:2x2x1
jax: 0.10.0
libtpu: 0.0.40
codegen_flags: <defaults>
</compile_context>

<pallas_src>
import jax
import jax.numpy as jnp
import numpy as np
from jax.experimental import pallas as pl
from jax.experimental.pallas import tpu as pltpu

EPS = 1e-5
D_IN, D1, D2, D3 = 3072, 1024, 512, 256
D_OUT = 10
D_OUT_PAD = 128          # lane-dense padded width of the final layer
TK = 1024                # K-tile for streaming w1 (3072 / 1024 = 3 grid steps)


def _bn_relu(h, gbe_ref):
    """Training-mode BatchNorm1d (biased var, centered two-pass) + ReLU.

    gbe_ref is a (2, D) VMEM ref: row 0 = gamma, row 1 = beta.
    """
    g = gbe_ref[0:1, :]
    be = gbe_ref[1:2, :]
    mu = jnp.mean(h, axis=0, keepdims=True)
    d = h - mu
    var = jnp.mean(d * d, axis=0, keepdims=True)
    s = g * jax.lax.rsqrt(var + EPS)          # rsqrt -> EUP slot (free-ish)
    return jnp.maximum(d * s + be, 0.0)


def _mlp_kernel(x_ref,
                w1_ref, gbe1_ref,
                w2_ref, gbe2_ref,
                w3_ref, gbe3_ref,
                w4_ref, b4_ref,
                out_ref, acc_ref):
    k = pl.program_id(0)

    @pl.when(k == 0)
    def _():
        acc_ref[...] = jnp.zeros_like(acc_ref)

    # Layer 1: partial matmul over this K-tile (bf16 x bf16 on MXU, f32 acc).
    acc_ref[...] += jnp.dot(x_ref[...], w1_ref[...],
                            preferred_element_type=jnp.float32)

    @pl.when(k == pl.num_programs(0) - 1)
    def _():
        # Linear biases b1/b2/b3 are omitted: training-mode BN subtracts the
        # batch mean, which cancels any per-feature constant exactly.
        h = _bn_relu(acc_ref[...], gbe1_ref)

        h = jnp.dot(h.astype(jnp.bfloat16), w2_ref[...],
                    preferred_element_type=jnp.float32)
        h = _bn_relu(h, gbe2_ref)

        h = jnp.dot(h.astype(jnp.bfloat16), w3_ref[...],
                    preferred_element_type=jnp.float32)
        h = _bn_relu(h, gbe3_ref)

        out = jnp.dot(h.astype(jnp.bfloat16), w4_ref[...],
                      preferred_element_type=jnp.float32) + b4_ref[...]
        out_ref[...] = out.astype(out_ref.dtype)


def net_forward(x_nchw, params):
    """x_nchw: (B, C, H, W) f32 with C*H*W == 3072 and B % 8 == 0."""
    B = x_nchw.shape[0]
    assert B % 8 == 0, "batch must be a multiple of 8 for TPU sublane tiling"
    x2d = x_nchw.reshape(B, -1)               # matches x.reshape(x.size(0), -1)
    assert x2d.shape[1] == D_IN
    x2d = x2d.astype(jnp.bfloat16)            # bf16 input stream (half the bytes)

    args = (
        x2d,
        params["w1"], params["gbe1"],
        params["w2"], params["gbe2"],
        params["w3"], params["gbe3"],
        params["w4"], params["b4"],
    )

    const = lambda shape: pl.BlockSpec(shape, lambda k: (0, 0))
    grid_spec = pltpu.PrefetchScalarGridSpec(
        num_scalar_prefetch=0,
        grid=(D_IN // TK,),
        in_specs=[
            pl.BlockSpec((B, TK), lambda k: (0, k)),      # x  (streamed over K)
            pl.BlockSpec((TK, D1), lambda k: (k, 0)),     # w1 (streamed over K)
            const((2, D1)),                                # gamma/beta layer 1
            const((D1, D2)),                               # w2
            const((2, D2)),                                # gamma/beta layer 2
            const((D2, D3)),                               # w3
            const((2, D3)),                                # gamma/beta layer 3
            const((D3, D_OUT_PAD)),                        # w4 (padded)
            const((1, D_OUT_PAD)),                         # b4 (padded)
        ],
        out_specs=pl.BlockSpec((B, D_OUT_PAD), lambda k: (0, 0)),
        scratch_shapes=[pltpu.VMEM((B, D1), jnp.float32)],
    )

    out_pad = pl.pallas_call(
        _mlp_kernel,
        out_shape=jax.ShapeDtypeStruct((B, D_OUT_PAD), jnp.float32),
        grid_spec=grid_spec,
        compiler_params=pltpu.CompilerParams(
            dimension_semantics=("arbitrary",),            # K axis is a reduction
            vmem_limit_bytes=32 * 1024 * 1024),
    )(*args)

    return out_pad[:, :D_OUT]


def init_params(key):
    """Same layer shapes as the PyTorch module.  Linear weights bf16 (in, out);
    BN gamma/beta stacked f32 (2, out); final bias f32 padded to 128 lanes.
    b1/b2/b3 are not materialized (exactly cancelled by training-mode BN)."""
    dims = [(D_IN, D1), (D1, D2), (D2, D3), (D3, D_OUT)]
    params = {}
    keys = jax.random.split(key, len(dims) * 2)
    for i, (din, dout) in enumerate(dims, start=1):
        kw, kb = keys[2 * (i - 1)], keys[2 * (i - 1) + 1]
        bound = 1.0 / np.sqrt(din)
        w = jax.random.uniform(kw, (din, dout), jnp.float32, -bound, bound)
        if i == 4:  # pad final layer to lane-dense width 128 (zero lanes 10..127)
            b = jax.random.uniform(kb, (1, dout), jnp.float32, -bound, bound)
            w = jnp.pad(w, ((0, 0), (0, D_OUT_PAD - dout)))
            b = jnp.pad(b, ((0, 0), (0, D_OUT_PAD - dout)))
            params["b4"] = b
        params[f"w{i}"] = w.astype(jnp.bfloat16)
        if i <= 3:  # BatchNorm1d affine defaults: gamma=1, beta=0 (packed)
            params[f"gbe{i}"] = jnp.concatenate(
                [jnp.ones((1, dout), jnp.float32),
                 jnp.zeros((1, dout), jnp.float32)], axis=0)
    return params


def _reference_forward(x_nchw, p):
    """Pure-JAX reference mirroring the kernel's mixed-precision numerics."""
    h = x_nchw.reshape(x_nchw.shape[0], -1).astype(jnp.bfloat16)

    def dot_bf16(a, w):
        return jnp.dot(a.astype(jnp.bfloat16), w,
                       preferred_element_type=jnp.float32)

    def bn_relu(h, gbe):
        g, be = gbe[0:1, :], gbe[1:2, :]
        mu = jnp.mean(h, axis=0, keepdims=True)
        var = jnp.mean((h - mu) ** 2, axis=0, keepdims=True)
        return jnp.maximum((h - mu) / jnp.sqrt(var + EPS) * g + be, 0.0)

    h = bn_relu(dot_bf16(h, p["w1"]), p["gbe1"])
    h = bn_relu(dot_bf16(h, p["w2"]), p["gbe2"])
    h = bn_relu(dot_bf16(h, p["w3"]), p["gbe3"])
    return (dot_bf16(h, p["w4"]) + p["b4"])[:, :D_OUT]


if __name__ == "__main__":
    key = jax.random.PRNGKey(0)
    k_param, k_x = jax.random.split(key)

    params = init_params(k_param)
    # CIFAR-like input: (B, C, H, W) with C*H*W = 3*32*32 = 3072
    x = jax.random.normal(k_x, (8, 3, 32, 32), jnp.float32)

    out = jax.block_until_ready(net_forward(x, params))
    ref = jax.block_until_ready(_reference_forward(x, params))

    np.testing.assert_allclose(np.asarray(out), np.asarray(ref),
                               rtol=2e-2, atol=2e-2)
    print("KERNEL_OK")
</pallas_src>

<mosaic_0001>
module attributes {stable_mosaic.version = 11 : i64} {
  func.func @_mlp_kernel(%arg0: i32, %arg1: memref<8x1024xbf16, #tpu.memory_space<vmem>>, %arg2: memref<1024x1024xbf16, #tpu.memory_space<vmem>>, %arg3: memref<2x1024xf32, #tpu.memory_space<vmem>>, %arg4: memref<1024x512xbf16, #tpu.memory_space<vmem>>, %arg5: memref<2x512xf32, #tpu.memory_space<vmem>>, %arg6: memref<512x256xbf16, #tpu.memory_space<vmem>>, %arg7: memref<2x256xf32, #tpu.memory_space<vmem>>, %arg8: memref<256x128xbf16, #tpu.memory_space<vmem>>, %arg9: memref<1x128xf32, #tpu.memory_space<vmem>>, %arg10: memref<8x128xf32, #tpu.memory_space<vmem>>, %arg11: memref<8x1024xf32, #tpu.memory_space<vmem>>) attributes {dimension_semantics = [#tpu.dimension_semantics<arbitrary>], iteration_bounds = array<i64: 3>, scalar_prefetch = 0 : i64, scratch_operands = 1 : i64, tpu.core_type = #tpu.core_type<tc>, window_params = [{transform_indices = @transform_0, window_bounds = array<i64: 8, 1024>}, {transform_indices = @transform_1, window_bounds = array<i64: 1024, 1024>}, {pipeline_mode = #tpu.pipeline_mode<synchronous>, transform_indices = @transform_2, window_bounds = array<i64: 2, 1024>}, {pipeline_mode = #tpu.pipeline_mode<synchronous>, transform_indices = @transform_3, window_bounds = array<i64: 1024, 512>}, {pipeline_mode = #tpu.pipeline_mode<synchronous>, transform_indices = @transform_4, window_bounds = array<i64: 2, 512>}, {pipeline_mode = #tpu.pipeline_mode<synchronous>, transform_indices = @transform_5, window_bounds = array<i64: 512, 256>}, {pipeline_mode = #tpu.pipeline_mode<synchronous>, transform_indices = @transform_6, window_bounds = array<i64: 2, 256>}, {pipeline_mode = #tpu.pipeline_mode<synchronous>, transform_indices = @transform_7, window_bounds = array<i64: 256, 128>}, {pipeline_mode = #tpu.pipeline_mode<synchronous>, transform_indices = @transform_8, window_bounds = array<i64: 1, 128>}, {pipeline_mode = #tpu.pipeline_mode<synchronous>, transform_indices = @transform_9, window_bounds = array<i64: 8, 128>}]} {
    %c0_i32 = arith.constant 0 : i32
    %0 = arith.cmpi eq, %arg0, %c0_i32 : i32
    %1 = arith.extui %0 : i1 to i32
    %c0_i32_0 = arith.constant 0 : i32
    %2 = arith.cmpi ne, %1, %c0_i32_0 : i32
    scf.if %2 {
      %cst_9 = arith.constant 0.000000e+00 : f32
      %12 = vector.broadcast %cst_9 : f32 to vector<8x1024xf32>
      %c0_10 = arith.constant 0 : index
      %c0_11 = arith.constant 0 : index
      %13 = vector.load %arg11[%c0_10, %c0_11] : memref<8x1024xf32, #tpu.memory_space<vmem>>, vector<8x1024xf32>
      tpu.vector_store %arg11[%c0_10, %c0_11], %12 {strides = array<i32>} : memref<8x1024xf32, #tpu.memory_space<vmem>>, vector<8x1024xf32>,
    } else {
    }
    %c0 = arith.constant 0 : index
    %c0_1 = arith.constant 0 : index
    %3 = vector.load %arg11[%c0, %c0_1] : memref<8x1024xf32, #tpu.memory_space<vmem>>, vector<8x1024xf32>
    %c0_2 = arith.constant 0 : index
    %c0_3 = arith.constant 0 : index
    %4 = vector.load %arg1[%c0_2, %c0_3] : memref<8x1024xbf16, #tpu.memory_space<vmem>>, vector<8x1024xbf16>
    %c0_4 = arith.constant 0 : index
    %c0_5 = arith.constant 0 : index
    %5 = vector.load %arg2[%c0_4, %c0_5] : memref<1024x1024xbf16, #tpu.memory_space<vmem>>, vector<1024x1024xbf16>
    %cst = arith.constant dense<0.000000e+00> : vector<8x1024xf32>
    %6 = tpu.matmul %4, %5, %cst {dimension_numbers = #tpu.dot_dimension_numbers<[1], [0], [0], [1], [0, 0, 1, 1], [], []>} : vector<8x1024xbf16>, vector<1024x1024xbf16>, vector<8x1024xf32> -> vector<8x1024xf32>
    %7 = arith.addf %3, %6 : vector<8x1024xf32>
    %c0_6 = arith.constant 0 : index
    %c0_7 = arith.constant 0 : index
    %8 = vector.load %arg11[%c0_6, %c0_7] : memref<8x1024xf32, #tpu.memory_space<vmem>>, vector<8x1024xf32>
    tpu.vector_store %arg11[%c0_6, %c0_7], %7 {strides = array<i32>} : memref<8x1024xf32, #tpu.memory_space<vmem>>, vector<8x1024xf32>,
    %c2_i32 = arith.constant 2 : i32
    %9 = arith.cmpi eq, %arg0, %c2_i32 : i32
    %10 = arith.extui %9 : i1 to i32
    %c0_i32_8 = arith.constant 0 : i32
    %11 = arith.cmpi ne, %10, %c0_i32_8 : i32
    scf.if %11 {
      %c0_9 = arith.constant 0 : index
      %c0_10 = arith.constant 0 : index
      %12 = vector.load %arg11[%c0_9, %c0_10] : memref<8x1024xf32, #tpu.memory_space<vmem>>, vector<8x1024xf32>
      %c0_11 = arith.constant 0 : index
      %c0_12 = arith.constant 0 : index
      %13 = vector.load %arg3[%c0_11, %c0_12] : memref<2x1024xf32, #tpu.memory_space<vmem>>, vector<1x1024xf32>
      %c1 = arith.constant 1 : index
      %c0_13 = arith.constant 0 : index
      %14 = vector.load %arg3[%c1, %c0_13] : memref<2x1024xf32, #tpu.memory_space<vmem>>, vector<1x1024xf32>
      %cst_14 = arith.constant dense<0.000000e+00> : vector<1024xf32>
      %15 = vector.multi_reduction <add>, %12, %cst_14 [0] : vector<8x1024xf32> to vector<1024xf32>
      %16 = vector.shape_cast %15 : vector<1024xf32> to vector<1x1024xf32>
      %cst_15 = arith.constant 8.000000e+00 : f32
      %17 = vector.broadcast %cst_15 : f32 to vector<1x1024xf32>
      %18 = arith.divf %16, %17 : vector<1x1024xf32>
      %19 = vector.broadcast %18 : vector<1x1024xf32> to vector<8x1024xf32>
      %20 = arith.subf %12, %19 : vector<8x1024xf32>
      %21 = arith.mulf %20, %20 : vector<8x1024xf32>
      %cst_16 = arith.constant dense<0.000000e+00> : vector<1024xf32>
      %22 = vector.multi_reduction <add>, %21, %cst_16 [0] : vector<8x1024xf32> to vector<1024xf32>
      %23 = vector.shape_cast %22 : vector<1024xf32> to vector<1x1024xf32>
      %cst_17 = arith.constant 8.000000e+00 : f32
      %24 = vector.broadcast %cst_17 : f32 to vector<1x1024xf32>
      %25 = arith.divf %23, %24 : vector<1x1024xf32>
      %cst_18 = arith.constant 9.99999974E-6 : f32
      %26 = vector.broadcast %cst_18 : f32 to vector<1x1024xf32>
      %27 = arith.addf %25, %26 : vector<1x1024xf32>
      %28 = math.rsqrt %27 : vector<1x1024xf32>
      %29 = arith.mulf %13, %28 : vector<1x1024xf32>
      %30 = vector.broadcast %29 : vector<1x1024xf32> to vector<8x1024xf32>
      %31 = arith.mulf %20, %30 : vector<8x1024xf32>
      %32 = vector.broadcast %14 : vector<1x1024xf32> to vector<8x1024xf32>
      %33 = arith.addf %31, %32 : vector<8x1024xf32>
      %cst_19 = arith.constant 0.000000e+00 : f32
      %34 = vector.broadcast %cst_19 : f32 to vector<8x1024xf32>
      %35 = arith.maximumf %33, %34 : vector<8x1024xf32>
      %36 = arith.truncf %35 : vector<8x1024xf32> to vector<8x1024xbf16>
      %c0_20 = arith.constant 0 : index
      %c0_21 = arith.constant 0 : index
      %37 = vector.load %arg4[%c0_20, %c0_21] : memref<1024x512xbf16, #tpu.memory_space<vmem>>, vector<1024x512xbf16>
      %cst_22 = arith.constant dense<0.000000e+00> : vector<8x512xf32>
      %38 = tpu.matmul %36, %37, %cst_22 {dimension_numbers = #tpu.dot_dimension_numbers<[1], [0], [0], [1], [0, 0, 1, 1], [], []>} : vector<8x1024xbf16>, vector<1024x512xbf16>, vector<8x512xf32> -> vector<8x512xf32>
      %c0_23 = arith.constant 0 : index
      %c0_24 = arith.constant 0 : index
      %39 = vector.load %arg5[%c0_23, %c0_24] : memref<2x512xf32, #tpu.memory_space<vmem>>, vector<1x512xf32>
      %c1_25 = arith.constant 1 : index
      %c0_26 = arith.constant 0 : index
      %40 = vector.load %arg5[%c1_25, %c0_26] : memref<2x512xf32, #tpu.memory_space<vmem>>, vector<1x512xf32>
      %cst_27 = arith.constant dense<0.000000e+00> : vector<512xf32>
      %41 = vector.multi_reduction <add>, %38, %cst_27 [0] : vector<8x512xf32> to vector<512xf32>
      %42 = vector.shape_cast %41 : vector<512xf32> to vector<1x512xf32>
      %cst_28 = arith.constant 8.000000e+00 : f32
      %43 = vector.broadcast %cst_28 : f32 to vector<1x512xf32>
      %44 = arith.divf %42, %43 : vector<1x512xf32>
      %45 = vector.broadcast %44 : vector<1x512xf32> to vector<8x512xf32>
      %46 = arith.subf %38, %45 : vector<8x512xf32>
      %47 = arith.mulf %46, %46 : vector<8x512xf32>
      %cst_29 = arith.constant dense<0.000000e+00> : vector<512xf32>
      %48 = vector.multi_reduction <add>, %47, %cst_29 [0] : vector<8x512xf32> to vector<512xf32>
      %49 = vector.shape_cast %48 : vector<512xf32> to vector<1x512xf32>
      %cst_30 = arith.constant 8.000000e+00 : f32
      %50 = vector.broadcast %cst_30 : f32 to vector<1x512xf32>
      %51 = arith.divf %49, %50 : vector<1x512xf32>
      %cst_31 = arith.constant 9.99999974E-6 : f32
      %52 = vector.broadcast %cst_31 : f32 to vector<1x512xf32>
      %53 = arith.addf %51, %52 : vector<1x512xf32>
      %54 = math.rsqrt %53 : vector<1x512xf32>
      %55 = arith.mulf %39, %54 : vector<1x512xf32>
      %56 = vector.broadcast %55 : vector<1x512xf32> to vector<8x512xf32>
      %57 = arith.mulf %46, %56 : vector<8x512xf32>
      %58 = vector.broadcast %40 : vector<1x512xf32> to vector<8x512xf32>
      %59 = arith.addf %57, %58 : vector<8x512xf32>
      %cst_32 = arith.constant 0.000000e+00 : f32
      %60 = vector.broadcast %cst_32 : f32 to vector<8x512xf32>
      %61 = arith.maximumf %59, %60 : vector<8x512xf32>
      %62 = arith.truncf %61 : vector<8x512xf32> to vector<8x512xbf16>
      %c0_33 = arith.constant 0 : index
      %c0_34 = arith.constant 0 : index
      %63 = vector.load %arg6[%c0_33, %c0_34] : memref<512x256xbf16, #tpu.memory_space<vmem>>, vector<512x256xbf16>
      %cst_35 = arith.constant dense<0.000000e+00> : vector<8x256xf32>
      %64 = tpu.matmul %62, %63, %cst_35 {dimension_numbers = #tpu.dot_dimension_numbers<[1], [0], [0], [1], [0, 0, 1, 1], [], []>} : vector<8x512xbf16>, vector<512x256xbf16>, vector<8x256xf32> -> vector<8x256xf32>
      %c0_36 = arith.constant 0 : index
      %c0_37 = arith.constant 0 : index
      %65 = vector.load %arg7[%c0_36, %c0_37] : memref<2x256xf32, #tpu.memory_space<vmem>>, vector<1x256xf32>
      %c1_38 = arith.constant 1 : index
      %c0_39 = arith.constant 0 : index
      %66 = vector.load %arg7[%c1_38, %c0_39] : memref<2x256xf32, #tpu.memory_space<vmem>>, vector<1x256xf32>
      %cst_40 = arith.constant dense<0.000000e+00> : vector<256xf32>
      %67 = vector.multi_reduction <add>, %64, %cst_40 [0] : vector<8x256xf32> to vector<256xf32>
      %68 = vector.shape_cast %67 : vector<256xf32> to vector<1x256xf32>
      %cst_41 = arith.constant 8.000000e+00 : f32
      %69 = vector.broadcast %cst_41 : f32 to vector<1x256xf32>
      %70 = arith.divf %68, %69 : vector<1x256xf32>
      %71 = vector.broadcast %70 : vector<1x256xf32> to vector<8x256xf32>
      %72 = arith.subf %64, %71 : vector<8x256xf32>
      %73 = arith.mulf %72, %72 : vector<8x256xf32>
      %cst_42 = arith.constant dense<0.000000e+00> : vector<256xf32>
      %74 = vector.multi_reduction <add>, %73, %cst_42 [0] : vector<8x256xf32> to vector<256xf32>
      %75 = vector.shape_cast %74 : vector<256xf32> to vector<1x256xf32>
      %cst_43 = arith.constant 8.000000e+00 : f32
      %76 = vector.broadcast %cst_43 : f32 to vector<1x256xf32>
      %77 = arith.divf %75, %76 : vector<1x256xf32>
      %cst_44 = arith.constant 9.99999974E-6 : f32
      %78 = vector.broadcast %cst_44 : f32 to vector<1x256xf32>
      %79 = arith.addf %77, %78 : vector<1x256xf32>
      %80 = math.rsqrt %79 : vector<1x256xf32>
      %81 = arith.mulf %65, %80 : vector<1x256xf32>
      %82 = vector.broadcast %81 : vector<1x256xf32> to vector<8x256xf32>
      %83 = arith.mulf %72, %82 : vector<8x256xf32>
      %84 = vector.broadcast %66 : vector<1x256xf32> to vector<8x256xf32>
      %85 = arith.addf %83, %84 : vector<8x256xf32>
      %cst_45 = arith.constant 0.000000e+00 : f32
      %86 = vector.broadcast %cst_45 : f32 to vector<8x256xf32>
      %87 = arith.maximumf %85, %86 : vector<8x256xf32>
      %88 = arith.truncf %87 : vector<8x256xf32> to vector<8x256xbf16>
      %c0_46 = arith.constant 0 : index
      %c0_47 = arith.constant 0 : index
      %89 = vector.load %arg8[%c0_46, %c0_47] : memref<256x128xbf16, #tpu.memory_space<vmem>>, vector<256x128xbf16>
      %cst_48 = arith.constant dense<0.000000e+00> : vector<8x128xf32>
      %90 = tpu.matmul %88, %89, %cst_48 {dimension_numbers = #tpu.dot_dimension_numbers<[1], [0], [0], [1], [0, 0, 1, 1], [], []>} : vector<8x256xbf16>, vector<256x128xbf16>, vector<8x128xf32> -> vector<8x128xf32>
      %c0_49 = arith.constant 0 : index
      %c0_50 = arith.constant 0 : index
      %91 = vector.load %arg9[%c0_49, %c0_50] : memref<1x128xf32, #tpu.memory_space<vmem>>, vector<1x128xf32>
      %92 = vector.broadcast %91 : vector<1x128xf32> to vector<8x128xf32>
      %93 = arith.addf %90, %92 : vector<8x128xf32>
      %c0_51 = arith.constant 0 : index
      %c0_52 = arith.constant 0 : index
      %94 = vector.load %arg10[%c0_51, %c0_52] : memref<8x128xf32, #tpu.memory_space<vmem>>, vector<8x128xf32>
      tpu.vector_store %arg10[%c0_51, %c0_52], %93 {strides = array<i32>} : memref<8x128xf32, #tpu.memory_space<vmem>>, vector<8x128xf32>,
    } else {
    }
    return
  }
  func.func @transform_0(%arg0: i32) -> (i32, i32) {
    %c0_i32 = arith.constant 0 : i32
    %c0_i32_0 = arith.constant 0 : i32
    return %c0_i32, %arg0 : i32, i32
  }
  func.func @transform_1(%arg0: i32) -> (i32, i32) {
    %c0_i32 = arith.constant 0 : i32
    %c0_i32_0 = arith.constant 0 : i32
    return %arg0, %c0_i32 : i32, i32
  }
  func.func @transform_2(%arg0: i32) -> (i32, i32) {
    %c0_i32 = arith.constant 0 : i32
    %c0_i32_0 = arith.constant 0 : i32
    %c0_i32_1 = arith.constant 0 : i32
    return %c0_i32, %c0_i32_0 : i32, i32
  }
  func.func @transform_3(%arg0: i32) -> (i32, i32) {
    %c0_i32 = arith.constant 0 : i32
    %c0_i32_0 = arith.constant 0 : i32
    %c0_i32_1 = arith.constant 0 : i32
    return %c0_i32, %c0_i32_0 : i32, i32
  }
  func.func @transform_4(%arg0: i32) -> (i32, i32) {
    %c0_i32 = arith.constant 0 : i32
    %c0_i32_0 = arith.constant 0 : i32
    %c0_i32_1 = arith.constant 0 : i32
    return %c0_i32, %c0_i32_0 : i32, i32
  }
  func.func @transform_5(%arg0: i32) -> (i32, i32) {
    %c0_i32 = arith.constant 0 : i32
    %c0_i32_0 = arith.constant 0 : i32
    %c0_i32_1 = arith.constant 0 : i32
    return %c0_i32, %c0_i32_0 : i32, i32
  }
  func.func @transform_6(%arg0: i32) -> (i32, i32) {
    %c0_i32 = arith.constant 0 : i32
    %c0_i32_0 = arith.constant 0 : i32
    %c0_i32_1 = arith.constant 0 : i32
    return %c0_i32, %c0_i32_0 : i32, i32
  }
  func.func @transform_7(%arg0: i32) -> (i32, i32) {
    %c0_i32 = arith.constant 0 : i32
    %c0_i32_0 = arith.constant 0 : i32
    %c0_i32_1 = arith.constant 0 : i32
    return %c0_i32, %c0_i32_0 : i32, i32
  }
  func.func @transform_8(%arg0: i32) -> (i32, i32) {
    %c0_i32 = arith.constant 0 : i32
    %c0_i32_0 = arith.constant 0 : i32
    %c0_i32_1 = arith.constant 0 : i32
    return %c0_i32, %c0_i32_0 : i32, i32
  }
  func.func @transform_9(%arg0: i32) -> (i32, i32) {
    %c0_i32 = arith.constant 0 : i32
    %c0_i32_0 = arith.constant 0 : i32
    %c0_i32_1 = arith.constant 0 : i32
    return %c0_i32, %c0_i32_0 : i32, i32
  }
}

</mosaic_0001>

<llo_original>
// kernel: tpu_custom_call.1
$region0: #{tpu_custom_call.1}
  #allocation0 [shape = 'u32[]', space=smem, size = 0x4, offset = 0x4, fixed_abs, tag = 'smem constant byte address 0x4 - core index']
  #allocation1 [shape = 'u32[144,128]{1,0:T(1,128)}', space=vmem, size = 0x12000, scoped, tag = 'internal scratch']
  #allocation2 [shape = 'f32[8,1024]{1,0:T(8,128)}', space=vmem, size = 0x8000, scoped, tag = 'scratch operand']
  %s0 = inlined_call_operand.hbm [shape: bf16[8,3072], index: 0, kind: input, shape index: {}]
  %s1 = inlined_call_operand.hbm [shape: bf16[3072,1024], index: 1, kind: input, shape index: {}]
  %s2 = inlined_call_operand.hbm [shape: f32[2,1024], index: 2, kind: input, shape index: {}]
  %s3 = inlined_call_operand.hbm [shape: bf16[1024,512], index: 3, kind: input, shape index: {}]
  %s4 = inlined_call_operand.hbm [shape: f32[2,512], index: 4, kind: input, shape index: {}]
  %s5 = inlined_call_operand.hbm [shape: bf16[512,256], index: 5, kind: input, shape index: {}]
  %s6 = inlined_call_operand.hbm [shape: f32[2,256], index: 6, kind: input, shape index: {}]
  %s7 = inlined_call_operand.hbm [shape: bf16[256,128], index: 7, kind: input, shape index: {}]
  %s8 = inlined_call_operand.hbm [shape: f32[1,128], index: 8, kind: input, shape index: {}]
  %s9 = inlined_call_operand.hbm [shape: f32[8,128], index: 9, kind: output, shape index: {}]
  %s10 = sld [smem:[#allocation0]]
  $region113: #{tpu_custom_call.1} parent=0
    _
  %s12 = ssub.s32 1, %s10
  %s13 = scalar_select 0, %s12, %s10
  $region1: #{tpu_custom_call.1} parent=0
    #allocation3 [shape = 'u8[32768]{0}', space=vmem, size = 0x8000, scoped, tag = 'input window, operand 0']
    #allocation4 [shape = 's32[2]{0}', space=sflag, size = 0x8, scoped, tag = 'scoped memory for tpu_custom_call.1']
    #allocation5 [shape = 's32[2]{0}', space=sflag, size = 0x8, scoped, tag = 'scoped memory for tpu_custom_call.1']
    #allocation6 [shape = 'u8[4194304]{0}', space=vmem, size = 0x400000, scoped, tag = 'input window, operand 1']
    #allocation7 [shape = 's32[2]{0}', space=sflag, size = 0x8, scoped, tag = 'scoped memory for tpu_custom_call.1']
    #allocation8 [shape = 'u8[8192]{0}', space=vmem, size = 0x2000, scoped, tag = 'input window, operand 2, single buffered']
    #allocation9 [shape = 'u8[1048576]{0}', space=vmem, size = 0x100000, scoped, tag = 'input window, operand 3, single buffered']
    #allocation10 [shape = 's32[1]{0}', space=sflag, size = 0x4, scoped, tag = 'scoped memory for tpu_custom_call.1']
    #allocation11 [shape = 'u8[4096]{0}', space=vmem, size = 0x1000, scoped, tag = 'input window, operand 4, single buffered']
    #allocation12 [shape = 'u8[262144]{0}', space=vmem, size = 0x40000, scoped, tag = 'input window, operand 5, single buffered']
    #allocation13 [shape = 's32[1]{0}', space=sflag, size = 0x4, scoped, tag = 'scoped memory for tpu_custom_call.1']
    #allocation14 [shape = 'u8[2048]{0}', space=vmem, size = 0x800, scoped, tag = 'input window, operand 6, single buffered']
    #allocation15 [shape = 'u8[65536]{0}', space=vmem, size = 0x10000, scoped, tag = 'input window, operand 7, single buffered']
    #allocation16 [shape = 's32[1]{0}', space=sflag, size = 0x4, scoped, tag = 'scoped memory for tpu_custom_call.1']
    #allocation17 [shape = 'u8[512]{0}', space=vmem, size = 0x400, scoped, tag = 'input window, operand 8, single buffered']
    #allocation18 [shape = 'u8[4096]{0}', space=vmem, size = 0x1000, scoped, tag = 'output window, operand 0, single buffered']
    %14 = vsyncpa [#allocation4], 0
    %s15 = scalar_lea.sflag [#allocation4], 1
    %16 = vsyncpa %s15, 0
    %17 = vsyncpa [#allocation7], 0
    %s18 = scalar_lea.sflag [#allocation7], 1
    %19 = vsyncpa %s18, 0
    %20 = vsyncpa [#allocation10], 0
    %21 = vsyncpa [#allocation13], 0
    %22 = vsyncpa [#allocation16], 0
    %23 = vsyncpa [#allocation5], 0
    loop: start=0, step=1, limit=5
    $region2: #{tpu_custom_call.1} parent=1 // loop_pre_header
      _
    $region3: #{tpu_custom_call.1} parent=1 // loop_header
      %s25 = sphi 0, %s29
      %p26 = scmp.ge.s32.totalorder %s25, 5
      %s35 = sphi 0, %s37
      %s38 = sphi 0, %s35
      %s39 = sphi 0, %s38
      %s55 = sphi 0, %s39
      %s61 = sphi 0, %s63
      %s64 = sphi 0, %s61
      %s65 = sphi 0, %s64
      %s81 = sphi 0, %s65
      %s85 = sphi 0, %s85
      %s87 = sphi 0, %s85
      %s88 = sphi 0, %s87
      %s102 = sphi 0, %s88
      %s106 = sphi 0, %s106
      %s108 = sphi 0, %s106
      %s109 = sphi 0, %s108
      %s123 = sphi 0, %s109
      %s127 = sphi 0, %s127
      %s129 = sphi 0, %s127
      %s130 = sphi 0, %s129
      %s144 = sphi 0, %s130
      %s148 = sphi 0, %s148
      %s150 = sphi 0, %s148
      %s151 = sphi 0, %s150
      %s165 = sphi 0, %s151
      %s169 = sphi 0, %s169
      %s171 = sphi 0, %s169
      %s172 = sphi 0, %s171
      %s186 = sphi 0, %s172
      %s190 = sphi 0, %s190
      %s192 = sphi 0, %s190
      %s193 = sphi 0, %s192
      %s207 = sphi 0, %s193
      %s211 = sphi 0, %s211
      %s213 = sphi 0, %s211
      %s214 = sphi 0, %s213
      %s228 = sphi 0, %s214
      %s232 = sphi 0, %s232
      %s234 = sphi 0, %s232
      %s235 = sphi 0, %s234
      %s249 = sphi 0, %s235
    $region4: #{tpu_custom_call.1} parent=1 // loop_header_branch
      %28 = sbr.rel (%p26) target = $region8
    $region5: #{tpu_custom_call.1} parent=1 // loop_body
      %s30 = ssub.s32 %s25, 1
      %s31 = ssub.s32 %s25, 2
      %s32 = sadd.s32 %s25, 1
      %s33 = ssub.s32 %s25, %s32
      %p34 = scmp.eq.s32.totalorder %s33, 0
      %s36 = sadd.s32 %s35, 1
      %s37 = scalar_select %p34, %s35, %s36
      %p40 = pneg %p34
      %p41 = scmp.eq.s32.totalorder %s25, 2
      %p42 = por %p40, %p41
      %p43 = scmp.ne.s32.totalorder %s35, %s38
      %p44 = scmp.eq.s32.totalorder %s25, 0
      %p45 = por %p43, %p44
      %p46 = scmp.ne.s32.totalorder %s35, %s38
      %p47 = scmp.eq.s32.totalorder %s30, 2
      %p48 = por %p46, %p47
      %p49 = scmp.ne.s32.totalorder %s38, %s39
      %p50 = scmp.eq.s32.totalorder %s30, 0
      %p51 = por %p49, %p50
      %p52 = scmp.ne.s32.totalorder %s38, %s39
      %p53 = scmp.eq.s32.totalorder %s31, 2
      %p54 = por %p52, %p53
      %p56 = scmp.ne.s32.totalorder %s39, %s55
      %p57 = scmp.eq.s32.totalorder %s31, 0
      %p58 = por %p56, %p57
      %s59 = ssub.s32 %s25, %s32
      %p60 = scmp.eq.s32.totalorder %s59, 0
      %s62 = sadd.s32 %s61, 1
      %s63 = scalar_select %p60, %s61, %s62
      %p66 = pneg %p60
      %p67 = scmp.eq.s32.totalorder %s25, 2
      %p68 = por %p66, %p67
      %p69 = scmp.ne.s32.totalorder %s61, %s64
      %p70 = scmp.eq.s32.totalorder %s25, 0
      %p71 = por %p69, %p70
      %p72 = scmp.ne.s32.totalorder %s61, %s64
      %p73 = scmp.eq.s32.totalorder %s30, 2
      %p74 = por %p72, %p73
      %p75 = scmp.ne.s32.totalorder %s64, %s65
      %p76 = scmp.eq.s32.totalorder %s30, 0
      %p77 = por %p75, %p76
      %p78 = scmp.ne.s32.totalorder %s64, %s65
      %p79 = scmp.eq.s32.totalorder %s31, 2
      %p80 = por %p78, %p79
      %p82 = scmp.ne.s32.totalorder %s65, %s81
      %p83 = scmp.eq.s32.totalorder %s31, 0
      %p84 = por %p82, %p83
      %s86 = sadd.s32 %s85, 1
      %p89 = scmp.eq.s32.totalorder %s25, 2
      %p90 = scmp.ne.s32.totalorder %s85, %s87
      %p91 = scmp.eq.s32.totalorder %s25, 0
      %p92 = por %p90, %p91
      %p93 = scmp.ne.s32.totalorder %s85, %s87
      %p94 = scmp.eq.s32.totalorder %s30, 2
      %p95 = por %p93, %p94
      %p96 = scmp.ne.s32.totalorder %s87, %s88
      %p97 = scmp.eq.s32.totalorder %s30, 0
      %p98 = por %p96, %p97
      %p99 = scmp.ne.s32.totalorder %s87, %s88
      %p100 = scmp.eq.s32.totalorder %s31, 2
      %p101 = por %p99, %p100
      %p103 = scmp.ne.s32.totalorder %s88, %s102
      %p104 = scmp.eq.s32.totalorder %s31, 0
      %p105 = por %p103, %p104
      %s107 = sadd.s32 %s106, 1
      %p110 = scmp.eq.s32.totalorder %s25, 2
      %p111 = scmp.ne.s32.totalorder %s106, %s108
      %p112 = scmp.eq.s32.totalorder %s25, 0
      %p113 = por %p111, %p112
      %p114 = scmp.ne.s32.totalorder %s106, %s108
      %p115 = scmp.eq.s32.totalorder %s30, 2
      %p116 = por %p114, %p115
      %p117 = scmp.ne.s32.totalorder %s108, %s109
      %p118 = scmp.eq.s32.totalorder %s30, 0
      %p119 = por %p117, %p118
      %p120 = scmp.ne.s32.totalorder %s108, %s109
      %p121 = scmp.eq.s32.totalorder %s31, 2
      %p122 = por %p120, %p121
      %p124 = scmp.ne.s32.totalorder %s109, %s123
      %p125 = scmp.eq.s32.totalorder %s31, 0
      %p126 = por %p124, %p125
      %s128 = sadd.s32 %s127, 1
      %p131 = scmp.eq.s32.totalorder %s25, 2
      %p132 = scmp.ne.s32.totalorder %s127, %s129
      %p133 = scmp.eq.s32.totalorder %s25, 0
      %p134 = por %p132, %p133
      %p135 = scmp.ne.s32.totalorder %s127, %s129
      %p136 = scmp.eq.s32.totalorder %s30, 2
      %p137 = por %p135, %p136
      %p138 = scmp.ne.s32.totalorder %s129, %s130
      %p139 = scmp.eq.s32.totalorder %s30, 0
      %p140 = por %p138, %p139
      %p141 = scmp.ne.s32.totalorder %s129, %s130
      %p142 = scmp.eq.s32.totalorder %s31, 2
      %p143 = por %p141, %p142
      %p145 = scmp.ne.s32.totalorder %s130, %s144
      %p146 = scmp.eq.s32.totalorder %s31, 0
      %p147 = por %p145, %p146
      %s149 = sadd.s32 %s148, 1
      %p152 = scmp.eq.s32.totalorder %s25, 2
      %p153 = scmp.ne.s32.totalorder %s148, %s150
      %p154 = scmp.eq.s32.totalorder %s25, 0
      %p155 = por %p153, %p154
      %p156 = scmp.ne.s32.totalorder %s148, %s150
      %p157 = scmp.eq.s32.totalorder %s30, 2
      %p158 = por %p156, %p157
      %p159 = scmp.ne.s32.totalorder %s150, %s151
      %p160 = scmp.eq.s32.totalorder %s30, 0
      %p161 = por %p159, %p160
      %p162 = scmp.ne.s32.totalorder %s150, %s151
      %p163 = scmp.eq.s32.totalorder %s31, 2
      %p164 = por %p162, %p163
      %p166 = scmp.ne.s32.totalorder %s151, %s165
      %p167 = scmp.eq.s32.totalorder %s31, 0
      %p168 = por %p166, %p167
      %s170 = sadd.s32 %s169, 1
      %p173 = scmp.eq.s32.totalorder %s25, 2
      %p174 = scmp.ne.s32.totalorder %s169, %s171
      %p175 = scmp.eq.s32.totalorder %s25, 0
      %p176 = por %p174, %p175
      %p177 = scmp.ne.s32.totalorder %s169, %s171
      %p178 = scmp.eq.s32.totalorder %s30, 2
      %p179 = por %p177, %p178
      %p180 = scmp.ne.s32.totalorder %s171, %s172
      %p181 = scmp.eq.s32.totalorder %s30, 0
      %p182 = por %p180, %p181
      %p183 = scmp.ne.s32.totalorder %s171, %s172
      %p184 = scmp.eq.s32.totalorder %s31, 2
      %p185 = por %p183, %p184
      %p187 = scmp.ne.s32.totalorder %s172, %s186
      %p188 = scmp.eq.s32.totalorder %s31, 0
      %p189 = por %p187, %p188
      %s191 = sadd.s32 %s190, 1
      %p194 = scmp.eq.s32.totalorder %s25, 2
      %p195 = scmp.ne.s32.totalorder %s190, %s192
      %p196 = scmp.eq.s32.totalorder %s25, 0
      %p197 = por %p195, %p196
      %p198 = scmp.ne.s32.totalorder %s190, %s192
      %p199 = scmp.eq.s32.totalorder %s30, 2
      %p200 = por %p198, %p199
      %p201 = scmp.ne.s32.totalorder %s192, %s193
      %p202 = scmp.eq.s32.totalorder %s30, 0
      %p203 = por %p201, %p202
      %p204 = scmp.ne.s32.totalorder %s192, %s193
      %p205 = scmp.eq.s32.totalorder %s31, 2
      %p206 = por %p204, %p205
      %p208 = scmp.ne.s32.totalorder %s193, %s207
      %p209 = scmp.eq.s32.totalorder %s31, 0
      %p210 = por %p208, %p209
      %s212 = sadd.s32 %s211, 1
      %p215 = scmp.eq.s32.totalorder %s25, 2
      %p216 = scmp.ne.s32.totalorder %s211, %s213
      %p217 = scmp.eq.s32.totalorder %s25, 0
      %p218 = por %p216, %p217
      %p219 = scmp.ne.s32.totalorder %s211, %s213
      %p220 = scmp.eq.s32.totalorder %s30, 2
      %p221 = por %p219, %p220
      %p222 = scmp.ne.s32.totalorder %s213, %s214
      %p223 = scmp.eq.s32.totalorder %s30, 0
      %p224 = por %p222, %p223
      %p225 = scmp.ne.s32.totalorder %s213, %s214
      %p226 = scmp.eq.s32.totalorder %s31, 2
      %p227 = por %p225, %p226
      %p229 = scmp.ne.s32.totalorder %s214, %s228
      %p230 = scmp.eq.s32.totalorder %s31, 0
      %p231 = por %p229, %p230
      %s233 = sadd.s32 %s232, 1
      %p236 = scmp.eq.s32.totalorder %s25, 2
      %p237 = scmp.ne.s32.totalorder %s232, %s234
      %p238 = scmp.eq.s32.totalorder %s25, 0
      %p239 = por %p237, %p238
      %p240 = scmp.ne.s32.totalorder %s232, %s234
      %p241 = scmp.eq.s32.totalorder %s30, 2
      %p242 = por %p240, %p241
      %p243 = scmp.ne.s32.totalorder %s234, %s235
      %p244 = scmp.eq.s32.totalorder %s30, 0
      %p245 = por %p243, %p244
      %p246 = scmp.ne.s32.totalorder %s234, %s235
      %p247 = scmp.eq.s32.totalorder %s31, 2
      %p248 = por %p246, %p247
      %p250 = scmp.ne.s32.totalorder %s235, %s249
      %p251 = scmp.eq.s32.totalorder %s31, 0
      %p252 = por %p250, %p251
      %p253 = scmp.le.s32.totalorder 1, %s25
      %p254 = scmp.lt.s32.totalorder %s25, 4
      %p255 = pnand %p253, %p254
      %p256 = pneg %p255
      // Predicated region
      $region9: #{tpu_custom_call.1} parent=5 // pred_check
        _
      $region10: #{tpu_custom_call.1} parent=5 // pred_check_branch
        %258 = sbr.rel (%p255) target = $region12
      $region11: #{tpu_custom_call.1} parent=5 // pred_region
        %s259 = ssub.s32 %s25, 1
        // Predicated region
        $region13: #{tpu_custom_call.1} parent=11 // pred_check
          %p260 = pneg %p98
        $region14: #{tpu_custom_call.1} parent=11 // pred_check_branch
          %262 = sbr.rel (%p260) target = $region16
        $region15: #{tpu_custom_call.1} parent=11 // pred_region
          %s264 = ssub.s32 256, 256
          %265 = vsyncadd [#allocation7], %s264
          %s267 = sshll.u32 [#allocation8], 4
          %s268 = int_to_ptr.vmem [resolvable:$true] %s267
          %270 = dma.hbm_to_vmem [thread:$0]  %s2, 256, %s268, [#allocation7]
        $region16: #{tpu_custom_call.1} parent=11 // pred_fallthru
          _
        // Predicated region
        $region17: #{tpu_custom_call.1} parent=11 // pred_check
          %p271 = pneg %p119
        $region18: #{tpu_custom_call.1} parent=11 // pred_check_branch
          %273 = sbr.rel (%p271) target = $region20
        $region19: #{tpu_custom_call.1} parent=11 // pred_region
          %s275 = ssub.s32 32768, 32768
          %276 = vsyncadd [#allocation10], %s275
          %s277 = sshll.u32 [#allocation9], 4
          %s278 = int_to_ptr.vmem [resolvable:$true] %s277
          %283 = dma.hbm_to_vmem [thread:$0]  %s3, 32768, %s278, [#allocation10], 256, 256, 16
        $region20: #{tpu_custom_call.1} parent=11 // pred_fallthru
          _
        // Predicated region
        $region21: #{tpu_custom_call.1} parent=11 // pred_check
          %p284 = pneg %p140
        $region22: #{tpu_custom_call.1} parent=11 // pred_check_branch
          %286 = sbr.rel (%p284) target = $region24
        $region23: #{tpu_custom_call.1} parent=11 // pred_region
          %s288 = ssub.s32 128, 128
          %289 = vsyncadd [#allocation10], %s288
          %s291 = sshll.u32 [#allocation11], 4
          %s292 = int_to_ptr.vmem [resolvable:$true] %s291
          %294 = dma.hbm_to_vmem [thread:$0]  %s4, 128, %s292, [#allocation10]
        $region24: #{tpu_custom_call.1} parent=11 // pred_fallthru
          _
        // Predicated region
        $region25: #{tpu_custom_call.1} parent=11 // pred_check
          %p295 = pneg %p161
        $region26: #{tpu_custom_call.1} parent=11 // pred_check_branch
          %297 = sbr.rel (%p295) target = $region28
        $region27: #{tpu_custom_call.1} parent=11 // pred_region
          %s299 = ssub.s32 8192, 8192
          %300 = vsyncadd [#allocation13], %s299
          %s301 = sshll.u32 [#allocation12], 4
          %s302 = int_to_ptr.vmem [resolvable:$true] %s301
          %307 = dma.hbm_to_vmem [thread:$0]  %s5, 8192, %s302, [#allocation13], 128, 128, 8
        $region28: #{tpu_custom_call.1} parent=11 // pred_fallthru
          _
        // Predicated region
        $region29: #{tpu_custom_call.1} parent=11 // pred_check
          %p308 = pneg %p182
        $region30: #{tpu_custom_call.1} parent=11 // pred_check_branch
          %310 = sbr.rel (%p308) target = $region32
        $region31: #{tpu_custom_call.1} parent=11 // pred_region
          %s312 = ssub.s32 64, 64
          %313 = vsyncadd [#allocation13], %s312
          %s315 = sshll.u32 [#allocation14], 4
          %s316 = int_to_ptr.vmem [resolvable:$true] %s315
          %318 = dma.hbm_to_vmem [thread:$0]  %s6, 64, %s316, [#allocation13]
        $region32: #{tpu_custom_call.1} parent=11 // pred_fallthru
          _
        // Predicated region
        $region33: #{tpu_custom_call.1} parent=11 // pred_check
          %p319 = pneg %p203
        $region34: #{tpu_custom_call.1} parent=11 // pred_check_branch
          %321 = sbr.rel (%p319) target = $region36
        $region35: #{tpu_custom_call.1} parent=11 // pred_region
          %s323 = ssub.s32 2048, 2048
          %324 = vsyncadd [#allocation16], %s323
          %s325 = sshll.u32 [#allocation15], 4
          %s326 = int_to_ptr.vmem [resolvable:$true] %s325
          %331 = dma.hbm_to_vmem [thread:$0]  %s7, 2048, %s326, [#allocation16], 64, 64, 4
        $region36: #{tpu_custom_call.1} parent=11 // pred_fallthru
          _
        // Predicated region
        $region37: #{tpu_custom_call.1} parent=11 // pred_check
          %p332 = pneg %p224
        $region38: #{tpu_custom_call.1} parent=11 // pred_check_branch
          %334 = sbr.rel (%p332) target = $region40
        $region39: #{tpu_custom_call.1} parent=11 // pred_region
          %s336 = ssub.s32 16, 16
          %337 = vsyncadd [#allocation16], %s336
          %s339 = sshll.u32 [#allocation17], 4
          %s340 = int_to_ptr.vmem [resolvable:$true] %s339
          %342 = dma.hbm_to_vmem [thread:$0]  %s8, 16, %s340, [#allocation16]
        $region40: #{tpu_custom_call.1} parent=11 // pred_fallthru
          _
      $region12: #{tpu_custom_call.1} parent=5 // pred_fallthru
        _
      %p343 = scmp.lt.s32.totalorder %s25, 3
      // Predicated region
      $region41: #{tpu_custom_call.1} parent=5 // pred_check
        %p344 = pneg %p343
      $region42: #{tpu_custom_call.1} parent=5 // pred_check_branch
        %346 = sbr.rel (%p344) target = $region44
      $region43: #{tpu_custom_call.1} parent=5 // pred_region
        // Predicated region
        $region45: #{tpu_custom_call.1} parent=43 // pred_check
          %p347 = pneg %p45
        $region46: #{tpu_custom_call.1} parent=43 // pred_check_branch
          %349 = sbr.rel (%p347) target = $region48
        $region47: #{tpu_custom_call.1} parent=43 // pred_region
          %s350 = sand.u32 %s35, 1
          %s351 = scalar_lea.sflag [#allocation4], %s350
          %s352 = sand.u32 %s35, 1
          %s353 = smul.addr %s352, 32
          %s354 = scalar_lea.vmem [#allocation3], %s353
          %s355 = smul.u32 8, %s25
          %s357 = ssub.s32 512, 512
          %358 = vsyncadd %s351, %s357
          %s359 = smul.addr %s355, 64
          %s360 = scalar_lea.hbm %s0, %s359
          %s362 = sshll.u32 %s354, 4
          %s363 = int_to_ptr.vmem [resolvable:$true] %s362
          %365 = dma.hbm_to_vmem [thread:$0]  %s360, 512, %s363, %s351
        $region48: #{tpu_custom_call.1} parent=43 // pred_fallthru
          _
        // Predicated region
        $region49: #{tpu_custom_call.1} parent=43 // pred_check
          %p366 = pneg %p71
        $region50: #{tpu_custom_call.1} parent=43 // pred_check_branch
          %368 = sbr.rel (%p366) target = $region52
        $region51: #{tpu_custom_call.1} parent=43 // pred_region
          %s369 = sand.u32 %s25, 1
          %s370 = scalar_lea.sflag [#allocation7], %s369
          %s371 = sand.u32 %s61, 1
          %s372 = smul.addr %s371, 4096
          %s373 = scalar_lea.vmem [#allocation6], %s372
          %s374 = smul.u32 128, %s25
          %s376 = ssub.s32 65536, 65536
          %377 = vsyncadd %s370, %s376
          %s378 = smul.addr %s374, 8
          %s379 = smul.addr %s378, 64
          %s380 = scalar_lea.hbm %s1, %s379
          %s381 = sshll.u32 %s373, 4
          %s382 = int_to_ptr.vmem [resolvable:$true] %s381
          %387 = dma.hbm_to_vmem [thread:$0]  %s380, 65536, %s382, %s370, 512, 512, 32
        $region52: #{tpu_custom_call.1} parent=43 // pred_fallthru
          _
      $region44: #{tpu_custom_call.1} parent=5 // pred_fallthru
        _
      %p388 = scmp.le.s32.totalorder 1, %s25
      %p389 = scmp.lt.s32.totalorder %s25, 4
      %p390 = pnand %p388, %p389
      %p391 = pneg %p390
      // Predicated region
      $region53: #{tpu_custom_call.1} parent=5 // pred_check
        _
      $region54: #{tpu_custom_call.1} parent=5 // pred_check_branch
        %393 = sbr.rel (%p390) target = $region56
      $region55: #{tpu_custom_call.1} parent=5 // pred_region
        %s394 = ssub.s32 %s25, 1
        %s395 = sand.u32 %s38, 1
        %s396 = scalar_lea.sflag [#allocation4], %s395
        %s397 = sand.u32 %s38, 1
        %s398 = smul.addr %s397, 32
        %s399 = scalar_lea.vmem [#allocation3], %s398
        // Predicated region
        $region57: #{tpu_custom_call.1} parent=55 // pred_check
          %p400 = pneg %p51
        $region58: #{tpu_custom_call.1} parent=55 // pred_check_branch
          %402 = sbr.rel (%p400) target = $region60
        $region59: #{tpu_custom_call.1} parent=55 // pred_region
          %403 = dma.done %s396, 512
        $region60: #{tpu_custom_call.1} parent=55 // pred_fallthru
          _
        %s404 = sand.u32 %s30, 1
        %s405 = scalar_lea.sflag [#allocation7], %s404
        %s406 = sand.u32 %s64, 1
        %s407 = smul.addr %s406, 4096
        %s408 = scalar_lea.vmem [#allocation6], %s407
        // Predicated region
        $region61: #{tpu_custom_call.1} parent=55 // pred_check
          %p409 = pneg %p77
        $region62: #{tpu_custom_call.1} parent=55 // pred_check_branch
          %411 = sbr.rel (%p409) target = $region64
        $region63: #{tpu_custom_call.1} parent=55 // pred_region
          %412 = dma.done %s405, 65536
        $region64: #{tpu_custom_call.1} parent=55 // pred_fallthru
          _
        // Predicated region
        $region65: #{tpu_custom_call.1} parent=55 // pred_check
          %p413 = pneg %p98
        $region66: #{tpu_custom_call.1} parent=55 // pred_check_branch
          %415 = sbr.rel (%p413) target = $region68
        $region67: #{tpu_custom_call.1} parent=55 // pred_region
          %416 = dma.done [#allocation7], 256
        $region68: #{tpu_custom_call.1} parent=55 // pred_fallthru
          _
        // Predicated region
        $region69: #{tpu_custom_call.1} parent=55 // pred_check
          %p417 = pneg %p119
        $region70: #{tpu_custom_call.1} parent=55 // pred_check_branch
          %419 = sbr.rel (%p417) target = $region72
        $region71: #{tpu_custom_call.1} parent=55 // pred_region
          %420 = dma.done [#allocation10], 32768
        $region72: #{tpu_custom_call.1} parent=55 // pred_fallthru
          _
        // Predicated region
        $region73: #{tpu_custom_call.1} parent=55 // pred_check
          %p421 = pneg %p140
        $region74: #{tpu_custom_call.1} parent=55 // pred_check_branch
          %423 = sbr.rel (%p421) target = $region76
        $region75: #{tpu_custom_call.1} parent=55 // pred_region
          %424 = dma.done [#allocation10], 128
        $region76: #{tpu_custom_call.1} parent=55 // pred_fallthru
          _
        // Predicated region
        $region77: #{tpu_custom_call.1} parent=55 // pred_check
          %p425 = pneg %p161
        $region78: #{tpu_custom_call.1} parent=55 // pred_check_branch
          %427 = sbr.rel (%p425) target = $region80
        $region79: #{tpu_custom_call.1} parent=55 // pred_region
          %428 = dma.done [#allocation13], 8192
        $region80: #{tpu_custom_call.1} parent=55 // pred_fallthru
          _
        // Predicated region
        $region81: #{tpu_custom_call.1} parent=55 // pred_check
          %p429 = pneg %p182
        $region82: #{tpu_custom_call.1} parent=55 // pred_check_branch
          %431 = sbr.rel (%p429) target = $region84
        $region83: #{tpu_custom_call.1} parent=55 // pred_region
          %432 = dma.done [#allocation13], 64
        $region84: #{tpu_custom_call.1} parent=55 // pred_fallthru
          _
        // Predicated region
        $region85: #{tpu_custom_call.1} parent=55 // pred_check
          %p433 = pneg %p203
        $region86: #{tpu_custom_call.1} parent=55 // pred_check_branch
          %435 = sbr.rel (%p433) target = $region88
        $region87: #{tpu_custom_call.1} parent=55 // pred_region
          %436 = dma.done [#allocation16], 2048
        $region88: #{tpu_custom_call.1} parent=55 // pred_fallthru
          _
        // Predicated region
        $region89: #{tpu_custom_call.1} parent=55 // pred_check
          %p437 = pneg %p224
        $region90: #{tpu_custom_call.1} parent=55 // pred_check_branch
          %439 = sbr.rel (%p437) target = $region92
        $region91: #{tpu_custom_call.1} parent=55 // pred_region
          %440 = dma.done [#allocation16], 16
        $region92: #{tpu_custom_call.1} parent=55 // pred_fallthru
          _
        %s441 = sand.u32 %s38, 1
        %s442 = scalar_lea.sflag [#allocation4], %s441
        %s443 = sand.u32 %s38, 1
        %s444 = smul.addr %s443, 32
        %s445 = scalar_lea.vmem [#allocation3], %s444
        %p446 = pneg %p51
        %p447 = pneg %p48
        %s448 = sand.u32 %s30, 1
        %s449 = scalar_lea.sflag [#allocation7], %s448
        %s450 = sand.u32 %s64, 1
        %s451 = smul.addr %s450, 4096
        %s452 = scalar_lea.vmem [#allocation6], %s451
        %p453 = pneg %p77
        %p454 = pneg %p74
        %p455 = pneg %p98
        %p456 = pneg %p95
        %p457 = pneg %p119
        %p458 = pneg %p116
        %p459 = pneg %p140
        %p460 = pneg %p137
        %p461 = pneg %p161
        %p462 = pneg %p158
        %p463 = pneg %p182
        %p464 = pneg %p179
        %p465 = pneg %p203
        %p466 = pneg %p200
        %p467 = pneg %p224
        %p468 = pneg %p221
        %p469 = pneg %p245
        %p470 = pneg %p242
        %s471 = smul.u32 8, %s30
        %s472 = smul.u32 128, %s30
        %p474 = scmp.eq.s32.totalorder %s30, 0
        // Predicated region
        $region93: #{tpu_custom_call.1} parent=55 // pred_check
          %p475 = pneg %p474
        $region94: #{tpu_custom_call.1} parent=55 // pred_check_branch
          %477 = sbr.rel (%p475) target = $region96
        $region95: #{tpu_custom_call.1} parent=55 // pred_region
          %478 = vst [vmem:[#allocation2] sm:$0xff] 0.0
          %479 = vst [vmem:[#allocation2 + $0x8] sm:$0xff] 0.0
          %480 = vst [vmem:[#allocation2 + $0x10] sm:$0xff] 0.0
          %481 = vst [vmem:[#allocation2 + $0x18] sm:$0xff] 0.0
          %482 = vst [vmem:[#allocation2 + $0x20] sm:$0xff] 0.0
          %483 = vst [vmem:[#allocation2 + $0x28] sm:$0xff] 0.0
          %484 = vst [vmem:[#allocation2 + $0x30] sm:$0xff] 0.0
          %485 = vst [vmem:[#allocation2 + $0x38] sm:$0xff] 0.0
        $region96: #{tpu_custom_call.1} parent=55 // pred_fallthru
          _
        %v486 = vld [vmem:[#allocation2] sm:$0xff]
        %v487 = vld [vmem:[#allocation2 + $0x8] sm:$0xff]
        %v488 = vld [vmem:[#allocation2 + $0x10] sm:$0xff]
        %v489 = vld [vmem:[#allocation2 + $0x18] sm:$0xff]
        %v490 = vld [vmem:[#allocation2 + $0x20] sm:$0xff]
        %v491 = vld [vmem:[#allocation2 + $0x28] sm:$0xff]
        %v492 = vld [vmem:[#allocation2 + $0x30] sm:$0xff]
        %v493 = vld [vmem:[#allocation2 + $0x38] sm:$0xff]
        %v494 = vld [vmem:[%s399] sm:$0xff]
        %v495 = vld [vmem:[%s399 + $0x8] sm:$0xff]
        %v496 = vld [vmem:[%s399 + $0x10] sm:$0xff]
        %v497 = vld [vmem:[%s399 + $0x18] sm:$0xff]
        %v498 = vld [vmem:[%s408] sm:$0xff]
        %v499 = vld [vmem:[%s408 + $0x8] sm:$0xff]
        %v500 = vld [vmem:[%s408 + $0x10] sm:$0xff]
        %v501 = vld [vmem:[%s408 + $0x18] sm:$0xff]
        %v502 = vld [vmem:[%s408 + $0x20] sm:$0xff]
        %v503 = vld [vmem:[%s408 + $0x28] sm:$0xff]
        %v504 = vld [vmem:[%s408 + $0x30] sm:$0xff]
        %v505 = vld [vmem:[%s408 + $0x38] sm:$0xff]
        %v506 = vld [vmem:[%s408 + $0x40] sm:$0xff]
        %v507 = vld [vmem:[%s408 + $0x48] sm:$0xff]
        %v508 = vld [vmem:[%s408 + $0x50] sm:$0xff]
        %v509 = vld [vmem:[%s408 + $0x58] sm:$0xff]
        %v510 = vld [vmem:[%s408 + $0x60] sm:$0xff]
        %v511 = vld [vmem:[%s408 + $0x68] sm:$0xff]
        %v512 = vld [vmem:[%s408 + $0x70] sm:$0xff]
        %v513 = vld [vmem:[%s408 + $0x78] sm:$0xff]
        %v514 = vld [vmem:[%s408 + $0x80] sm:$0xff]
        %v515 = vld [vmem:[%s408 + $0x88] sm:$0xff]
        %v516 = vld [vmem:[%s408 + $0x90] sm:$0xff]
        %v517 = vld [vmem:[%s408 + $0x98] sm:$0xff]
        %v518 = vld [vmem:[%s408 + $0xa0] sm:$0xff]
        %v519 = vld [vmem:[%s408 + $0xa8] sm:$0xff]
        %v520 = vld [vmem:[%s408 + $0xb0] sm:$0xff]
        %v521 = vld [vmem:[%s408 + $0xb8] sm:$0xff]
        %v522 = vld [vmem:[%s408 + $0xc0] sm:$0xff]
        %v523 = vld [vmem:[%s408 + $0xc8] sm:$0xff]
        %v524 = vld [vmem:[%s408 + $0xd0] sm:$0xff]
        %v525 = vld [vmem:[%s408 + $0xd8] sm:$0xff]
        %v526 = vld [vmem:[%s408 + $0xe0] sm:$0xff]
        %v527 = vld [vmem:[%s408 + $0xe8] sm:$0xff]
        %v528 = vld [vmem:[%s408 + $0xf0] sm:$0xff]
        %v529 = vld [vmem:[%s408 + $0xf8] sm:$0xff]
        %v530 = vld [vmem:[%s408 + $0x100] sm:$0xff]
        %v531 = vld [vmem:[%s408 + $0x108] sm:$0xff]
        %v532 = vld [vmem:[%s408 + $0x110] sm:$0xff]
        %v533 = vld [vmem:[%s408 + $0x118] sm:$0xff]
        %v534 = vld [vmem:[%s408 + $0x120] sm:$0xff]
        %v535 = vld [vmem:[%s408 + $0x128] sm:$0xff]
        %v536 = vld [vmem:[%s408 + $0x130] sm:$0xff]
        %v537 = vld [vmem:[%s408 + $0x138] sm:$0xff]
        %v538 = vld [vmem:[%s408 + $0x140] sm:$0xff]
        %v539 = vld [vmem:[%s408 + $0x148] sm:$0xff]
        %v540 = vld [vmem:[%s408 + $0x150] sm:$0xff]
        %v541 = vld [vmem:[%s408 + $0x158] sm:$0xff]
        %v542 = vld [vmem:[%s408 + $0x160] sm:$0xff]
        %v543 = vld [vmem:[%s408 + $0x168] sm:$0xff]
        %v544 = vld [vmem:[%s408 + $0x170] sm:$0xff]
        %v545 = vld [vmem:[%s408 + $0x178] sm:$0xff]
        %v546 = vld [vmem:[%s408 + $0x180] sm:$0xff]
        %v547 = vld [vmem:[%s408 + $0x188] sm:$0xff]
        %v548 = vld [vmem:[%s408 + $0x190] sm:$0xff]
        %v549 = vld [vmem:[%s408 + $0x198] sm:$0xff]
        %v550 = vld [vmem:[%s408 + $0x1a0] sm:$0xff]
        %v551 = vld [vmem:[%s408 + $0x1a8] sm:$0xff]
        %v552 = vld [vmem:[%s408 + $0x1b0] sm:$0xff]
        %v553 = vld [vmem:[%s408 + $0x1b8] sm:$0xff]
        %v554 = vld [vmem:[%s408 + $0x1c0] sm:$0xff]
        %v555 = vld [vmem:[%s408 + $0x1c8] sm:$0xff]
        %v556 = vld [vmem:[%s408 + $0x1d0] sm:$0xff]
        %v557 = vld [vmem:[%s408 + $0x1d8] sm:$0xff]
        %v558 = vld [vmem:[%s408 + $0x1e0] sm:$0xff]
        %v559 = vld [vmem:[%s408 + $0x1e8] sm:$0xff]
        %v560 = vld [vmem:[%s408 + $0x1f0] sm:$0xff]
        %v561 = vld [vmem:[%s408 + $0x1f8] sm:$0xff]
        %v562 = vld [vmem:[%s408 + $0x200] sm:$0xff]
        %v563 = vld [vmem:[%s408 + $0x208] sm:$0xff]
        %v564 = vld [vmem:[%s408 + $0x210] sm:$0xff]
        %v565 = vld [vmem:[%s408 + $0x218] sm:$0xff]
        %v566 = vld [vmem:[%s408 + $0x220] sm:$0xff]
        %v567 = vld [vmem:[%s408 + $0x228] sm:$0xff]
        %v568 = vld [vmem:[%s408 + $0x230] sm:$0xff]
        %v569 = vld [vmem:[%s408 + $0x238] sm:$0xff]
        %v570 = vld [vmem:[%s408 + $0x240] sm:$0xff]
        %v571 = vld [vmem:[%s408 + $0x248] sm:$0xff]
        %v572 = vld [vmem:[%s408 + $0x250] sm:$0xff]
        %v573 = vld [vmem:[%s408 + $0x258] sm:$0xff]
        %v574 = vld [vmem:[%s408 + $0x260] sm:$0xff]
        %v575 = vld [vmem:[%s408 + $0x268] sm:$0xff]
        %v576 = vld [vmem:[%s408 + $0x270] sm:$0xff]
        %v577 = vld [vmem:[%s408 + $0x278] sm:$0xff]
        %v578 = vld [vmem:[%s408 + $0x280] sm:$0xff]
        %v579 = vld [vmem:[%s408 + $0x288] sm:$0xff]
        %v580 = vld [vmem:[%s408 + $0x290] sm:$0xff]
        %v581 = vld [vmem:[%s408 + $0x298] sm:$0xff]
        %v582 = vld [vmem:[%s408 + $0x2a0] sm:$0xff]
        %v583 = vld [vmem:[%s408 + $0x2a8] sm:$0xff]
        %v584 = vld [vmem:[%s408 + $0x2b0] sm:$0xff]
        %v585 = vld [vmem:[%s408 + $0x2b8] sm:$0xff]
        %v586 = vld [vmem:[%s408 + $0x2c0] sm:$0xff]
        %v587 = vld [vmem:[%s408 + $0x2c8] sm:$0xff]
        %v588 = vld [vmem:[%s408 + $0x2d0] sm:$0xff]
        %v589 = vld [vmem:[%s408 + $0x2d8] sm:$0xff]
        %v590 = vld [vmem:[%s408 + $0x2e0] sm:$0xff]
        %v591 = vld [vmem:[%s408 + $0x2e8] sm:$0xff]
        %v592 = vld [vmem:[%s408 + $0x2f0] sm:$0xff]
        %v593 = vld [vmem:[%s408 + $0x2f8] sm:$0xff]
        %v594 = vld [vmem:[%s408 + $0x300] sm:$0xff]
        %v595 = vld [vmem:[%s408 + $0x308] sm:$0xff]
        %v596 = vld [vmem:[%s408 + $0x310] sm:$0xff]
        %v597 = vld [vmem:[%s408 + $0x318] sm:$0xff]
        %v598 = vld [vmem:[%s408 + $0x320] sm:$0xff]
        %v599 = vld [vmem:[%s408 + $0x328] sm:$0xff]
        %v600 = vld [vmem:[%s408 + $0x330] sm:$0xff]
        %v601 = vld [vmem:[%s408 + $0x338] sm:$0xff]
        %v602 = vld [vmem:[%s408 + $0x340] sm:$0xff]
        %v603 = vld [vmem:[%s408 + $0x348] sm:$0xff]
        %v604 = vld [vmem:[%s408 + $0x350] sm:$0xff]
        %v605 = vld [vmem:[%s408 + $0x358] sm:$0xff]
        %v606 = vld [vmem:[%s408 + $0x360] sm:$0xff]
        %v607 = vld [vmem:[%s408 + $0x368] sm:$0xff]
        %v608 = vld [vmem:[%s408 + $0x370] sm:$0xff]
        %v609 = vld [vmem:[%s408 + $0x378] sm:$0xff]
        %v610 = vld [vmem:[%s408 + $0x380] sm:$0xff]
        %v611 = vld [vmem:[%s408 + $0x388] sm:$0xff]
        %v612 = vld [vmem:[%s408 + $0x390] sm:$0xff]
        %v613 = vld [vmem:[%s408 + $0x398] sm:$0xff]
        %v614 = vld [vmem:[%s408 + $0x3a0] sm:$0xff]
        %v615 = vld [vmem:[%s408 + $0x3a8] sm:$0xff]
        %v616 = vld [vmem:[%s408 + $0x3b0] sm:$0xff]
        %v617 = vld [vmem:[%s408 + $0x3b8] sm:$0xff]
        %v618 = vld [vmem:[%s408 + $0x3c0] sm:$0xff]
        %v619 = vld [vmem:[%s408 + $0x3c8] sm:$0xff]
        %v620 = vld [vmem:[%s408 + $0x3d0] sm:$0xff]
        %v621 = vld [vmem:[%s408 + $0x3d8] sm:$0xff]
        %v622 = vld [vmem:[%s408 + $0x3e0] sm:$0xff]
        %v623 = vld [vmem:[%s408 + $0x3e8] sm:$0xff]
        %v624 = vld [vmem:[%s408 + $0x3f0] sm:$0xff]
        %v625 = vld [vmem:[%s408 + $0x3f8] sm:$0xff]
        %v626 = vld [vmem:[%s408 + $0x400] sm:$0xff]
        %v627 = vld [vmem:[%s408 + $0x408] sm:$0xff]
        %v628 = vld [vmem:[%s408 + $0x410] sm:$0xff]
        %v629 = vld [vmem:[%s408 + $0x418] sm:$0xff]
        %v630 = vld [vmem:[%s408 + $0x420] sm:$0xff]
        %v631 = vld [vmem:[%s408 + $0x428] sm:$0xff]
        %v632 = vld [vmem:[%s408 + $0x430] sm:$0xff]
        %v633 = vld [vmem:[%s408 + $0x438] sm:$0xff]
        %v634 = vld [vmem:[%s408 + $0x440] sm:$0xff]
        %v635 = vld [vmem:[%s408 + $0x448] sm:$0xff]
        %v636 = vld [vmem:[%s408 + $0x450] sm:$0xff]
        %v637 = vld [vmem:[%s408 + $0x458] sm:$0xff]
        %v638 = vld [vmem:[%s408 + $0x460] sm:$0xff]
        %v639 = vld [vmem:[%s408 + $0x468] sm:$0xff]
        %v640 = vld [vmem:[%s408 + $0x470] sm:$0xff]
        %v641 = vld [vmem:[%s408 + $0x478] sm:$0xff]
        %v642 = vld [vmem:[%s408 + $0x480] sm:$0xff]
        %v643 = vld [vmem:[%s408 + $0x488] sm:$0xff]
        %v644 = vld [vmem:[%s408 + $0x490] sm:$0xff]
        %v645 = vld [vmem:[%s408 + $0x498] sm:$0xff]
        %v646 = vld [vmem:[%s408 + $0x4a0] sm:$0xff]
        %v647 = vld [vmem:[%s408 + $0x4a8] sm:$0xff]
        %v648 = vld [vmem:[%s408 + $0x4b0] sm:$0xff]
        %v649 = vld [vmem:[%s408 + $0x4b8] sm:$0xff]
        %v650 = vld [vmem:[%s408 + $0x4c0] sm:$0xff]
        %v651 = vld [vmem:[%s408 + $0x4c8] sm:$0xff]
        %v652 = vld [vmem:[%s408 + $0x4d0] sm:$0xff]
        %v653 = vld [vmem:[%s408 + $0x4d8] sm:$0xff]
        %v654 = vld [vmem:[%s408 + $0x4e0] sm:$0xff]
        %v655 = vld [vmem:[%s408 + $0x4e8] sm:$0xff]
        %v656 = vld [vmem:[%s408 + $0x4f0] sm:$0xff]
        %v657 = vld [vmem:[%s408 + $0x4f8] sm:$0xff]
        %v658 = vld [vmem:[%s408 + $0x500] sm:$0xff]
        %v659 = vld [vmem:[%s408 + $0x508] sm:$0xff]
        %v660 = vld [vmem:[%s408 + $0x510] sm:$0xff]
        %v661 = vld [vmem:[%s408 + $0x518] sm:$0xff]
        %v662 = vld [vmem:[%s408 + $0x520] sm:$0xff]
        %v663 = vld [vmem:[%s408 + $0x528] sm:$0xff]
        %v664 = vld [vmem:[%s408 + $0x530] sm:$0xff]
        %v665 = vld [vmem:[%s408 + $0x538] sm:$0xff]
        %v666 = vld [vmem:[%s408 + $0x540] sm:$0xff]
        %v667 = vld [vmem:[%s408 + $0x548] sm:$0xff]
        %v668 = vld [vmem:[%s408 + $0x550] sm:$0xff]
        %v669 = vld [vmem:[%s408 + $0x558] sm:$0xff]
        %v670 = vld [vmem:[%s408 + $0x560] sm:$0xff]
        %v671 = vld [vmem:[%s408 + $0x568] sm:$0xff]
        %v672 = vld [vmem:[%s408 + $0x570] sm:$0xff]
        %v673 = vld [vmem:[%s408 + $0x578] sm:$0xff]
        %v674 = vld [vmem:[%s408 + $0x580] sm:$0xff]
        %v675 = vld [vmem:[%s408 + $0x588] sm:$0xff]
        %v676 = vld [vmem:[%s408 + $0x590] sm:$0xff]
        %v677 = vld [vmem:[%s408 + $0x598] sm:$0xff]
        %v678 = vld [vmem:[%s408 + $0x5a0] sm:$0xff]
        %v679 = vld [vmem:[%s408 + $0x5a8] sm:$0xff]
        %v680 = vld [vmem:[%s408 + $0x5b0] sm:$0xff]
        %v681 = vld [vmem:[%s408 + $0x5b8] sm:$0xff]
        %v682 = vld [vmem:[%s408 + $0x5c0] sm:$0xff]
        %v683 = vld [vmem:[%s408 + $0x5c8] sm:$0xff]
        %v684 = vld [vmem:[%s408 + $0x5d0] sm:$0xff]
        %v685 = vld [vmem:[%s408 + $0x5d8] sm:$0xff]
        %v686 = vld [vmem:[%s408 + $0x5e0] sm:$0xff]
        %v687 = vld [vmem:[%s408 + $0x5e8] sm:$0xff]
        %v688 = vld [vmem:[%s408 + $0x5f0] sm:$0xff]
        %v689 = vld [vmem:[%s408 + $0x5f8] sm:$0xff]
        %v690 = vld [vmem:[%s408 + $0x600] sm:$0xff]
        %v691 = vld [vmem:[%s408 + $0x608] sm:$0xff]
        %v692 = vld [vmem:[%s408 + $0x610] sm:$0xff]
        %v693 = vld [vmem:[%s408 + $0x618] sm:$0xff]
        %v694 = vld [vmem:[%s408 + $0x620] sm:$0xff]
        %v695 = vld [vmem:[%s408 + $0x628] sm:$0xff]
        %v696 = vld [vmem:[%s408 + $0x630] sm:$0xff]
        %v697 = vld [vmem:[%s408 + $0x638] sm:$0xff]
        %v698 = vld [vmem:[%s408 + $0x640] sm:$0xff]
        %v699 = vld [vmem:[%s408 + $0x648] sm:$0xff]
        %v700 = vld [vmem:[%s408 + $0x650] sm:$0xff]
        %v701 = vld [vmem:[%s408 + $0x658] sm:$0xff]
        %v702 = vld [vmem:[%s408 + $0x660] sm:$0xff]
        %v703 = vld [vmem:[%s408 + $0x668] sm:$0xff]
        %v704 = vld [vmem:[%s408 + $0x670] sm:$0xff]
        %v705 = vld [vmem:[%s408 + $0x678] sm:$0xff]
        %v706 = vld [vmem:[%s408 + $0x680] sm:$0xff]
        %v707 = vld [vmem:[%s408 + $0x688] sm:$0xff]
        %v708 = vld [vmem:[%s408 + $0x690] sm:$0xff]
        %v709 = vld [vmem:[%s408 + $0x698] sm:$0xff]
        %v710 = vld [vmem:[%s408 + $0x6a0] sm:$0xff]
        %v711 = vld [vmem:[%s408 + $0x6a8] sm:$0xff]
        %v712 = vld [vmem:[%s408 + $0x6b0] sm:$0xff]
        %v713 = vld [vmem:[%s408 + $0x6b8] sm:$0xff]
        %v714 = vld [vmem:[%s408 + $0x6c0] sm:$0xff]
        %v715 = vld [vmem:[%s408 + $0x6c8] sm:$0xff]
        %v716 = vld [vmem:[%s408 + $0x6d0] sm:$0xff]
        %v717 = vld [vmem:[%s408 + $0x6d8] sm:$0xff]
        %v718 = vld [vmem:[%s408 + $0x6e0] sm:$0xff]
        %v719 = vld [vmem:[%s408 + $0x6e8] sm:$0xff]
        %v720 = vld [vmem:[%s408 + $0x6f0] sm:$0xff]
        %v721 = vld [vmem:[%s408 + $0x6f8] sm:$0xff]
        %v722 = vld [vmem:[%s408 + $0x700] sm:$0xff]
        %v723 = vld [vmem:[%s408 + $0x708] sm:$0xff]
        %v724 = vld [vmem:[%s408 + $0x710] sm:$0xff]
        %v725 = vld [vmem:[%s408 + $0x718] sm:$0xff]
        %v726 = vld [vmem:[%s408 + $0x720] sm:$0xff]
        %v727 = vld [vmem:[%s408 + $0x728] sm:$0xff]
        %v728 = vld [vmem:[%s408 + $0x730] sm:$0xff]
        %v729 = vld [vmem:[%s408 + $0x738] sm:$0xff]
        %v730 = vld [vmem:[%s408 + $0x740] sm:$0xff]
        %v731 = vld [vmem:[%s408 + $0x748] sm:$0xff]
        %v732 = vld [vmem:[%s408 + $0x750] sm:$0xff]
        %v733 = vld [vmem:[%s408 + $0x758] sm:$0xff]
        %v734 = vld [vmem:[%s408 + $0x760] sm:$0xff]
        %v735 = vld [vmem:[%s408 + $0x768] sm:$0xff]
        %v736 = vld [vmem:[%s408 + $0x770] sm:$0xff]
        %v737 = vld [vmem:[%s408 + $0x778] sm:$0xff]
        %v738 = vld [vmem:[%s408 + $0x780] sm:$0xff]
        %v739 = vld [vmem:[%s408 + $0x788] sm:$0xff]
        %v740 = vld [vmem:[%s408 + $0x790] sm:$0xff]
        %v741 = vld [vmem:[%s408 + $0x798] sm:$0xff]
        %v742 = vld [vmem:[%s408 + $0x7a0] sm:$0xff]
        %v743 = vld [vmem:[%s408 + $0x7a8] sm:$0xff]
        %v744 = vld [vmem:[%s408 + $0x7b0] sm:$0xff]
        %v745 = vld [vmem:[%s408 + $0x7b8] sm:$0xff]
        %v746 = vld [vmem:[%s408 + $0x7c0] sm:$0xff]
        %v747 = vld [vmem:[%s408 + $0x7c8] sm:$0xff]
        %v748 = vld [vmem:[%s408 + $0x7d0] sm:$0xff]
        %v749 = vld [vmem:[%s408 + $0x7d8] sm:$0xff]
        %v750 = vld [vmem:[%s408 + $0x7e0] sm:$0xff]
        %v751 = vld [vmem:[%s408 + $0x7e8] sm:$0xff]
        %v752 = vld [vmem:[%s408 + $0x7f0] sm:$0xff]
        %v753 = vld [vmem:[%s408 + $0x7f8] sm:$0xff]
        %v754 = vld [vmem:[%s408 + $0x800] sm:$0xff]
        %v755 = vld [vmem:[%s408 + $0x808] sm:$0xff]
        %v756 = vld [vmem:[%s408 + $0x810] sm:$0xff]
        %v757 = vld [vmem:[%s408 + $0x818] sm:$0xff]
        %v758 = vld [vmem:[%s408 + $0x820] sm:$0xff]
        %v759 = vld [vmem:[%s408 + $0x828] sm:$0xff]
        %v760 = vld [vmem:[%s408 + $0x830] sm:$0xff]
        %v761 = vld [vmem:[%s408 + $0x838] sm:$0xff]
        %v762 = vld [vmem:[%s408 + $0x840] sm:$0xff]
        %v763 = vld [vmem:[%s408 + $0x848] sm:$0xff]
        %v764 = vld [vmem:[%s408 + $0x850] sm:$0xff]
        %v765 = vld [vmem:[%s408 + $0x858] sm:$0xff]
        %v766 = vld [vmem:[%s408 + $0x860] sm:$0xff]
        %v767 = vld [vmem:[%s408 + $0x868] sm:$0xff]
        %v768 = vld [vmem:[%s408 + $0x870] sm:$0xff]
        %v769 = vld [vmem:[%s408 + $0x878] sm:$0xff]
        %v770 = vld [vmem:[%s408 + $0x880] sm:$0xff]
        %v771 = vld [vmem:[%s408 + $0x888] sm:$0xff]
        %v772 = vld [vmem:[%s408 + $0x890] sm:$0xff]
        %v773 = vld [vmem:[%s408 + $0x898] sm:$0xff]
        %v774 = vld [vmem:[%s408 + $0x8a0] sm:$0xff]
        %v775 = vld [vmem:[%s408 + $0x8a8] sm:$0xff]
        %v776 = vld [vmem:[%s408 + $0x8b0] sm:$0xff]
        %v777 = vld [vmem:[%s408 + $0x8b8] sm:$0xff]
        %v778 = vld [vmem:[%s408 + $0x8c0] sm:$0xff]
        %v779 = vld [vmem:[%s408 + $0x8c8] sm:$0xff]
        %v780 = vld [vmem:[%s408 + $0x8d0] sm:$0xff]
        %v781 = vld [vmem:[%s408 + $0x8d8] sm:$0xff]
        %v782 = vld [vmem:[%s408 + $0x8e0] sm:$0xff]
        %v783 = vld [vmem:[%s408 + $0x8e8] sm:$0xff]
        %v784 = vld [vmem:[%s408 + $0x8f0] sm:$0xff]
        %v785 = vld [vmem:[%s408 + $0x8f8] sm:$0xff]
        %v786 = vld [vmem:[%s408 + $0x900] sm:$0xff]
        %v787 = vld [vmem:[%s408 + $0x908] sm:$0xff]
        %v788 = vld [vmem:[%s408 + $0x910] sm:$0xff]
        %v789 = vld [vmem:[%s408 + $0x918] sm:$0xff]
        %v790 = vld [vmem:[%s408 + $0x920] sm:$0xff]
        %v791 = vld [vmem:[%s408 + $0x928] sm:$0xff]
        %v792 = vld [vmem:[%s408 + $0x930] sm:$0xff]
        %v793 = vld [vmem:[%s408 + $0x938] sm:$0xff]
        %v794 = vld [vmem:[%s408 + $0x940] sm:$0xff]
        %v795 = vld [vmem:[%s408 + $0x948] sm:$0xff]
        %v796 = vld [vmem:[%s408 + $0x950] sm:$0xff]
        %v797 = vld [vmem:[%s408 + $0x958] sm:$0xff]
        %v798 = vld [vmem:[%s408 + $0x960] sm:$0xff]
        %v799 = vld [vmem:[%s408 + $0x968] sm:$0xff]
        %v800 = vld [vmem:[%s408 + $0x970] sm:$0xff]
        %v801 = vld [vmem:[%s408 + $0x978] sm:$0xff]
        %v802 = vld [vmem:[%s408 + $0x980] sm:$0xff]
        %v803 = vld [vmem:[%s408 + $0x988] sm:$0xff]
        %v804 = vld [vmem:[%s408 + $0x990] sm:$0xff]
        %v805 = vld [vmem:[%s408 + $0x998] sm:$0xff]
        %v806 = vld [vmem:[%s408 + $0x9a0] sm:$0xff]
        %v807 = vld [vmem:[%s408 + $0x9a8] sm:$0xff]
        %v808 = vld [vmem:[%s408 + $0x9b0] sm:$0xff]
        %v809 = vld [vmem:[%s408 + $0x9b8] sm:$0xff]
        %v810 = vld [vmem:[%s408 + $0x9c0] sm:$0xff]
        %v811 = vld [vmem:[%s408 + $0x9c8] sm:$0xff]
        %v812 = vld [vmem:[%s408 + $0x9d0] sm:$0xff]
        %v813 = vld [vmem:[%s408 + $0x9d8] sm:$0xff]
        %v814 = vld [vmem:[%s408 + $0x9e0] sm:$0xff]
        %v815 = vld [vmem:[%s408 + $0x9e8] sm:$0xff]
        %v816 = vld [vmem:[%s408 + $0x9f0] sm:$0xff]
        %v817 = vld [vmem:[%s408 + $0x9f8] sm:$0xff]
        %v818 = vld [vmem:[%s408 + $0xa00] sm:$0xff]
        %v819 = vld [vmem:[%s408 + $0xa08] sm:$0xff]
        %v820 = vld [vmem:[%s408 + $0xa10] sm:$0xff]
        %v821 = vld [vmem:[%s408 + $0xa18] sm:$0xff]
        %v822 = vld [vmem:[%s408 + $0xa20] sm:$0xff]
        %v823 = vld [vmem:[%s408 + $0xa28] sm:$0xff]
        %v824 = vld [vmem:[%s408 + $0xa30] sm:$0xff]
        %v825 = vld [vmem:[%s408 + $0xa38] sm:$0xff]
        %v826 = vld [vmem:[%s408 + $0xa40] sm:$0xff]
        %v827 = vld [vmem:[%s408 + $0xa48] sm:$0xff]
        %v828 = vld [vmem:[%s408 + $0xa50] sm:$0xff]
        %v829 = vld [vmem:[%s408 + $0xa58] sm:$0xff]
        %v830 = vld [vmem:[%s408 + $0xa60] sm:$0xff]
        %v831 = vld [vmem:[%s408 + $0xa68] sm:$0xff]
        %v832 = vld [vmem:[%s408 + $0xa70] sm:$0xff]
        %v833 = vld [vmem:[%s408 + $0xa78] sm:$0xff]
        %v834 = vld [vmem:[%s408 + $0xa80] sm:$0xff]
        %v835 = vld [vmem:[%s408 + $0xa88] sm:$0xff]
        %v836 = vld [vmem:[%s408 + $0xa90] sm:$0xff]
        %v837 = vld [vmem:[%s408 + $0xa98] sm:$0xff]
        %v838 = vld [vmem:[%s408 + $0xaa0] sm:$0xff]
        %v839 = vld [vmem:[%s408 + $0xaa8] sm:$0xff]
        %v840 = vld [vmem:[%s408 + $0xab0] sm:$0xff]
        %v841 = vld [vmem:[%s408 + $0xab8] sm:$0xff]
        %v842 = vld [vmem:[%s408 + $0xac0] sm:$0xff]
        %v843 = vld [vmem:[%s408 + $0xac8] sm:$0xff]
        %v844 = vld [vmem:[%s408 + $0xad0] sm:$0xff]
        %v845 = vld [vmem:[%s408 + $0xad8] sm:$0xff]
        %v846 = vld [vmem:[%s408 + $0xae0] sm:$0xff]
        %v847 = vld [vmem:[%s408 + $0xae8] sm:$0xff]
        %v848 = vld [vmem:[%s408 + $0xaf0] sm:$0xff]
        %v849 = vld [vmem:[%s408 + $0xaf8] sm:$0xff]
        %v850 = vld [vmem:[%s408 + $0xb00] sm:$0xff]
        %v851 = vld [vmem:[%s408 + $0xb08] sm:$0xff]
        %v852 = vld [vmem:[%s408 + $0xb10] sm:$0xff]
        %v853 = vld [vmem:[%s408 + $0xb18] sm:$0xff]
        %v854 = vld [vmem:[%s408 + $0xb20] sm:$0xff]
        %v855 = vld [vmem:[%s408 + $0xb28] sm:$0xff]
        %v856 = vld [vmem:[%s408 + $0xb30] sm:$0xff]
        %v857 = vld [vmem:[%s408 + $0xb38] sm:$0xff]
        %v858 = vld [vmem:[%s408 + $0xb40] sm:$0xff]
        %v859 = vld [vmem:[%s408 + $0xb48] sm:$0xff]
        %v860 = vld [vmem:[%s408 + $0xb50] sm:$0xff]
        %v861 = vld [vmem:[%s408 + $0xb58] sm:$0xff]
        %v862 = vld [vmem:[%s408 + $0xb60] sm:$0xff]
        %v863 = vld [vmem:[%s408 + $0xb68] sm:$0xff]
        %v864 = vld [vmem:[%s408 + $0xb70] sm:$0xff]
        %v865 = vld [vmem:[%s408 + $0xb78] sm:$0xff]
        %v866 = vld [vmem:[%s408 + $0xb80] sm:$0xff]
        %v867 = vld [vmem:[%s408 + $0xb88] sm:$0xff]
        %v868 = vld [vmem:[%s408 + $0xb90] sm:$0xff]
        %v869 = vld [vmem:[%s408 + $0xb98] sm:$0xff]
        %v870 = vld [vmem:[%s408 + $0xba0] sm:$0xff]
        %v871 = vld [vmem:[%s408 + $0xba8] sm:$0xff]
        %v872 = vld [vmem:[%s408 + $0xbb0] sm:$0xff]
        %v873 = vld [vmem:[%s408 + $0xbb8] sm:$0xff]
        %v874 = vld [vmem:[%s408 + $0xbc0] sm:$0xff]
        %v875 = vld [vmem:[%s408 + $0xbc8] sm:$0xff]
        %v876 = vld [vmem:[%s408 + $0xbd0] sm:$0xff]
        %v877 = vld [vmem:[%s408 + $0xbd8] sm:$0xff]
        %v878 = vld [vmem:[%s408 + $0xbe0] sm:$0xff]
        %v879 = vld [vmem:[%s408 + $0xbe8] sm:$0xff]
        %v880 = vld [vmem:[%s408 + $0xbf0] sm:$0xff]
        %v881 = vld [vmem:[%s408 + $0xbf8] sm:$0xff]
        %v882 = vld [vmem:[%s408 + $0xc00] sm:$0xff]
        %v883 = vld [vmem:[%s408 + $0xc08] sm:$0xff]
        %v884 = vld [vmem:[%s408 + $0xc10] sm:$0xff]
        %v885 = vld [vmem:[%s408 + $0xc18] sm:$0xff]
        %v886 = vld [vmem:[%s408 + $0xc20] sm:$0xff]
        %v887 = vld [vmem:[%s408 + $0xc28] sm:$0xff]
        %v888 = vld [vmem:[%s408 + $0xc30] sm:$0xff]
        %v889 = vld [vmem:[%s408 + $0xc38] sm:$0xff]
        %v890 = vld [vmem:[%s408 + $0xc40] sm:$0xff]
        %v891 = vld [vmem:[%s408 + $0xc48] sm:$0xff]
        %v892 = vld [vmem:[%s408 + $0xc50] sm:$0xff]
        %v893 = vld [vmem:[%s408 + $0xc58] sm:$0xff]
        %v894 = vld [vmem:[%s408 + $0xc60] sm:$0xff]
        %v895 = vld [vmem:[%s408 + $0xc68] sm:$0xff]
        %v896 = vld [vmem:[%s408 + $0xc70] sm:$0xff]
        %v897 = vld [vmem:[%s408 + $0xc78] sm:$0xff]
        %v898 = vld [vmem:[%s408 + $0xc80] sm:$0xff]
        %v899 = vld [vmem:[%s408 + $0xc88] sm:$0xff]
        %v900 = vld [vmem:[%s408 + $0xc90] sm:$0xff]
        %v901 = vld [vmem:[%s408 + $0xc98] sm:$0xff]
        %v902 = vld [vmem:[%s408 + $0xca0] sm:$0xff]
        %v903 = vld [vmem:[%s408 + $0xca8] sm:$0xff]
        %v904 = vld [vmem:[%s408 + $0xcb0] sm:$0xff]
        %v905 = vld [vmem:[%s408 + $0xcb8] sm:$0xff]
        %v906 = vld [vmem:[%s408 + $0xcc0] sm:$0xff]
        %v907 = vld [vmem:[%s408 + $0xcc8] sm:$0xff]
        %v908 = vld [vmem:[%s408 + $0xcd0] sm:$0xff]
        %v909 = vld [vmem:[%s408 + $0xcd8] sm:$0xff]
        %v910 = vld [vmem:[%s408 + $0xce0] sm:$0xff]
        %v911 = vld [vmem:[%s408 + $0xce8] sm:$0xff]
        %v912 = vld [vmem:[%s408 + $0xcf0] sm:$0xff]
        %v913 = vld [vmem:[%s408 + $0xcf8] sm:$0xff]
        %v914 = vld [vmem:[%s408 + $0xd00] sm:$0xff]
        %v915 = vld [vmem:[%s408 + $0xd08] sm:$0xff]
        %v916 = vld [vmem:[%s408 + $0xd10] sm:$0xff]
        %v917 = vld [vmem:[%s408 + $0xd18] sm:$0xff]
        %v918 = vld [vmem:[%s408 + $0xd20] sm:$0xff]
        %v919 = vld [vmem:[%s408 + $0xd28] sm:$0xff]
        %v920 = vld [vmem:[%s408 + $0xd30] sm:$0xff]
        %v921 = vld [vmem:[%s408 + $0xd38] sm:$0xff]
        %v922 = vld [vmem:[%s408 + $0xd40] sm:$0xff]
        %v923 = vld [vmem:[%s408 + $0xd48] sm:$0xff]
        %v924 = vld [vmem:[%s408 + $0xd50] sm:$0xff]
        %v925 = vld [vmem:[%s408 + $0xd58] sm:$0xff]
        %v926 = vld [vmem:[%s408 + $0xd60] sm:$0xff]
        %v927 = vld [vmem:[%s408 + $0xd68] sm:$0xff]
        %v928 = vld [vmem:[%s408 + $0xd70] sm:$0xff]
        %v929 = vld [vmem:[%s408 + $0xd78] sm:$0xff]
        %v930 = vld [vmem:[%s408 + $0xd80] sm:$0xff]
        %v931 = vld [vmem:[%s408 + $0xd88] sm:$0xff]
        %v932 = vld [vmem:[%s408 + $0xd90] sm:$0xff]
        %v933 = vld [vmem:[%s408 + $0xd98] sm:$0xff]
        %v934 = vld [vmem:[%s408 + $0xda0] sm:$0xff]
        %v935 = vld [vmem:[%s408 + $0xda8] sm:$0xff]
        %v936 = vld [vmem:[%s408 + $0xdb0] sm:$0xff]
        %v937 = vld [vmem:[%s408 + $0xdb8] sm:$0xff]
        %v938 = vld [vmem:[%s408 + $0xdc0] sm:$0xff]
        %v939 = vld [vmem:[%s408 + $0xdc8] sm:$0xff]
        %v940 = vld [vmem:[%s408 + $0xdd0] sm:$0xff]
        %v941 = vld [vmem:[%s408 + $0xdd8] sm:$0xff]
        %v942 = vld [vmem:[%s408 + $0xde0] sm:$0xff]
        %v943 = vld [vmem:[%s408 + $0xde8] sm:$0xff]
        %v944 = vld [vmem:[%s408 + $0xdf0] sm:$0xff]
        %v945 = vld [vmem:[%s408 + $0xdf8] sm:$0xff]
        %v946 = vld [vmem:[%s408 + $0xe00] sm:$0xff]
        %v947 = vld [vmem:[%s408 + $0xe08] sm:$0xff]
        %v948 = vld [vmem:[%s408 + $0xe10] sm:$0xff]
        %v949 = vld [vmem:[%s408 + $0xe18] sm:$0xff]
        %v950 = vld [vmem:[%s408 + $0xe20] sm:$0xff]
        %v951 = vld [vmem:[%s408 + $0xe28] sm:$0xff]
        %v952 = vld [vmem:[%s408 + $0xe30] sm:$0xff]
        %v953 = vld [vmem:[%s408 + $0xe38] sm:$0xff]
        %v954 = vld [vmem:[%s408 + $0xe40] sm:$0xff]
        %v955 = vld [vmem:[%s408 + $0xe48] sm:$0xff]
        %v956 = vld [vmem:[%s408 + $0xe50] sm:$0xff]
        %v957 = vld [vmem:[%s408 + $0xe58] sm:$0xff]
        %v958 = vld [vmem:[%s408 + $0xe60] sm:$0xff]
        %v959 = vld [vmem:[%s408 + $0xe68] sm:$0xff]
        %v960 = vld [vmem:[%s408 + $0xe70] sm:$0xff]
        %v961 = vld [vmem:[%s408 + $0xe78] sm:$0xff]
        %v962 = vld [vmem:[%s408 + $0xe80] sm:$0xff]
        %v963 = vld [vmem:[%s408 + $0xe88] sm:$0xff]
        %v964 = vld [vmem:[%s408 + $0xe90] sm:$0xff]
        %v965 = vld [vmem:[%s408 + $0xe98] sm:$0xff]
        %v966 = vld [vmem:[%s408 + $0xea0] sm:$0xff]
        %v967 = vld [vmem:[%s408 + $0xea8] sm:$0xff]
        %v968 = vld [vmem:[%s408 + $0xeb0] sm:$0xff]
        %v969 = vld [vmem:[%s408 + $0xeb8] sm:$0xff]
        %v970 = vld [vmem:[%s408 + $0xec0] sm:$0xff]
        %v971 = vld [vmem:[%s408 + $0xec8] sm:$0xff]
        %v972 = vld [vmem:[%s408 + $0xed0] sm:$0xff]
        %v973 = vld [vmem:[%s408 + $0xed8] sm:$0xff]
        %v974 = vld [vmem:[%s408 + $0xee0] sm:$0xff]
        %v975 = vld [vmem:[%s408 + $0xee8] sm:$0xff]
        %v976 = vld [vmem:[%s408 + $0xef0] sm:$0xff]
        %v977 = vld [vmem:[%s408 + $0xef8] sm:$0xff]
        %v978 = vld [vmem:[%s408 + $0xf00] sm:$0xff]
        %v979 = vld [vmem:[%s408 + $0xf08] sm:$0xff]
        %v980 = vld [vmem:[%s408 + $0xf10] sm:$0xff]
        %v981 = vld [vmem:[%s408 + $0xf18] sm:$0xff]
        %v982 = vld [vmem:[%s408 + $0xf20] sm:$0xff]
        %v983 = vld [vmem:[%s408 + $0xf28] sm:$0xff]
        %v984 = vld [vmem:[%s408 + $0xf30] sm:$0xff]
        %v985 = vld [vmem:[%s408 + $0xf38] sm:$0xff]
        %v986 = vld [vmem:[%s408 + $0xf40] sm:$0xff]
        %v987 = vld [vmem:[%s408 + $0xf48] sm:$0xff]
        %v988 = vld [vmem:[%s408 + $0xf50] sm:$0xff]
        %v989 = vld [vmem:[%s408 + $0xf58] sm:$0xff]
        %v990 = vld [vmem:[%s408 + $0xf60] sm:$0xff]
        %v991 = vld [vmem:[%s408 + $0xf68] sm:$0xff]
        %v992 = vld [vmem:[%s408 + $0xf70] sm:$0xff]
        %v993 = vld [vmem:[%s408 + $0xf78] sm:$0xff]
        %v994 = vld [vmem:[%s408 + $0xf80] sm:$0xff]
        %v995 = vld [vmem:[%s408 + $0xf88] sm:$0xff]
        %v996 = vld [vmem:[%s408 + $0xf90] sm:$0xff]
        %v997 = vld [vmem:[%s408 + $0xf98] sm:$0xff]
        %v998 = vld [vmem:[%s408 + $0xfa0] sm:$0xff]
        %v999 = vld [vmem:[%s408 + $0xfa8] sm:$0xff]
        %v1000 = vld [vmem:[%s408 + $0xfb0] sm:$0xff]
        %v1001 = vld [vmem:[%s408 + $0xfb8] sm:$0xff]
        %v1002 = vld [vmem:[%s408 + $0xfc0] sm:$0xff]
        %v1003 = vld [vmem:[%s408 + $0xfc8] sm:$0xff]
        %v1004 = vld [vmem:[%s408 + $0xfd0] sm:$0xff]
        %v1005 = vld [vmem:[%s408 + $0xfd8] sm:$0xff]
        %v1006 = vld [vmem:[%s408 + $0xfe0] sm:$0xff]
        %v1007 = vld [vmem:[%s408 + $0xfe8] sm:$0xff]
        %v1008 = vld [vmem:[%s408 + $0xff0] sm:$0xff]
        %v1009 = vld [vmem:[%s408 + $0xff8] sm:$0xff]
        %v1014 = vunpack.c.l.b16 %v494
        %v1015 = vunpack.c.h.b16 %v494
        %v1016 = vunpack.c.l.b16 %v495
        %v1017 = vunpack.c.h.b16 %v495
        %v1018 = vunpack.c.l.b16 %v496
        %v1019 = vunpack.c.h.b16 %v496
        %v1020 = vunpack.c.l.b16 %v497
        %v1021 = vunpack.c.h.b16 %v497
        %v1022 = vpack.c.b16 %v1014, %v1014
        %v1023 = vpack.c.b16 %v1015, %v1015
        %v1024 = vpack.c.b16 %v1016, %v1016
        %v1025 = vpack.c.b16 %v1017, %v1017
        %v1026 = vpack.c.b16 %v1018, %v1018
        %v1027 = vpack.c.b16 %v1019, %v1019
        %v1028 = vpack.c.b16 %v1020, %v1020
        %v1029 = vpack.c.b16 %v1021, %v1021
        %v1550 = vunpack.c.l.b16 %v498
        %v1551 = vunpack.c.h.b16 %v498
        %v1552 = vunpack.c.l.b16 %v499
        %v1553 = vunpack.c.h.b16 %v499
        %v1554 = vunpack.c.l.b16 %v500
        %v1555 = vunpack.c.h.b16 %v500
        %v1556 = vunpack.c.l.b16 %v501
        %v1557 = vunpack.c.h.b16 %v501
        %v1558 = vunpack.c.l.b16 %v502
        %v1559 = vunpack.c.h.b16 %v502
        %v1560 = vunpack.c.l.b16 %v503
        %v1561 = vunpack.c.h.b16 %v503
        %v1562 = vunpack.c.l.b16 %v504
        %v1563 = vunpack.c.h.b16 %v504
        %v1564 = vunpack.c.l.b16 %v505
        %v1565 = vunpack.c.h.b16 %v505
        %v1566 = vunpack.c.l.b16 %v506
        %v1567 = vunpack.c.h.b16 %v506
        %v1568 = vunpack.c.l.b16 %v507
        %v1569 = vunpack.c.h.b16 %v507
        %v1570 = vunpack.c.l.b16 %v508
        %v1571 = vunpack.c.h.b16 %v508
        %v1572 = vunpack.c.l.b16 %v509
        %v1573 = vunpack.c.h.b16 %v509
        %v1574 = vunpack.c.l.b16 %v510
        %v1575 = vunpack.c.h.b16 %v510
        %v1576 = vunpack.c.l.b16 %v511
        %v1577 = vunpack.c.h.b16 %v511
        %v1578 = vunpack.c.l.b16 %v512
        %v1579 = vunpack.c.h.b16 %v512
        %v1580 = vunpack.c.l.b16 %v513
        %v1581 = vunpack.c.h.b16 %v513
        %v1582 = vunpack.c.l.b16 %v514
        %v1583 = vunpack.c.h.b16 %v514
        %v1584 = vunpack.c.l.b16 %v515
        %v1585 = vunpack.c.h.b16 %v515
        %v1586 = vunpack.c.l.b16 %v516
        %v1587 = vunpack.c.h.b16 %v516
        %v1588 = vunpack.c.l.b16 %v517
        %v1589 = vunpack.c.h.b16 %v517
        %v1590 = vunpack.c.l.b16 %v518
        %v1591 = vunpack.c.h.b16 %v518
        %v1592 = vunpack.c.l.b16 %v519
        %v1593 = vunpack.c.h.b16 %v519
        %v1594 = vunpack.c.l.b16 %v520
        %v1595 = vunpack.c.h.b16 %v520
        %v1596 = vunpack.c.l.b16 %v521
        %v1597 = vunpack.c.h.b16 %v521
        %v1598 = vunpack.c.l.b16 %v522
        %v1599 = vunpack.c.h.b16 %v522
        %v1600 = vunpack.c.l.b16 %v523
        %v1601 = vunpack.c.h.b16 %v523
        %v1602 = vunpack.c.l.b16 %v524
        %v1603 = vunpack.c.h.b16 %v524
        %v1604 = vunpack.c.l.b16 %v525
        %v1605 = vunpack.c.h.b16 %v525
        %v1606 = vunpack.c.l.b16 %v526
        %v1607 = vunpack.c.h.b16 %v526
        %v1608 = vunpack.c.l.b16 %v527
        %v1609 = vunpack.c.h.b16 %v527
        %v1610 = vunpack.c.l.b16 %v528
        %v1611 = vunpack.c.h.b16 %v528
        %v1612 = vunpack.c.l.b16 %v529
        %v1613 = vunpack.c.h.b16 %v529
        %v1614 = vunpack.c.l.b16 %v530
        %v1615 = vunpack.c.h.b16 %v530
        %v1616 = vunpack.c.l.b16 %v531
        %v1617 = vunpack.c.h.b16 %v531
        %v1618 = vunpack.c.l.b16 %v532
        %v1619 = vunpack.c.h.b16 %v532
        %v1620 = vunpack.c.l.b16 %v533
        %v1621 = vunpack.c.h.b16 %v533
        %v1622 = vunpack.c.l.b16 %v534
        %v1623 = vunpack.c.h.b16 %v534
        %v1624 = vunpack.c.l.b16 %v535
        %v1625 = vunpack.c.h.b16 %v535
        %v1626 = vunpack.c.l.b16 %v536
        %v1627 = vunpack.c.h.b16 %v536
        %v1628 = vunpack.c.l.b16 %v537
        %v1629 = vunpack.c.h.b16 %v537
        %v1630 = vunpack.c.l.b16 %v538
        %v1631 = vunpack.c.h.b16 %v538
        %v1632 = vunpack.c.l.b16 %v539
        %v1633 = vunpack.c.h.b16 %v539
        %v1634 = vunpack.c.l.b16 %v540
        %v1635 = vunpack.c.h.b16 %v540
        %v1636 = vunpack.c.l.b16 %v541
        %v1637 = vunpack.c.h.b16 %v541
        %v1638 = vunpack.c.l.b16 %v542
        %v1639 = vunpack.c.h.b16 %v542
        %v1640 = vunpack.c.l.b16 %v543
        %v1641 = vunpack.c.h.b16 %v543
        %v1642 = vunpack.c.l.b16 %v544
        %v1643 = vunpack.c.h.b16 %v544
        %v1644 = vunpack.c.l.b16 %v545
        %v1645 = vunpack.c.h.b16 %v545
        %v1646 = vunpack.c.l.b16 %v546
        %v1647 = vunpack.c.h.b16 %v546
        %v1648 = vunpack.c.l.b16 %v547
        %v1649 = vunpack.c.h.b16 %v547
        %v1650 = vunpack.c.l.b16 %v548
        %v1651 = vunpack.c.h.b16 %v548
        %v1652 = vunpack.c.l.b16 %v549
        %v1653 = vunpack.c.h.b16 %v549
        %v1654 = vunpack.c.l.b16 %v550
        %v1655 = vunpack.c.h.b16 %v550
        %v1656 = vunpack.c.l.b16 %v551
        %v1657 = vunpack.c.h.b16 %v551
        %v1658 = vunpack.c.l.b16 %v552
        %v1659 = vunpack.c.h.b16 %v552
        %v1660 = vunpack.c.l.b16 %v553
        %v1661 = vunpack.c.h.b16 %v553
        %v1662 = vunpack.c.l.b16 %v554
        %v1663 = vunpack.c.h.b16 %v554
        %v1664 = vunpack.c.l.b16 %v555
        %v1665 = vunpack.c.h.b16 %v555
        %v1666 = vunpack.c.l.b16 %v556
        %v1667 = vunpack.c.h.b16 %v556
        %v1668 = vunpack.c.l.b16 %v557
        %v1669 = vunpack.c.h.b16 %v557
        %v1670 = vunpack.c.l.b16 %v558
        %v1671 = vunpack.c.h.b16 %v558
        %v1672 = vunpack.c.l.b16 %v559
        %v1673 = vunpack.c.h.b16 %v559
        %v1674 = vunpack.c.l.b16 %v560
        %v1675 = vunpack.c.h.b16 %v560
        %v1676 = vunpack.c.l.b16 %v561
        %v1677 = vunpack.c.h.b16 %v561
        %v1678 = vunpack.c.l.b16 %v562
        %v1679 = vunpack.c.h.b16 %v562
        %v1680 = vunpack.c.l.b16 %v563
        %v1681 = vunpack.c.h.b16 %v563
        %v1682 = vunpack.c.l.b16 %v564
        %v1683 = vunpack.c.h.b16 %v564
        %v1684 = vunpack.c.l.b16 %v565
        %v1685 = vunpack.c.h.b16 %v565
        %v1686 = vunpack.c.l.b16 %v566
        %v1687 = vunpack.c.h.b16 %v566
        %v1688 = vunpack.c.l.b16 %v567
        %v1689 = vunpack.c.h.b16 %v567
        %v1690 = vunpack.c.l.b16 %v568
        %v1691 = vunpack.c.h.b16 %v568
        %v1692 = vunpack.c.l.b16 %v569
        %v1693 = vunpack.c.h.b16 %v569
        %v1694 = vunpack.c.l.b16 %v570
        %v1695 = vunpack.c.h.b16 %v570
        %v1696 = vunpack.c.l.b16 %v571
        %v1697 = vunpack.c.h.b16 %v571
        %v1698 = vunpack.c.l.b16 %v572
        %v1699 = vunpack.c.h.b16 %v572
        %v1700 = vunpack.c.l.b16 %v573
        %v1701 = vunpack.c.h.b16 %v573
        %v1702 = vunpack.c.l.b16 %v574
        %v1703 = vunpack.c.h.b16 %v574
        %v1704 = vunpack.c.l.b16 %v575
        %v1705 = vunpack.c.h.b16 %v575
        %v1706 = vunpack.c.l.b16 %v576
        %v1707 = vunpack.c.h.b16 %v576
        %v1708 = vunpack.c.l.b16 %v577
        %v1709 = vunpack.c.h.b16 %v577
        %v1710 = vunpack.c.l.b16 %v578
        %v1711 = vunpack.c.h.b16 %v578
        %v1712 = vunpack.c.l.b16 %v579
        %v1713 = vunpack.c.h.b16 %v579
        %v1714 = vunpack.c.l.b16 %v580
        %v1715 = vunpack.c.h.b16 %v580
        %v1716 = vunpack.c.l.b16 %v581
        %v1717 = vunpack.c.h.b16 %v581
        %v1718 = vunpack.c.l.b16 %v582
        %v1719 = vunpack.c.h.b16 %v582
        %v1720 = vunpack.c.l.b16 %v583
        %v1721 = vunpack.c.h.b16 %v583
        %v1722 = vunpack.c.l.b16 %v584
        %v1723 = vunpack.c.h.b16 %v584
        %v1724 = vunpack.c.l.b16 %v585
        %v1725 = vunpack.c.h.b16 %v585
        %v1726 = vunpack.c.l.b16 %v586
        %v1727 = vunpack.c.h.b16 %v586
        %v1728 = vunpack.c.l.b16 %v587
        %v1729 = vunpack.c.h.b16 %v587
        %v1730 = vunpack.c.l.b16 %v588
        %v1731 = vunpack.c.h.b16 %v588
        %v1732 = vunpack.c.l.b16 %v589
        %v1733 = vunpack.c.h.b16 %v589
        %v1734 = vunpack.c.l.b16 %v590
        %v1735 = vunpack.c.h.b16 %v590
        %v1736 = vunpack.c.l.b16 %v591
        %v1737 = vunpack.c.h.b16 %v591
        %v1738 = vunpack.c.l.b16 %v592
        %v1739 = vunpack.c.h.b16 %v592
        %v1740 = vunpack.c.l.b16 %v593
        %v1741 = vunpack.c.h.b16 %v593
        %v1742 = vunpack.c.l.b16 %v594
        %v1743 = vunpack.c.h.b16 %v594
        %v1744 = vunpack.c.l.b16 %v595
        %v1745 = vunpack.c.h.b16 %v595
        %v1746 = vunpack.c.l.b16 %v596
        %v1747 = vunpack.c.h.b16 %v596
        %v1748 = vunpack.c.l.b16 %v597
        %v1749 = vunpack.c.h.b16 %v597
        %v1750 = vunpack.c.l.b16 %v598
        %v1751 = vunpack.c.h.b16 %v598
        %v1752 = vunpack.c.l.b16 %v599
        %v1753 = vunpack.c.h.b16 %v599
        %v1754 = vunpack.c.l.b16 %v600
        %v1755 = vunpack.c.h.b16 %v600
        %v1756 = vunpack.c.l.b16 %v601
        %v1757 = vunpack.c.h.b16 %v601
        %v1758 = vunpack.c.l.b16 %v602
        %v1759 = vunpack.c.h.b16 %v602
        %v1760 = vunpack.c.l.b16 %v603
        %v1761 = vunpack.c.h.b16 %v603
        %v1762 = vunpack.c.l.b16 %v604
        %v1763 = vunpack.c.h.b16 %v604
        %v1764 = vunpack.c.l.b16 %v605
        %v1765 = vunpack.c.h.b16 %v605
        %v1766 = vunpack.c.l.b16 %v606
        %v1767 = vunpack.c.h.b16 %v606
        %v1768 = vunpack.c.l.b16 %v607
        %v1769 = vunpack.c.h.b16 %v607
        %v1770 = vunpack.c.l.b16 %v608
        %v1771 = vunpack.c.h.b16 %v608
        %v1772 = vunpack.c.l.b16 %v609
        %v1773 = vunpack.c.h.b16 %v609
        %v1774 = vunpack.c.l.b16 %v610
        %v1775 = vunpack.c.h.b16 %v610
        %v1776 = vunpack.c.l.b16 %v611
        %v1777 = vunpack.c.h.b16 %v611
        %v1778 = vunpack.c.l.b16 %v612
        %v1779 = vunpack.c.h.b16 %v612
        %v1780 = vunpack.c.l.b16 %v613
        %v1781 = vunpack.c.h.b16 %v613
        %v1782 = vunpack.c.l.b16 %v614
        %v1783 = vunpack.c.h.b16 %v614
        %v1784 = vunpack.c.l.b16 %v615
        %v1785 = vunpack.c.h.b16 %v615
        %v1786 = vunpack.c.l.b16 %v616
        %v1787 = vunpack.c.h.b16 %v616
        %v1788 = vunpack.c.l.b16 %v617
        %v1789 = vunpack.c.h.b16 %v617
        %v1790 = vunpack.c.l.b16 %v618
        %v1791 = vunpack.c.h.b16 %v618
        %v1792 = vunpack.c.l.b16 %v619
        %v1793 = vunpack.c.h.b16 %v619
        %v1794 = vunpack.c.l.b16 %v620
        %v1795 = vunpack.c.h.b16 %v620
        %v1796 = vunpack.c.l.b16 %v621
        %v1797 = vunpack.c.h.b16 %v621
        %v1798 = vunpack.c.l.b16 %v622
        %v1799 = vunpack.c.h.b16 %v622
        %v1800 = vunpack.c.l.b16 %v623
        %v1801 = vunpack.c.h.b16 %v623
        %v1802 = vunpack.c.l.b16 %v624
        %v1803 = vunpack.c.h.b16 %v624
        %v1804 = vunpack.c.l.b16 %v625
        %v1805 = vunpack.c.h.b16 %v625
        %v1806 = vunpack.c.l.b16 %v626
        %v1807 = vunpack.c.h.b16 %v626
        %v1808 = vunpack.c.l.b16 %v627
        %v1809 = vunpack.c.h.b16 %v627
        %v1810 = vunpack.c.l.b16 %v628
        %v1811 = vunpack.c.h.b16 %v628
        %v1812 = vunpack.c.l.b16 %v629
        %v1813 = vunpack.c.h.b16 %v629
        %v1814 = vunpack.c.l.b16 %v630
        %v1815 = vunpack.c.h.b16 %v630
        %v1816 = vunpack.c.l.b16 %v631
        %v1817 = vunpack.c.h.b16 %v631
        %v1818 = vunpack.c.l.b16 %v632
        %v1819 = vunpack.c.h.b16 %v632
        %v1820 = vunpack.c.l.b16 %v633
        %v1821 = vunpack.c.h.b16 %v633
        %v1822 = vunpack.c.l.b16 %v634
        %v1823 = vunpack.c.h.b16 %v634
        %v1824 = vunpack.c.l.b16 %v635
        %v1825 = vunpack.c.h.b16 %v635
        %v1826 = vunpack.c.l.b16 %v636
        %v1827 = vunpack.c.h.b16 %v636
        %v1828 = vunpack.c.l.b16 %v637
        %v1829 = vunpack.c.h.b16 %v637
        %v1830 = vunpack.c.l.b16 %v638
        %v1831 = vunpack.c.h.b16 %v638
        %v1832 = vunpack.c.l.b16 %v639
        %v1833 = vunpack.c.h.b16 %v639
        %v1834 = vunpack.c.l.b16 %v640
        %v1835 = vunpack.c.h.b16 %v640
        %v1836 = vunpack.c.l.b16 %v641
        %v1837 = vunpack.c.h.b16 %v641
        %v1838 = vunpack.c.l.b16 %v642
        %v1839 = vunpack.c.h.b16 %v642
        %v1840 = vunpack.c.l.b16 %v643
        %v1841 = vunpack.c.h.b16 %v643
        %v1842 = vunpack.c.l.b16 %v644
        %v1843 = vunpack.c.h.b16 %v644
        %v1844 = vunpack.c.l.b16 %v645
        %v1845 = vunpack.c.h.b16 %v645
        %v1846 = vunpack.c.l.b16 %v646
        %v1847 = vunpack.c.h.b16 %v646
        %v1848 = vunpack.c.l.b16 %v647
        %v1849 = vunpack.c.h.b16 %v647
        %v1850 = vunpack.c.l.b16 %v648
        %v1851 = vunpack.c.h.b16 %v648
        %v1852 = vunpack.c.l.b16 %v649
        %v1853 = vunpack.c.h.b16 %v649
        %v1854 = vunpack.c.l.b16 %v650
        %v1855 = vunpack.c.h.b16 %v650
        %v1856 = vunpack.c.l.b16 %v651
        %v1857 = vunpack.c.h.b16 %v651
        %v1858 = vunpack.c.l.b16 %v652
        %v1859 = vunpack.c.h.b16 %v652
        %v1860 = vunpack.c.l.b16 %v653
        %v1861 = vunpack.c.h.b16 %v653
        %v1862 = vunpack.c.l.b16 %v654
        %v1863 = vunpack.c.h.b16 %v654
        %v1864 = vunpack.c.l.b16 %v655
        %v1865 = vunpack.c.h.b16 %v655
        %v1866 = vunpack.c.l.b16 %v656
        %v1867 = vunpack.c.h.b16 %v656
        %v1868 = vunpack.c.l.b16 %v657
        %v1869 = vunpack.c.h.b16 %v657
        %v1870 = vunpack.c.l.b16 %v658
        %v1871 = vunpack.c.h.b16 %v658
        %v1872 = vunpack.c.l.b16 %v659
        %v1873 = vunpack.c.h.b16 %v659
        %v1874 = vunpack.c.l.b16 %v660
        %v1875 = vunpack.c.h.b16 %v660
        %v1876 = vunpack.c.l.b16 %v661
        %v1877 = vunpack.c.h.b16 %v661
        %v1878 = vunpack.c.l.b16 %v662
        %v1879 = vunpack.c.h.b16 %v662
        %v1880 = vunpack.c.l.b16 %v663
        %v1881 = vunpack.c.h.b16 %v663
        %v1882 = vunpack.c.l.b16 %v664
        %v1883 = vunpack.c.h.b16 %v664
        %v1884 = vunpack.c.l.b16 %v665
        %v1885 = vunpack.c.h.b16 %v665
        %v1886 = vunpack.c.l.b16 %v666
        %v1887 = vunpack.c.h.b16 %v666
        %v1888 = vunpack.c.l.b16 %v667
        %v1889 = vunpack.c.h.b16 %v667
        %v1890 = vunpack.c.l.b16 %v668
        %v1891 = vunpack.c.h.b16 %v668
        %v1892 = vunpack.c.l.b16 %v669
        %v1893 = vunpack.c.h.b16 %v669
        %v1894 = vunpack.c.l.b16 %v670
        %v1895 = vunpack.c.h.b16 %v670
        %v1896 = vunpack.c.l.b16 %v671
        %v1897 = vunpack.c.h.b16 %v671
        %v1898 = vunpack.c.l.b16 %v672
        %v1899 = vunpack.c.h.b16 %v672
        %v1900 = vunpack.c.l.b16 %v673
        %v1901 = vunpack.c.h.b16 %v673
        %v1902 = vunpack.c.l.b16 %v674
        %v1903 = vunpack.c.h.b16 %v674
        %v1904 = vunpack.c.l.b16 %v675
        %v1905 = vunpack.c.h.b16 %v675
        %v1906 = vunpack.c.l.b16 %v676
        %v1907 = vunpack.c.h.b16 %v676
        %v1908 = vunpack.c.l.b16 %v677
        %v1909 = vunpack.c.h.b16 %v677
        %v1910 = vunpack.c.l.b16 %v678
        %v1911 = vunpack.c.h.b16 %v678
        %v1912 = vunpack.c.l.b16 %v679
        %v1913 = vunpack.c.h.b16 %v679
        %v1914 = vunpack.c.l.b16 %v680
        %v1915 = vunpack.c.h.b16 %v680
        %v1916 = vunpack.c.l.b16 %v681
        %v1917 = vunpack.c.h.b16 %v681
        %v1918 = vunpack.c.l.b16 %v682
        %v1919 = vunpack.c.h.b16 %v682
        %v1920 = vunpack.c.l.b16 %v683
        %v1921 = vunpack.c.h.b16 %v683
        %v1922 = vunpack.c.l.b16 %v684
        %v1923 = vunpack.c.h.b16 %v684
        %v1924 = vunpack.c.l.b16 %v685
        %v1925 = vunpack.c.h.b16 %v685
        %v1926 = vunpack.c.l.b16 %v686
        %v1927 = vunpack.c.h.b16 %v686
        %v1928 = vunpack.c.l.b16 %v687
        %v1929 = vunpack.c.h.b16 %v687
        %v1930 = vunpack.c.l.b16 %v688
        %v1931 = vunpack.c.h.b16 %v688
        %v1932 = vunpack.c.l.b16 %v689
        %v1933 = vunpack.c.h.b16 %v689
        %v1934 = vunpack.c.l.b16 %v690
        %v1935 = vunpack.c.h.b16 %v690
        %v1936 = vunpack.c.l.b16 %v691
        %v1937 = vunpack.c.h.b16 %v691
        %v1938 = vunpack.c.l.b16 %v692
        %v1939 = vunpack.c.h.b16 %v692
        %v1940 = vunpack.c.l.b16 %v693
        %v1941 = vunpack.c.h.b16 %v693
        %v1942 = vunpack.c.l.b16 %v694
        %v1943 = vunpack.c.h.b16 %v694
        %v1944 = vunpack.c.l.b16 %v695
        %v1945 = vunpack.c.h.b16 %v695
        %v1946 = vunpack.c.l.b16 %v696
        %v1947 = vunpack.c.h.b16 %v696
        %v1948 = vunpack.c.l.b16 %v697
        %v1949 = vunpack.c.h.b16 %v697
        %v1950 = vunpack.c.l.b16 %v698
        %v1951 = vunpack.c.h.b16 %v698
        %v1952 = vunpack.c.l.b16 %v699
        %v1953 = vunpack.c.h.b16 %v699
        %v1954 = vunpack.c.l.b16 %v700
        %v1955 = vunpack.c.h.b16 %v700
        %v1956 = vunpack.c.l.b16 %v701
        %v1957 = vunpack.c.h.b16 %v701
        %v1958 = vunpack.c.l.b16 %v702
        %v1959 = vunpack.c.h.b16 %v702
        %v1960 = vunpack.c.l.b16 %v703
        %v1961 = vunpack.c.h.b16 %v703
        %v1962 = vunpack.c.l.b16 %v704
        %v1963 = vunpack.c.h.b16 %v704
        %v1964 = vunpack.c.l.b16 %v705
        %v1965 = vunpack.c.h.b16 %v705
        %v1966 = vunpack.c.l.b16 %v706
        %v1967 = vunpack.c.h.b16 %v706
        %v1968 = vunpack.c.l.b16 %v707
        %v1969 = vunpack.c.h.b16 %v707
        %v1970 = vunpack.c.l.b16 %v708
        %v1971 = vunpack.c.h.b16 %v708
        %v1972 = vunpack.c.l.b16 %v709
        %v1973 = vunpack.c.h.b16 %v709
        %v1974 = vunpack.c.l.b16 %v710
        %v1975 = vunpack.c.h.b16 %v710
        %v1976 = vunpack.c.l.b16 %v711
        %v1977 = vunpack.c.h.b16 %v711
        %v1978 = vunpack.c.l.b16 %v712
        %v1979 = vunpack.c.h.b16 %v712
        %v1980 = vunpack.c.l.b16 %v713
        %v1981 = vunpack.c.h.b16 %v713
        %v1982 = vunpack.c.l.b16 %v714
        %v1983 = vunpack.c.h.b16 %v714
        %v1984 = vunpack.c.l.b16 %v715
        %v1985 = vunpack.c.h.b16 %v715
        %v1986 = vunpack.c.l.b16 %v716
        %v1987 = vunpack.c.h.b16 %v716
        %v1988 = vunpack.c.l.b16 %v717
        %v1989 = vunpack.c.h.b16 %v717
        %v1990 = vunpack.c.l.b16 %v718
        %v1991 = vunpack.c.h.b16 %v718
        %v1992 = vunpack.c.l.b16 %v719
        %v1993 = vunpack.c.h.b16 %v719
        %v1994 = vunpack.c.l.b16 %v720
        %v1995 = vunpack.c.h.b16 %v720
        %v1996 = vunpack.c.l.b16 %v721
        %v1997 = vunpack.c.h.b16 %v721
        %v1998 = vunpack.c.l.b16 %v722
        %v1999 = vunpack.c.h.b16 %v722
        %v2000 = vunpack.c.l.b16 %v723
        %v2001 = vunpack.c.h.b16 %v723
        %v2002 = vunpack.c.l.b16 %v724
        %v2003 = vunpack.c.h.b16 %v724
        %v2004 = vunpack.c.l.b16 %v725
        %v2005 = vunpack.c.h.b16 %v725
        %v2006 = vunpack.c.l.b16 %v726
        %v2007 = vunpack.c.h.b16 %v726
        %v2008 = vunpack.c.l.b16 %v727
        %v2009 = vunpack.c.h.b16 %v727
        %v2010 = vunpack.c.l.b16 %v728
        %v2011 = vunpack.c.h.b16 %v728
        %v2012 = vunpack.c.l.b16 %v729
        %v2013 = vunpack.c.h.b16 %v729
        %v2014 = vunpack.c.l.b16 %v730
        %v2015 = vunpack.c.h.b16 %v730
        %v2016 = vunpack.c.l.b16 %v731
        %v2017 = vunpack.c.h.b16 %v731
        %v2018 = vunpack.c.l.b16 %v732
        %v2019 = vunpack.c.h.b16 %v732
        %v2020 = vunpack.c.l.b16 %v733
        %v2021 = vunpack.c.h.b16 %v733
        %v2022 = vunpack.c.l.b16 %v734
        %v2023 = vunpack.c.h.b16 %v734
        %v2024 = vunpack.c.l.b16 %v735
        %v2025 = vunpack.c.h.b16 %v735
        %v2026 = vunpack.c.l.b16 %v736
        %v2027 = vunpack.c.h.b16 %v736
        %v2028 = vunpack.c.l.b16 %v737
        %v2029 = vunpack.c.h.b16 %v737
        %v2030 = vunpack.c.l.b16 %v738
        %v2031 = vunpack.c.h.b16 %v738
        %v2032 = vunpack.c.l.b16 %v739
        %v2033 = vunpack.c.h.b16 %v739
        %v2034 = vunpack.c.l.b16 %v740
        %v2035 = vunpack.c.h.b16 %v740
        %v2036 = vunpack.c.l.b16 %v741
        %v2037 = vunpack.c.h.b16 %v741
        %v2038 = vunpack.c.l.b16 %v742
        %v2039 = vunpack.c.h.b16 %v742
        %v2040 = vunpack.c.l.b16 %v743
        %v2041 = vunpack.c.h.b16 %v743
        %v2042 = vunpack.c.l.b16 %v744
        %v2043 = vunpack.c.h.b16 %v744
        %v2044 = vunpack.c.l.b16 %v745
        %v2045 = vunpack.c.h.b16 %v745
        %v2046 = vunpack.c.l.b16 %v746
        %v2047 = vunpack.c.h.b16 %v746
        %v2048 = vunpack.c.l.b16 %v747
        %v2049 = vunpack.c.h.b16 %v747
        %v2050 = vunpack.c.l.b16 %v748
        %v2051 = vunpack.c.h.b16 %v748
        %v2052 = vunpack.c.l.b16 %v749
        %v2053 = vunpack.c.h.b16 %v749
        %v2054 = vunpack.c.l.b16 %v750
        %v2055 = vunpack.c.h.b16 %v750
        %v2056 = vunpack.c.l.b16 %v751
        %v2057 = vunpack.c.h.b16 %v751
        %v2058 = vunpack.c.l.b16 %v752
        %v2059 = vunpack.c.h.b16 %v752
        %v2060 = vunpack.c.l.b16 %v753
        %v2061 = vunpack.c.h.b16 %v753
        %v2062 = vunpack.c.l.b16 %v754
        %v2063 = vunpack.c.h.b16 %v754
        %v2064 = vunpack.c.l.b16 %v755
        %v2065 = vunpack.c.h.b16 %v755
        %v2066 = vunpack.c.l.b16 %v756
        %v2067 = vunpack.c.h.b16 %v756
        %v2068 = vunpack.c.l.b16 %v757
        %v2069 = vunpack.c.h.b16 %v757
        %v2070 = vunpack.c.l.b16 %v758
        %v2071 = vunpack.c.h.b16 %v758
        %v2072 = vunpack.c.l.b16 %v759
        %v2073 = vunpack.c.h.b16 %v759
        %v2074 = vunpack.c.l.b16 %v760
        %v2075 = vunpack.c.h.b16 %v760
        %v2076 = vunpack.c.l.b16 %v761
        %v2077 = vunpack.c.h.b16 %v761
        %v2078 = vunpack.c.l.b16 %v762
        %v2079 = vunpack.c.h.b16 %v762
        %v2080 = vunpack.c.l.b16 %v763
        %v2081 = vunpack.c.h.b16 %v763
        %v2082 = vunpack.c.l.b16 %v764
        %v2083 = vunpack.c.h.b16 %v764
        %v2084 = vunpack.c.l.b16 %v765
        %v2085 = vunpack.c.h.b16 %v765
        %v2086 = vunpack.c.l.b16 %v766
        %v2087 = vunpack.c.h.b16 %v766
        %v2088 = vunpack.c.l.b16 %v767
        %v2089 = vunpack.c.h.b16 %v767
        %v2090 = vunpack.c.l.b16 %v768
        %v2091 = vunpack.c.h.b16 %v768
        %v2092 = vunpack.c.l.b16 %v769
        %v2093 = vunpack.c.h.b16 %v769
        %v2094 = vunpack.c.l.b16 %v770
        %v2095 = vunpack.c.h.b16 %v770
        %v2096 = vunpack.c.l.b16 %v771
        %v2097 = vunpack.c.h.b16 %v771
        %v2098 = vunpack.c.l.b16 %v772
        %v2099 = vunpack.c.h.b16 %v772
        %v2100 = vunpack.c.l.b16 %v773
        %v2101 = vunpack.c.h.b16 %v773
        %v2102 = vunpack.c.l.b16 %v774
        %v2103 = vunpack.c.h.b16 %v774
        %v2104 = vunpack.c.l.b16 %v775
        %v2105 = vunpack.c.h.b16 %v775
        %v2106 = vunpack.c.l.b16 %v776
        %v2107 = vunpack.c.h.b16 %v776
        %v2108 = vunpack.c.l.b16 %v777
        %v2109 = vunpack.c.h.b16 %v777
        %v2110 = vunpack.c.l.b16 %v778
        %v2111 = vunpack.c.h.b16 %v778
        %v2112 = vunpack.c.l.b16 %v779
        %v2113 = vunpack.c.h.b16 %v779
        %v2114 = vunpack.c.l.b16 %v780
        %v2115 = vunpack.c.h.b16 %v780
        %v2116 = vunpack.c.l.b16 %v781
        %v2117 = vunpack.c.h.b16 %v781
        %v2118 = vunpack.c.l.b16 %v782
        %v2119 = vunpack.c.h.b16 %v782
        %v2120 = vunpack.c.l.b16 %v783
        %v2121 = vunpack.c.h.b16 %v783
        %v2122 = vunpack.c.l.b16 %v784
        %v2123 = vunpack.c.h.b16 %v784
        %v2124 = vunpack.c.l.b16 %v785
        %v2125 = vunpack.c.h.b16 %v785
        %v2126 = vunpack.c.l.b16 %v786
        %v2127 = vunpack.c.h.b16 %v786
        %v2128 = vunpack.c.l.b16 %v787
        %v2129 = vunpack.c.h.b16 %v787
        %v2130 = vunpack.c.l.b16 %v788
        %v2131 = vunpack.c.h.b16 %v788
        %v2132 = vunpack.c.l.b16 %v789
        %v2133 = vunpack.c.h.b16 %v789
        %v2134 = vunpack.c.l.b16 %v790
        %v2135 = vunpack.c.h.b16 %v790
        %v2136 = vunpack.c.l.b16 %v791
        %v2137 = vunpack.c.h.b16 %v791
        %v2138 = vunpack.c.l.b16 %v792
        %v2139 = vunpack.c.h.b16 %v792
        %v2140 = vunpack.c.l.b16 %v793
        %v2141 = vunpack.c.h.b16 %v793
        %v2142 = vunpack.c.l.b16 %v794
        %v2143 = vunpack.c.h.b16 %v794
        %v2144 = vunpack.c.l.b16 %v795
        %v2145 = vunpack.c.h.b16 %v795
        %v2146 = vunpack.c.l.b16 %v796
        %v2147 = vunpack.c.h.b16 %v796
        %v2148 = vunpack.c.l.b16 %v797
        %v2149 = vunpack.c.h.b16 %v797
        %v2150 = vunpack.c.l.b16 %v798
        %v2151 = vunpack.c.h.b16 %v798
        %v2152 = vunpack.c.l.b16 %v799
        %v2153 = vunpack.c.h.b16 %v799
        %v2154 = vunpack.c.l.b16 %v800
        %v2155 = vunpack.c.h.b16 %v800
        %v2156 = vunpack.c.l.b16 %v801
        %v2157 = vunpack.c.h.b16 %v801
        %v2158 = vunpack.c.l.b16 %v802
        %v2159 = vunpack.c.h.b16 %v802
        %v2160 = vunpack.c.l.b16 %v803
        %v2161 = vunpack.c.h.b16 %v803
        %v2162 = vunpack.c.l.b16 %v804
        %v2163 = vunpack.c.h.b16 %v804
        %v2164 = vunpack.c.l.b16 %v805
        %v2165 = vunpack.c.h.b16 %v805
        %v2166 = vunpack.c.l.b16 %v806
        %v2167 = vunpack.c.h.b16 %v806
        %v2168 = vunpack.c.l.b16 %v807
        %v2169 = vunpack.c.h.b16 %v807
        %v2170 = vunpack.c.l.b16 %v808
        %v2171 = vunpack.c.h.b16 %v808
        %v2172 = vunpack.c.l.b16 %v809
        %v2173 = vunpack.c.h.b16 %v809
        %v2174 = vunpack.c.l.b16 %v810
        %v2175 = vunpack.c.h.b16 %v810
        %v2176 = vunpack.c.l.b16 %v811
        %v2177 = vunpack.c.h.b16 %v811
        %v2178 = vunpack.c.l.b16 %v812
        %v2179 = vunpack.c.h.b16 %v812
        %v2180 = vunpack.c.l.b16 %v813
        %v2181 = vunpack.c.h.b16 %v813
        %v2182 = vunpack.c.l.b16 %v814
        %v2183 = vunpack.c.h.b16 %v814
        %v2184 = vunpack.c.l.b16 %v815
        %v2185 = vunpack.c.h.b16 %v815
        %v2186 = vunpack.c.l.b16 %v816
        %v2187 = vunpack.c.h.b16 %v816
        %v2188 = vunpack.c.l.b16 %v817
        %v2189 = vunpack.c.h.b16 %v817
        %v2190 = vunpack.c.l.b16 %v818
        %v2191 = vunpack.c.h.b16 %v818
        %v2192 = vunpack.c.l.b16 %v819
        %v2193 = vunpack.c.h.b16 %v819
        %v2194 = vunpack.c.l.b16 %v820
        %v2195 = vunpack.c.h.b16 %v820
        %v2196 = vunpack.c.l.b16 %v821
        %v2197 = vunpack.c.h.b16 %v821
        %v2198 = vunpack.c.l.b16 %v822
        %v2199 = vunpack.c.h.b16 %v822
        %v2200 = vunpack.c.l.b16 %v823
        %v2201 = vunpack.c.h.b16 %v823
        %v2202 = vunpack.c.l.b16 %v824
        %v2203 = vunpack.c.h.b16 %v824
        %v2204 = vunpack.c.l.b16 %v825
        %v2205 = vunpack.c.h.b16 %v825
        %v2206 = vunpack.c.l.b16 %v826
        %v2207 = vunpack.c.h.b16 %v826
        %v2208 = vunpack.c.l.b16 %v827
        %v2209 = vunpack.c.h.b16 %v827
        %v2210 = vunpack.c.l.b16 %v828
        %v2211 = vunpack.c.h.b16 %v828
        %v2212 = vunpack.c.l.b16 %v829
        %v2213 = vunpack.c.h.b16 %v829
        %v2214 = vunpack.c.l.b16 %v830
        %v2215 = vunpack.c.h.b16 %v830
        %v2216 = vunpack.c.l.b16 %v831
        %v2217 = vunpack.c.h.b16 %v831
        %v2218 = vunpack.c.l.b16 %v832
        %v2219 = vunpack.c.h.b16 %v832
        %v2220 = vunpack.c.l.b16 %v833
        %v2221 = vunpack.c.h.b16 %v833
        %v2222 = vunpack.c.l.b16 %v834
        %v2223 = vunpack.c.h.b16 %v834
        %v2224 = vunpack.c.l.b16 %v835
        %v2225 = vunpack.c.h.b16 %v835
        %v2226 = vunpack.c.l.b16 %v836
        %v2227 = vunpack.c.h.b16 %v836
        %v2228 = vunpack.c.l.b16 %v837
        %v2229 = vunpack.c.h.b16 %v837
        %v2230 = vunpack.c.l.b16 %v838
        %v2231 = vunpack.c.h.b16 %v838
        %v2232 = vunpack.c.l.b16 %v839
        %v2233 = vunpack.c.h.b16 %v839
        %v2234 = vunpack.c.l.b16 %v840
        %v2235 = vunpack.c.h.b16 %v840
        %v2236 = vunpack.c.l.b16 %v841
        %v2237 = vunpack.c.h.b16 %v841
        %v2238 = vunpack.c.l.b16 %v842
        %v2239 = vunpack.c.h.b16 %v842
        %v2240 = vunpack.c.l.b16 %v843
        %v2241 = vunpack.c.h.b16 %v843
        %v2242 = vunpack.c.l.b16 %v844
        %v2243 = vunpack.c.h.b16 %v844
        %v2244 = vunpack.c.l.b16 %v845
        %v2245 = vunpack.c.h.b16 %v845
        %v2246 = vunpack.c.l.b16 %v846
        %v2247 = vunpack.c.h.b16 %v846
        %v2248 = vunpack.c.l.b16 %v847
        %v2249 = vunpack.c.h.b16 %v847
        %v2250 = vunpack.c.l.b16 %v848
        %v2251 = vunpack.c.h.b16 %v848
        %v2252 = vunpack.c.l.b16 %v849
        %v2253 = vunpack.c.h.b16 %v849
        %v2254 = vunpack.c.l.b16 %v850
        %v2255 = vunpack.c.h.b16 %v850
        %v2256 = vunpack.c.l.b16 %v851
        %v2257 = vunpack.c.h.b16 %v851
        %v2258 = vunpack.c.l.b16 %v852
        %v2259 = vunpack.c.h.b16 %v852
        %v2260 = vunpack.c.l.b16 %v853
        %v2261 = vunpack.c.h.b16 %v853
        %v2262 = vunpack.c.l.b16 %v854
        %v2263 = vunpack.c.h.b16 %v854
        %v2264 = vunpack.c.l.b16 %v855
        %v2265 = vunpack.c.h.b16 %v855
        %v2266 = vunpack.c.l.b16 %v856
        %v2267 = vunpack.c.h.b16 %v856
        %v2268 = vunpack.c.l.b16 %v857
        %v2269 = vunpack.c.h.b16 %v857
        %v2270 = vunpack.c.l.b16 %v858
        %v2271 = vunpack.c.h.b16 %v858
        %v2272 = vunpack.c.l.b16 %v859
        %v2273 = vunpack.c.h.b16 %v859
        %v2274 = vunpack.c.l.b16 %v860
        %v2275 = vunpack.c.h.b16 %v860
        %v2276 = vunpack.c.l.b16 %v861
        %v2277 = vunpack.c.h.b16 %v861
        %v2278 = vunpack.c.l.b16 %v862
        %v2279 = vunpack.c.h.b16 %v862
        %v2280 = vunpack.c.l.b16 %v863
        %v2281 = vunpack.c.h.b16 %v863
        %v2282 = vunpack.c.l.b16 %v864
        %v2283 = vunpack.c.h.b16 %v864
        %v2284 = vunpack.c.l.b16 %v865
        %v2285 = vunpack.c.h.b16 %v865
        %v2286 = vunpack.c.l.b16 %v866
        %v2287 = vunpack.c.h.b16 %v866
        %v2288 = vunpack.c.l.b16 %v867
        %v2289 = vunpack.c.h.b16 %v867
        %v2290 = vunpack.c.l.b16 %v868
        %v2291 = vunpack.c.h.b16 %v868
        %v2292 = vunpack.c.l.b16 %v869
        %v2293 = vunpack.c.h.b16 %v869
        %v2294 = vunpack.c.l.b16 %v870
        %v2295 = vunpack.c.h.b16 %v870
        %v2296 = vunpack.c.l.b16 %v871
        %v2297 = vunpack.c.h.b16 %v871
        %v2298 = vunpack.c.l.b16 %v872
        %v2299 = vunpack.c.h.b16 %v872
        %v2300 = vunpack.c.l.b16 %v873
        %v2301 = vunpack.c.h.b16 %v873
        %v2302 = vunpack.c.l.b16 %v874
        %v2303 = vunpack.c.h.b16 %v874
        %v2304 = vunpack.c.l.b16 %v875
        %v2305 = vunpack.c.h.b16 %v875
        %v2306 = vunpack.c.l.b16 %v876
        %v2307 = vunpack.c.h.b16 %v876
        %v2308 = vunpack.c.l.b16 %v877
        %v2309 = vunpack.c.h.b16 %v877
        %v2310 = vunpack.c.l.b16 %v878
        %v2311 = vunpack.c.h.b16 %v878
        %v2312 = vunpack.c.l.b16 %v879
        %v2313 = vunpack.c.h.b16 %v879
        %v2314 = vunpack.c.l.b16 %v880
        %v2315 = vunpack.c.h.b16 %v880
        %v2316 = vunpack.c.l.b16 %v881
        %v2317 = vunpack.c.h.b16 %v881
        %v2318 = vunpack.c.l.b16 %v882
        %v2319 = vunpack.c.h.b16 %v882
        %v2320 = vunpack.c.l.b16 %v883
        %v2321 = vunpack.c.h.b16 %v883
        %v2322 = vunpack.c.l.b16 %v884
        %v2323 = vunpack.c.h.b16 %v884
        %v2324 = vunpack.c.l.b16 %v885
        %v2325 = vunpack.c.h.b16 %v885
        %v2326 = vunpack.c.l.b16 %v886
        %v2327 = vunpack.c.h.b16 %v886
        %v2328 = vunpack.c.l.b16 %v887
        %v2329 = vunpack.c.h.b16 %v887
        %v2330 = vunpack.c.l.b16 %v888
        %v2331 = vunpack.c.h.b16 %v888
        %v2332 = vunpack.c.l.b16 %v889
        %v2333 = vunpack.c.h.b16 %v889
        %v2334 = vunpack.c.l.b16 %v890
        %v2335 = vunpack.c.h.b16 %v890
        %v2336 = vunpack.c.l.b16 %v891
        %v2337 = vunpack.c.h.b16 %v891
        %v2338 = vunpack.c.l.b16 %v892
        %v2339 = vunpack.c.h.b16 %v892
        %v2340 = vunpack.c.l.b16 %v893
        %v2341 = vunpack.c.h.b16 %v893
        %v2342 = vunpack.c.l.b16 %v894
        %v2343 = vunpack.c.h.b16 %v894
        %v2344 = vunpack.c.l.b16 %v895
        %v2345 = vunpack.c.h.b16 %v895
        %v2346 = vunpack.c.l.b16 %v896
        %v2347 = vunpack.c.h.b16 %v896
        %v2348 = vunpack.c.l.b16 %v897
        %v2349 = vunpack.c.h.b16 %v897
        %v2350 = vunpack.c.l.b16 %v898
        %v2351 = vunpack.c.h.b16 %v898
        %v2352 = vunpack.c.l.b16 %v899
        %v2353 = vunpack.c.h.b16 %v899
        %v2354 = vunpack.c.l.b16 %v900
        %v2355 = vunpack.c.h.b16 %v900
        %v2356 = vunpack.c.l.b16 %v901
        %v2357 = vunpack.c.h.b16 %v901
        %v2358 = vunpack.c.l.b16 %v902
        %v2359 = vunpack.c.h.b16 %v902
        %v2360 = vunpack.c.l.b16 %v903
        %v2361 = vunpack.c.h.b16 %v903
        %v2362 = vunpack.c.l.b16 %v904
        %v2363 = vunpack.c.h.b16 %v904
        %v2364 = vunpack.c.l.b16 %v905
        %v2365 = vunpack.c.h.b16 %v905
        %v2366 = vunpack.c.l.b16 %v906
        %v2367 = vunpack.c.h.b16 %v906
        %v2368 = vunpack.c.l.b16 %v907
        %v2369 = vunpack.c.h.b16 %v907
        %v2370 = vunpack.c.l.b16 %v908
        %v2371 = vunpack.c.h.b16 %v908
        %v2372 = vunpack.c.l.b16 %v909
        %v2373 = vunpack.c.h.b16 %v909
        %v2374 = vunpack.c.l.b16 %v910
        %v2375 = vunpack.c.h.b16 %v910
        %v2376 = vunpack.c.l.b16 %v911
        %v2377 = vunpack.c.h.b16 %v911
        %v2378 = vunpack.c.l.b16 %v912
        %v2379 = vunpack.c.h.b16 %v912
        %v2380 = vunpack.c.l.b16 %v913
        %v2381 = vunpack.c.h.b16 %v913
        %v2382 = vunpack.c.l.b16 %v914
        %v2383 = vunpack.c.h.b16 %v914
        %v2384 = vunpack.c.l.b16 %v915
        %v2385 = vunpack.c.h.b16 %v915
        %v2386 = vunpack.c.l.b16 %v916
        %v2387 = vunpack.c.h.b16 %v916
        %v2388 = vunpack.c.l.b16 %v917
        %v2389 = vunpack.c.h.b16 %v917
        %v2390 = vunpack.c.l.b16 %v918
        %v2391 = vunpack.c.h.b16 %v918
        %v2392 = vunpack.c.l.b16 %v919
        %v2393 = vunpack.c.h.b16 %v919
        %v2394 = vunpack.c.l.b16 %v920
        %v2395 = vunpack.c.h.b16 %v920
        %v2396 = vunpack.c.l.b16 %v921
        %v2397 = vunpack.c.h.b16 %v921
        %v2398 = vunpack.c.l.b16 %v922
        %v2399 = vunpack.c.h.b16 %v922
        %v2400 = vunpack.c.l.b16 %v923
        %v2401 = vunpack.c.h.b16 %v923
        %v2402 = vunpack.c.l.b16 %v924
        %v2403 = vunpack.c.h.b16 %v924
        %v2404 = vunpack.c.l.b16 %v925
        %v2405 = vunpack.c.h.b16 %v925
        %v2406 = vunpack.c.l.b16 %v926
        %v2407 = vunpack.c.h.b16 %v926
        %v2408 = vunpack.c.l.b16 %v927
        %v2409 = vunpack.c.h.b16 %v927
        %v2410 = vunpack.c.l.b16 %v928
        %v2411 = vunpack.c.h.b16 %v928
        %v2412 = vunpack.c.l.b16 %v929
        %v2413 = vunpack.c.h.b16 %v929
        %v2414 = vunpack.c.l.b16 %v930
        %v2415 = vunpack.c.h.b16 %v930
        %v2416 = vunpack.c.l.b16 %v931
        %v2417 = vunpack.c.h.b16 %v931
        %v2418 = vunpack.c.l.b16 %v932
        %v2419 = vunpack.c.h.b16 %v932
        %v2420 = vunpack.c.l.b16 %v933
        %v2421 = vunpack.c.h.b16 %v933
        %v2422 = vunpack.c.l.b16 %v934
        %v2423 = vunpack.c.h.b16 %v934
        %v2424 = vunpack.c.l.b16 %v935
        %v2425 = vunpack.c.h.b16 %v935
        %v2426 = vunpack.c.l.b16 %v936
        %v2427 = vunpack.c.h.b16 %v936
        %v2428 = vunpack.c.l.b16 %v937
        %v2429 = vunpack.c.h.b16 %v937
        %v2430 = vunpack.c.l.b16 %v938
        %v2431 = vunpack.c.h.b16 %v938
        %v2432 = vunpack.c.l.b16 %v939
        %v2433 = vunpack.c.h.b16 %v939
        %v2434 = vunpack.c.l.b16 %v940
        %v2435 = vunpack.c.h.b16 %v940
        %v2436 = vunpack.c.l.b16 %v941
        %v2437 = vunpack.c.h.b16 %v941
        %v2438 = vunpack.c.l.b16 %v942
        %v2439 = vunpack.c.h.b16 %v942
        %v2440 = vunpack.c.l.b16 %v943
        %v2441 = vunpack.c.h.b16 %v943
        %v2442 = vunpack.c.l.b16 %v944
        %v2443 = vunpack.c.h.b16 %v944
        %v2444 = vunpack.c.l.b16 %v945
        %v2445 = vunpack.c.h.b16 %v945
        %v2446 = vunpack.c.l.b16 %v946
        %v2447 = vunpack.c.h.b16 %v946
        %v2448 = vunpack.c.l.b16 %v947
        %v2449 = vunpack.c.h.b16 %v947
        %v2450 = vunpack.c.l.b16 %v948
        %v2451 = vunpack.c.h.b16 %v948
        %v2452 = vunpack.c.l.b16 %v949
        %v2453 = vunpack.c.h.b16 %v949
        %v2454 = vunpack.c.l.b16 %v950
        %v2455 = vunpack.c.h.b16 %v950
        %v2456 = vunpack.c.l.b16 %v951
        %v2457 = vunpack.c.h.b16 %v951
        %v2458 = vunpack.c.l.b16 %v952
        %v2459 = vunpack.c.h.b16 %v952
        %v2460 = vunpack.c.l.b16 %v953
        %v2461 = vunpack.c.h.b16 %v953
        %v2462 = vunpack.c.l.b16 %v954
        %v2463 = vunpack.c.h.b16 %v954
        %v2464 = vunpack.c.l.b16 %v955
        %v2465 = vunpack.c.h.b16 %v955
        %v2466 = vunpack.c.l.b16 %v956
        %v2467 = vunpack.c.h.b16 %v956
        %v2468 = vunpack.c.l.b16 %v957
        %v2469 = vunpack.c.h.b16 %v957
        %v2470 = vunpack.c.l.b16 %v958
        %v2471 = vunpack.c.h.b16 %v958
        %v2472 = vunpack.c.l.b16 %v959
        %v2473 = vunpack.c.h.b16 %v959
        %v2474 = vunpack.c.l.b16 %v960
        %v2475 = vunpack.c.h.b16 %v960
        %v2476 = vunpack.c.l.b16 %v961
        %v2477 = vunpack.c.h.b16 %v961
        %v2478 = vunpack.c.l.b16 %v962
        %v2479 = vunpack.c.h.b16 %v962
        %v2480 = vunpack.c.l.b16 %v963
        %v2481 = vunpack.c.h.b16 %v963
        %v2482 = vunpack.c.l.b16 %v964
        %v2483 = vunpack.c.h.b16 %v964
        %v2484 = vunpack.c.l.b16 %v965
        %v2485 = vunpack.c.h.b16 %v965
        %v2486 = vunpack.c.l.b16 %v966
        %v2487 = vunpack.c.h.b16 %v966
        %v2488 = vunpack.c.l.b16 %v967
        %v2489 = vunpack.c.h.b16 %v967
        %v2490 = vunpack.c.l.b16 %v968
        %v2491 = vunpack.c.h.b16 %v968
        %v2492 = vunpack.c.l.b16 %v969
        %v2493 = vunpack.c.h.b16 %v969
        %v2494 = vunpack.c.l.b16 %v970
        %v2495 = vunpack.c.h.b16 %v970
        %v2496 = vunpack.c.l.b16 %v971
        %v2497 = vunpack.c.h.b16 %v971
        %v2498 = vunpack.c.l.b16 %v972
        %v2499 = vunpack.c.h.b16 %v972
        %v2500 = vunpack.c.l.b16 %v973
        %v2501 = vunpack.c.h.b16 %v973
        %v2502 = vunpack.c.l.b16 %v974
        %v2503 = vunpack.c.h.b16 %v974
        %v2504 = vunpack.c.l.b16 %v975
        %v2505 = vunpack.c.h.b16 %v975
        %v2506 = vunpack.c.l.b16 %v976
        %v2507 = vunpack.c.h.b16 %v976
        %v2508 = vunpack.c.l.b16 %v977
        %v2509 = vunpack.c.h.b16 %v977
        %v2510 = vunpack.c.l.b16 %v978
        %v2511 = vunpack.c.h.b16 %v978
        %v2512 = vunpack.c.l.b16 %v979
        %v2513 = vunpack.c.h.b16 %v979
        %v2514 = vunpack.c.l.b16 %v980
        %v2515 = vunpack.c.h.b16 %v980
        %v2516 = vunpack.c.l.b16 %v981
        %v2517 = vunpack.c.h.b16 %v981
        %v2518 = vunpack.c.l.b16 %v982
        %v2519 = vunpack.c.h.b16 %v982
        %v2520 = vunpack.c.l.b16 %v983
        %v2521 = vunpack.c.h.b16 %v983
        %v2522 = vunpack.c.l.b16 %v984
        %v2523 = vunpack.c.h.b16 %v984
        %v2524 = vunpack.c.l.b16 %v985
        %v2525 = vunpack.c.h.b16 %v985
        %v2526 = vunpack.c.l.b16 %v986
        %v2527 = vunpack.c.h.b16 %v986
        %v2528 = vunpack.c.l.b16 %v987
        %v2529 = vunpack.c.h.b16 %v987
        %v2530 = vunpack.c.l.b16 %v988
        %v2531 = vunpack.c.h.b16 %v988
        %v2532 = vunpack.c.l.b16 %v989
        %v2533 = vunpack.c.h.b16 %v989
        %v2534 = vunpack.c.l.b16 %v990
        %v2535 = vunpack.c.h.b16 %v990
        %v2536 = vunpack.c.l.b16 %v991
        %v2537 = vunpack.c.h.b16 %v991
        %v2538 = vunpack.c.l.b16 %v992
        %v2539 = vunpack.c.h.b16 %v992
        %v2540 = vunpack.c.l.b16 %v993
        %v2541 = vunpack.c.h.b16 %v993
        %v2542 = vunpack.c.l.b16 %v994
        %v2543 = vunpack.c.h.b16 %v994
        %v2544 = vunpack.c.l.b16 %v995
        %v2545 = vunpack.c.h.b16 %v995
        %v2546 = vunpack.c.l.b16 %v996
        %v2547 = vunpack.c.h.b16 %v996
        %v2548 = vunpack.c.l.b16 %v997
        %v2549 = vunpack.c.h.b16 %v997
        %v2550 = vunpack.c.l.b16 %v998
        %v2551 = vunpack.c.h.b16 %v998
        %v2552 = vunpack.c.l.b16 %v999
        %v2553 = vunpack.c.h.b16 %v999
        %v2554 = vunpack.c.l.b16 %v1000
        %v2555 = vunpack.c.h.b16 %v1000
        %v2556 = vunpack.c.l.b16 %v1001
        %v2557 = vunpack.c.h.b16 %v1001
        %v2558 = vunpack.c.l.b16 %v1002
        %v2559 = vunpack.c.h.b16 %v1002
        %v2560 = vunpack.c.l.b16 %v1003
        %v2561 = vunpack.c.h.b16 %v1003
        %v2562 = vunpack.c.l.b16 %v1004
        %v2563 = vunpack.c.h.b16 %v1004
        %v2564 = vunpack.c.l.b16 %v1005
        %v2565 = vunpack.c.h.b16 %v1005
        %v2566 = vunpack.c.l.b16 %v1006
        %v2567 = vunpack.c.h.b16 %v1006
        %v2568 = vunpack.c.l.b16 %v1007
        %v2569 = vunpack.c.h.b16 %v1007
        %v2570 = vunpack.c.l.b16 %v1008
        %v2571 = vunpack.c.h.b16 %v1008
        %v2572 = vunpack.c.l.b16 %v1009
        %v2573 = vunpack.c.h.b16 %v1009
        %v2574 = vpack.c.b16 %v1558, %v1550
        %v2575 = vpack.c.b16 %v1559, %v1551
        %v2576 = vpack.c.b16 %v1560, %v1552
        %v2577 = vpack.c.b16 %v1561, %v1553
        %v2578 = vpack.c.b16 %v1562, %v1554
        %v2579 = vpack.c.b16 %v1563, %v1555
        %v2580 = vpack.c.b16 %v1564, %v1556
        %v2581 = vpack.c.b16 %v1565, %v1557
        %v2582 = vpack.c.b16 %v1574, %v1566
        %v2583 = vpack.c.b16 %v1575, %v1567
        %v2584 = vpack.c.b16 %v1576, %v1568
        %v2585 = vpack.c.b16 %v1577, %v1569
        %v2586 = vpack.c.b16 %v1578, %v1570
        %v2587 = vpack.c.b16 %v1579, %v1571
        %v2588 = vpack.c.b16 %v1580, %v1572
        %v2589 = vpack.c.b16 %v1581, %v1573
        %v2590 = vpack.c.b16 %v1590, %v1582
        %v2591 = vpack.c.b16 %v1591, %v1583
        %v2592 = vpack.c.b16 %v1592, %v1584
        %v2593 = vpack.c.b16 %v1593, %v1585
        %v2594 = vpack.c.b16 %v1594, %v1586
        %v2595 = vpack.c.b16 %v1595, %v1587
        %v2596 = vpack.c.b16 %v1596, %v1588
        %v2597 = vpack.c.b16 %v1597, %v1589
        %v2598 = vpack.c.b16 %v1606, %v1598
        %v2599 = vpack.c.b16 %v1607, %v1599
        %v2600 = vpack.c.b16 %v1608, %v1600
        %v2601 = vpack.c.b16 %v1609, %v1601
        %v2602 = vpack.c.b16 %v1610, %v1602
        %v2603 = vpack.c.b16 %v1611, %v1603
        %v2604 = vpack.c.b16 %v1612, %v1604
        %v2605 = vpack.c.b16 %v1613, %v1605
        %v2606 = vpack.c.b16 %v1622, %v1614
        %v2607 = vpack.c.b16 %v1623, %v1615
        %v2608 = vpack.c.b16 %v1624, %v1616
        %v2609 = vpack.c.b16 %v1625, %v1617
        %v2610 = vpack.c.b16 %v1626, %v1618
        %v2611 = vpack.c.b16 %v1627, %v1619
        %v2612 = vpack.c.b16 %v1628, %v1620
        %v2613 = vpack.c.b16 %v1629, %v1621
        %v2614 = vpack.c.b16 %v1638, %v1630
        %v2615 = vpack.c.b16 %v1639, %v1631
        %v2616 = vpack.c.b16 %v1640, %v1632
        %v2617 = vpack.c.b16 %v1641, %v1633
        %v2618 = vpack.c.b16 %v1642, %v1634
        %v2619 = vpack.c.b16 %v1643, %v1635
        %v2620 = vpack.c.b16 %v1644, %v1636
        %v2621 = vpack.c.b16 %v1645, %v1637
        %v2622 = vpack.c.b16 %v1654, %v1646
        %v2623 = vpack.c.b16 %v1655, %v1647
        %v2624 = vpack.c.b16 %v1656, %v1648
        %v2625 = vpack.c.b16 %v1657, %v1649
        %v2626 = vpack.c.b16 %v1658, %v1650
        %v2627 = vpack.c.b16 %v1659, %v1651
        %v2628 = vpack.c.b16 %v1660, %v1652
        %v2629 = vpack.c.b16 %v1661, %v1653
        %v2630 = vpack.c.b16 %v1670, %v1662
        %v2631 = vpack.c.b16 %v1671, %v1663
        %v2632 = vpack.c.b16 %v1672, %v1664
        %v2633 = vpack.c.b16 %v1673, %v1665
        %v2634 = vpack.c.b16 %v1674, %v1666
        %v2635 = vpack.c.b16 %v1675, %v1667
        %v2636 = vpack.c.b16 %v1676, %v1668
        %v2637 = vpack.c.b16 %v1677, %v1669
        %v2638 = vpack.c.b16 %v1686, %v1678
        %v2639 = vpack.c.b16 %v1687, %v1679
        %v2640 = vpack.c.b16 %v1688, %v1680
        %v2641 = vpack.c.b16 %v1689, %v1681
        %v2642 = vpack.c.b16 %v1690, %v1682
        %v2643 = vpack.c.b16 %v1691, %v1683
        %v2644 = vpack.c.b16 %v1692, %v1684
        %v2645 = vpack.c.b16 %v1693, %v1685
        %v2646 = vpack.c.b16 %v1702, %v1694
        %v2647 = vpack.c.b16 %v1703, %v1695
        %v2648 = vpack.c.b16 %v1704, %v1696
        %v2649 = vpack.c.b16 %v1705, %v1697
        %v2650 = vpack.c.b16 %v1706, %v1698
        %v2651 = vpack.c.b16 %v1707, %v1699
        %v2652 = vpack.c.b16 %v1708, %v1700
        %v2653 = vpack.c.b16 %v1709, %v1701
        %v2654 = vpack.c.b16 %v1718, %v1710
        %v2655 = vpack.c.b16 %v1719, %v1711
        %v2656 = vpack.c.b16 %v1720, %v1712
        %v2657 = vpack.c.b16 %v1721, %v1713
        %v2658 = vpack.c.b16 %v1722, %v1714
        %v2659 = vpack.c.b16 %v1723, %v1715
        %v2660 = vpack.c.b16 %v1724, %v1716
        %v2661 = vpack.c.b16 %v1725, %v1717
        %v2662 = vpack.c.b16 %v1734, %v1726
        %v2663 = vpack.c.b16 %v1735, %v1727
        %v2664 = vpack.c.b16 %v1736, %v1728
        %v2665 = vpack.c.b16 %v1737, %v1729
        %v2666 = vpack.c.b16 %v1738, %v1730
        %v2667 = vpack.c.b16 %v1739, %v1731
        %v2668 = vpack.c.b16 %v1740, %v1732
        %v2669 = vpack.c.b16 %v1741, %v1733
        %v2670 = vpack.c.b16 %v1750, %v1742
        %v2671 = vpack.c.b16 %v1751, %v1743
        %v2672 = vpack.c.b16 %v1752, %v1744
        %v2673 = vpack.c.b16 %v1753, %v1745
        %v2674 = vpack.c.b16 %v1754, %v1746
        %v2675 = vpack.c.b16 %v1755, %v1747
        %v2676 = vpack.c.b16 %v1756, %v1748
        %v2677 = vpack.c.b16 %v1757, %v1749
        %v2678 = vpack.c.b16 %v1766, %v1758
        %v2679 = vpack.c.b16 %v1767, %v1759
        %v2680 = vpack.c.b16 %v1768, %v1760
        %v2681 = vpack.c.b16 %v1769, %v1761
        %v2682 = vpack.c.b16 %v1770, %v1762
        %v2683 = vpack.c.b16 %v1771, %v1763
        %v2684 = vpack.c.b16 %v1772, %v1764
        %v2685 = vpack.c.b16 %v1773, %v1765
        %v2686 = vpack.c.b16 %v1782, %v1774
        %v2687 = vpack.c.b16 %v1783, %v1775
        %v2688 = vpack.c.b16 %v1784, %v1776
        %v2689 = vpack.c.b16 %v1785, %v1777
        %v2690 = vpack.c.b16 %v1786, %v1778
        %v2691 = vpack.c.b16 %v1787, %v1779
        %v2692 = vpack.c.b16 %v1788, %v1780
        %v2693 = vpack.c.b16 %v1789, %v1781
        %v2694 = vpack.c.b16 %v1798, %v1790
        %v2695 = vpack.c.b16 %v1799, %v1791
        %v2696 = vpack.c.b16 %v1800, %v1792
        %v2697 = vpack.c.b16 %v1801, %v1793
        %v2698 = vpack.c.b16 %v1802, %v1794
        %v2699 = vpack.c.b16 %v1803, %v1795
        %v2700 = vpack.c.b16 %v1804, %v1796
        %v2701 = vpack.c.b16 %v1805, %v1797
        %v2702 = vpack.c.b16 %v1814, %v1806
        %v2703 = vpack.c.b16 %v1815, %v1807
        %v2704 = vpack.c.b16 %v1816, %v1808
        %v2705 = vpack.c.b16 %v1817, %v1809
        %v2706 = vpack.c.b16 %v1818, %v1810
        %v2707 = vpack.c.b16 %v1819, %v1811
        %v2708 = vpack.c.b16 %v1820, %v1812
        %v2709 = vpack.c.b16 %v1821, %v1813
        %v2710 = vpack.c.b16 %v1830, %v1822
        %v2711 = vpack.c.b16 %v1831, %v1823
        %v2712 = vpack.c.b16 %v1832, %v1824
        %v2713 = vpack.c.b16 %v1833, %v1825
        %v2714 = vpack.c.b16 %v1834, %v1826
        %v2715 = vpack.c.b16 %v1835, %v1827
        %v2716 = vpack.c.b16 %v1836, %v1828
        %v2717 = vpack.c.b16 %v1837, %v1829
        %v2718 = vpack.c.b16 %v1846, %v1838
        %v2719 = vpack.c.b16 %v1847, %v1839
        %v2720 = vpack.c.b16 %v1848, %v1840
        %v2721 = vpack.c.b16 %v1849, %v1841
        %v2722 = vpack.c.b16 %v1850, %v1842
        %v2723 = vpack.c.b16 %v1851, %v1843
        %v2724 = vpack.c.b16 %v1852, %v1844
        %v2725 = vpack.c.b16 %v1853, %v1845
        %v2726 = vpack.c.b16 %v1862, %v1854
        %v2727 = vpack.c.b16 %v1863, %v1855
        %v2728 = vpack.c.b16 %v1864, %v1856
        %v2729 = vpack.c.b16 %v1865, %v1857
        %v2730 = vpack.c.b16 %v1866, %v1858
        %v2731 = vpack.c.b16 %v1867, %v1859
        %v2732 = vpack.c.b16 %v1868, %v1860
        %v2733 = vpack.c.b16 %v1869, %v1861
        %v2734 = vpack.c.b16 %v1878, %v1870
        %v2735 = vpack.c.b16 %v1879, %v1871
        %v2736 = vpack.c.b16 %v1880, %v1872
        %v2737 = vpack.c.b16 %v1881, %v1873
        %v2738 = vpack.c.b16 %v1882, %v1874
        %v2739 = vpack.c.b16 %v1883, %v1875
        %v2740 = vpack.c.b16 %v1884, %v1876
        %v2741 = vpack.c.b16 %v1885, %v1877
        %v2742 = vpack.c.b16 %v1894, %v1886
        %v2743 = vpack.c.b16 %v1895, %v1887
        %v2744 = vpack.c.b16 %v1896, %v1888
        %v2745 = vpack.c.b16 %v1897, %v1889
        %v2746 = vpack.c.b16 %v1898, %v1890
        %v2747 = vpack.c.b16 %v1899, %v1891
        %v2748 = vpack.c.b16 %v1900, %v1892
        %v2749 = vpack.c.b16 %v1901, %v1893
        %v2750 = vpack.c.b16 %v1910, %v1902
        %v2751 = vpack.c.b16 %v1911, %v1903
        %v2752 = vpack.c.b16 %v1912, %v1904
        %v2753 = vpack.c.b16 %v1913, %v1905
        %v2754 = vpack.c.b16 %v1914, %v1906
        %v2755 = vpack.c.b16 %v1915, %v1907
        %v2756 = vpack.c.b16 %v1916, %v1908
        %v2757 = vpack.c.b16 %v1917, %v1909
        %v2758 = vpack.c.b16 %v1926, %v1918
        %v2759 = vpack.c.b16 %v1927, %v1919
        %v2760 = vpack.c.b16 %v1928, %v1920
        %v2761 = vpack.c.b16 %v1929, %v1921
        %v2762 = vpack.c.b16 %v1930, %v1922
        %v2763 = vpack.c.b16 %v1931, %v1923
        %v2764 = vpack.c.b16 %v1932, %v1924
        %v2765 = vpack.c.b16 %v1933, %v1925
        %v2766 = vpack.c.b16 %v1942, %v1934
        %v2767 = vpack.c.b16 %v1943, %v1935
        %v2768 = vpack.c.b16 %v1944, %v1936
        %v2769 = vpack.c.b16 %v1945, %v1937
        %v2770 = vpack.c.b16 %v1946, %v1938
        %v2771 = vpack.c.b16 %v1947, %v1939
        %v2772 = vpack.c.b16 %v1948, %v1940
        %v2773 = vpack.c.b16 %v1949, %v1941
        %v2774 = vpack.c.b16 %v1958, %v1950
        %v2775 = vpack.c.b16 %v1959, %v1951
        %v2776 = vpack.c.b16 %v1960, %v1952
        %v2777 = vpack.c.b16 %v1961, %v1953
        %v2778 = vpack.c.b16 %v1962, %v1954
        %v2779 = vpack.c.b16 %v1963, %v1955
        %v2780 = vpack.c.b16 %v1964, %v1956
        %v2781 = vpack.c.b16 %v1965, %v1957
        %v2782 = vpack.c.b16 %v1974, %v1966
        %v2783 = vpack.c.b16 %v1975, %v1967
        %v2784 = vpack.c.b16 %v1976, %v1968
        %v2785 = vpack.c.b16 %v1977, %v1969
        %v2786 = vpack.c.b16 %v1978, %v1970
        %v2787 = vpack.c.b16 %v1979, %v1971
        %v2788 = vpack.c.b16 %v1980, %v1972
        %v2789 = vpack.c.b16 %v1981, %v1973
        %v2790 = vpack.c.b16 %v1990, %v1982
        %v2791 = vpack.c.b16 %v1991, %v1983
        %v2792 = vpack.c.b16 %v1992, %v1984
        %v2793 = vpack.c.b16 %v1993, %v1985
        %v2794 = vpack.c.b16 %v1994, %v1986
        %v2795 = vpack.c.b16 %v1995, %v1987
        %v2796 = vpack.c.b16 %v1996, %v1988
        %v2797 = vpack.c.b16 %v1997, %v1989
        %v2798 = vpack.c.b16 %v2006, %v1998
        %v2799 = vpack.c.b16 %v2007, %v1999
        %v2800 = vpack.c.b16 %v2008, %v2000
        %v2801 = vpack.c.b16 %v2009, %v2001
        %v2802 = vpack.c.b16 %v2010, %v2002
        %v2803 = vpack.c.b16 %v2011, %v2003
        %v2804 = vpack.c.b16 %v2012, %v2004
        %v2805 = vpack.c.b16 %v2013, %v2005
        %v2806 = vpack.c.b16 %v2022, %v2014
        %v2807 = vpack.c.b16 %v2023, %v2015
        %v2808 = vpack.c.b16 %v2024, %v2016
        %v2809 = vpack.c.b16 %v2025, %v2017
        %v2810 = vpack.c.b16 %v2026, %v2018
        %v2811 = vpack.c.b16 %v2027, %v2019
        %v2812 = vpack.c.b16 %v2028, %v2020
        %v2813 = vpack.c.b16 %v2029, %v2021
        %v2814 = vpack.c.b16 %v2038, %v2030
        %v2815 = vpack.c.b16 %v2039, %v2031
        %v2816 = vpack.c.b16 %v2040, %v2032
        %v2817 = vpack.c.b16 %v2041, %v2033
        %v2818 = vpack.c.b16 %v2042, %v2034
        %v2819 = vpack.c.b16 %v2043, %v2035
        %v2820 = vpack.c.b16 %v2044, %v2036
        %v2821 = vpack.c.b16 %v2045, %v2037
        %v2822 = vpack.c.b16 %v2054, %v2046
        %v2823 = vpack.c.b16 %v2055, %v2047
        %v2824 = vpack.c.b16 %v2056, %v2048
        %v2825 = vpack.c.b16 %v2057, %v2049
        %v2826 = vpack.c.b16 %v2058, %v2050
        %v2827 = vpack.c.b16 %v2059, %v2051
        %v2828 = vpack.c.b16 %v2060, %v2052
        %v2829 = vpack.c.b16 %v2061, %v2053
        %v2830 = vpack.c.b16 %v2070, %v2062
        %v2831 = vpack.c.b16 %v2071, %v2063
        %v2832 = vpack.c.b16 %v2072, %v2064
        %v2833 = vpack.c.b16 %v2073, %v2065
        %v2834 = vpack.c.b16 %v2074, %v2066
        %v2835 = vpack.c.b16 %v2075, %v2067
        %v2836 = vpack.c.b16 %v2076, %v2068
        %v2837 = vpack.c.b16 %v2077, %v2069
        %v2838 = vpack.c.b16 %v2086, %v2078
        %v2839 = vpack.c.b16 %v2087, %v2079
        %v2840 = vpack.c.b16 %v2088, %v2080
        %v2841 = vpack.c.b16 %v2089, %v2081
        %v2842 = vpack.c.b16 %v2090, %v2082
        %v2843 = vpack.c.b16 %v2091, %v2083
        %v2844 = vpack.c.b16 %v2092, %v2084
        %v2845 = vpack.c.b16 %v2093, %v2085
        %v2846 = vpack.c.b16 %v2102, %v2094
        %v2847 = vpack.c.b16 %v2103, %v2095
        %v2848 = vpack.c.b16 %v2104, %v2096
        %v2849 = vpack.c.b16 %v2105, %v2097
        %v2850 = vpack.c.b16 %v2106, %v2098
        %v2851 = vpack.c.b16 %v2107, %v2099
        %v2852 = vpack.c.b16 %v2108, %v2100
        %v2853 = vpack.c.b16 %v2109, %v2101
        %v2854 = vpack.c.b16 %v2118, %v2110
        %v2855 = vpack.c.b16 %v2119, %v2111
        %v2856 = vpack.c.b16 %v2120, %v2112
        %v2857 = vpack.c.b16 %v2121, %v2113
        %v2858 = vpack.c.b16 %v2122, %v2114
        %v2859 = vpack.c.b16 %v2123, %v2115
        %v2860 = vpack.c.b16 %v2124, %v2116
        %v2861 = vpack.c.b16 %v2125, %v2117
        %v2862 = vpack.c.b16 %v2134, %v2126
        %v2863 = vpack.c.b16 %v2135, %v2127
        %v2864 = vpack.c.b16 %v2136, %v2128
        %v2865 = vpack.c.b16 %v2137, %v2129
        %v2866 = vpack.c.b16 %v2138, %v2130
        %v2867 = vpack.c.b16 %v2139, %v2131
        %v2868 = vpack.c.b16 %v2140, %v2132
        %v2869 = vpack.c.b16 %v2141, %v2133
        %v2870 = vpack.c.b16 %v2150, %v2142
        %v2871 = vpack.c.b16 %v2151, %v2143
        %v2872 = vpack.c.b16 %v2152, %v2144
        %v2873 = vpack.c.b16 %v2153, %v2145
        %v2874 = vpack.c.b16 %v2154, %v2146
        %v2875 = vpack.c.b16 %v2155, %v2147
        %v2876 = vpack.c.b16 %v2156, %v2148
        %v2877 = vpack.c.b16 %v2157, %v2149
        %v2878 = vpack.c.b16 %v2166, %v2158
        %v2879 = vpack.c.b16 %v2167, %v2159
        %v2880 = vpack.c.b16 %v2168, %v2160
        %v2881 = vpack.c.b16 %v2169, %v2161
        %v2882 = vpack.c.b16 %v2170, %v2162
        %v2883 = vpack.c.b16 %v2171, %v2163
        %v2884 = vpack.c.b16 %v2172, %v2164
        %v2885 = vpack.c.b16 %v2173, %v2165
        %v2886 = vpack.c.b16 %v2182, %v2174
        %v2887 = vpack.c.b16 %v2183, %v2175
        %v2888 = vpack.c.b16 %v2184, %v2176
        %v2889 = vpack.c.b16 %v2185, %v2177
        %v2890 = vpack.c.b16 %v2186, %v2178
        %v2891 = vpack.c.b16 %v2187, %v2179
        %v2892 = vpack.c.b16 %v2188, %v2180
        %v2893 = vpack.c.b16 %v2189, %v2181
        %v2894 = vpack.c.b16 %v2198, %v2190
        %v2895 = vpack.c.b16 %v2199, %v2191
        %v2896 = vpack.c.b16 %v2200, %v2192
        %v2897 = vpack.c.b16 %v2201, %v2193
        %v2898 = vpack.c.b16 %v2202, %v2194
        %v2899 = vpack.c.b16 %v2203, %v2195
        %v2900 = vpack.c.b16 %v2204, %v2196
        %v2901 = vpack.c.b16 %v2205, %v2197
        %v2902 = vpack.c.b16 %v2214, %v2206
        %v2903 = vpack.c.b16 %v2215, %v2207
        %v2904 = vpack.c.b16 %v2216, %v2208
        %v2905 = vpack.c.b16 %v2217, %v2209
        %v2906 = vpack.c.b16 %v2218, %v2210
        %v2907 = vpack.c.b16 %v2219, %v2211
        %v2908 = vpack.c.b16 %v2220, %v2212
        %v2909 = vpack.c.b16 %v2221, %v2213
        %v2910 = vpack.c.b16 %v2230, %v2222
        %v2911 = vpack.c.b16 %v2231, %v2223
        %v2912 = vpack.c.b16 %v2232, %v2224
        %v2913 = vpack.c.b16 %v2233, %v2225
        %v2914 = vpack.c.b16 %v2234, %v2226
        %v2915 = vpack.c.b16 %v2235, %v2227
        %v2916 = vpack.c.b16 %v2236, %v2228
        %v2917 = vpack.c.b16 %v2237, %v2229
        %v2918 = vpack.c.b16 %v2246, %v2238
        %v2919 = vpack.c.b16 %v2247, %v2239
        %v2920 = vpack.c.b16 %v2248, %v2240
        %v2921 = vpack.c.b16 %v2249, %v2241
        %v2922 = vpack.c.b16 %v2250, %v2242
        %v2923 = vpack.c.b16 %v2251, %v2243
        %v2924 = vpack.c.b16 %v2252, %v2244
        %v2925 = vpack.c.b16 %v2253, %v2245
        %v2926 = vpack.c.b16 %v2262, %v2254
        %v2927 = vpack.c.b16 %v2263, %v2255
        %v2928 = vpack.c.b16 %v2264, %v2256
        %v2929 = vpack.c.b16 %v2265, %v2257
        %v2930 = vpack.c.b16 %v2266, %v2258
        %v2931 = vpack.c.b16 %v2267, %v2259
        %v2932 = vpack.c.b16 %v2268, %v2260
        %v2933 = vpack.c.b16 %v2269, %v2261
        %v2934 = vpack.c.b16 %v2278, %v2270
        %v2935 = vpack.c.b16 %v2279, %v2271
        %v2936 = vpack.c.b16 %v2280, %v2272
        %v2937 = vpack.c.b16 %v2281, %v2273
        %v2938 = vpack.c.b16 %v2282, %v2274
        %v2939 = vpack.c.b16 %v2283, %v2275
        %v2940 = vpack.c.b16 %v2284, %v2276
        %v2941 = vpack.c.b16 %v2285, %v2277
        %v2942 = vpack.c.b16 %v2294, %v2286
        %v2943 = vpack.c.b16 %v2295, %v2287
        %v2944 = vpack.c.b16 %v2296, %v2288
        %v2945 = vpack.c.b16 %v2297, %v2289
        %v2946 = vpack.c.b16 %v2298, %v2290
        %v2947 = vpack.c.b16 %v2299, %v2291
        %v2948 = vpack.c.b16 %v2300, %v2292
        %v2949 = vpack.c.b16 %v2301, %v2293
        %v2950 = vpack.c.b16 %v2310, %v2302
        %v2951 = vpack.c.b16 %v2311, %v2303
        %v2952 = vpack.c.b16 %v2312, %v2304
        %v2953 = vpack.c.b16 %v2313, %v2305
        %v2954 = vpack.c.b16 %v2314, %v2306
        %v2955 = vpack.c.b16 %v2315, %v2307
        %v2956 = vpack.c.b16 %v2316, %v2308
        %v2957 = vpack.c.b16 %v2317, %v2309
        %v2958 = vpack.c.b16 %v2326, %v2318
        %v2959 = vpack.c.b16 %v2327, %v2319
        %v2960 = vpack.c.b16 %v2328, %v2320
        %v2961 = vpack.c.b16 %v2329, %v2321
        %v2962 = vpack.c.b16 %v2330, %v2322
        %v2963 = vpack.c.b16 %v2331, %v2323
        %v2964 = vpack.c.b16 %v2332, %v2324
        %v2965 = vpack.c.b16 %v2333, %v2325
        %v2966 = vpack.c.b16 %v2342, %v2334
        %v2967 = vpack.c.b16 %v2343, %v2335
        %v2968 = vpack.c.b16 %v2344, %v2336
        %v2969 = vpack.c.b16 %v2345, %v2337
        %v2970 = vpack.c.b16 %v2346, %v2338
        %v2971 = vpack.c.b16 %v2347, %v2339
        %v2972 = vpack.c.b16 %v2348, %v2340
        %v2973 = vpack.c.b16 %v2349, %v2341
        %v2974 = vpack.c.b16 %v2358, %v2350
        %v2975 = vpack.c.b16 %v2359, %v2351
        %v2976 = vpack.c.b16 %v2360, %v2352
        %v2977 = vpack.c.b16 %v2361, %v2353
        %v2978 = vpack.c.b16 %v2362, %v2354
        %v2979 = vpack.c.b16 %v2363, %v2355
        %v2980 = vpack.c.b16 %v2364, %v2356
        %v2981 = vpack.c.b16 %v2365, %v2357
        %v2982 = vpack.c.b16 %v2374, %v2366
        %v2983 = vpack.c.b16 %v2375, %v2367
        %v2984 = vpack.c.b16 %v2376, %v2368
        %v2985 = vpack.c.b16 %v2377, %v2369
        %v2986 = vpack.c.b16 %v2378, %v2370
        %v2987 = vpack.c.b16 %v2379, %v2371
        %v2988 = vpack.c.b16 %v2380, %v2372
        %v2989 = vpack.c.b16 %v2381, %v2373
        %v2990 = vpack.c.b16 %v2390, %v2382
        %v2991 = vpack.c.b16 %v2391, %v2383
        %v2992 = vpack.c.b16 %v2392, %v2384
        %v2993 = vpack.c.b16 %v2393, %v2385
        %v2994 = vpack.c.b16 %v2394, %v2386
        %v2995 = vpack.c.b16 %v2395, %v2387
        %v2996 = vpack.c.b16 %v2396, %v2388
        %v2997 = vpack.c.b16 %v2397, %v2389
        %v2998 = vpack.c.b16 %v2406, %v2398
        %v2999 = vpack.c.b16 %v2407, %v2399
        %v3000 = vpack.c.b16 %v2408, %v2400
        %v3001 = vpack.c.b16 %v2409, %v2401
        %v3002 = vpack.c.b16 %v2410, %v2402
        %v3003 = vpack.c.b16 %v2411, %v2403
        %v3004 = vpack.c.b16 %v2412, %v2404
        %v3005 = vpack.c.b16 %v2413, %v2405
        %v3006 = vpack.c.b16 %v2422, %v2414
        %v3007 = vpack.c.b16 %v2423, %v2415
        %v3008 = vpack.c.b16 %v2424, %v2416
        %v3009 = vpack.c.b16 %v2425, %v2417
        %v3010 = vpack.c.b16 %v2426, %v2418
        %v3011 = vpack.c.b16 %v2427, %v2419
        %v3012 = vpack.c.b16 %v2428, %v2420
        %v3013 = vpack.c.b16 %v2429, %v2421
        %v3014 = vpack.c.b16 %v2438, %v2430
        %v3015 = vpack.c.b16 %v2439, %v2431
        %v3016 = vpack.c.b16 %v2440, %v2432
        %v3017 = vpack.c.b16 %v2441, %v2433
        %v3018 = vpack.c.b16 %v2442, %v2434
        %v3019 = vpack.c.b16 %v2443, %v2435
        %v3020 = vpack.c.b16 %v2444, %v2436
        %v3021 = vpack.c.b16 %v2445, %v2437
        %v3022 = vpack.c.b16 %v2454, %v2446
        %v3023 = vpack.c.b16 %v2455, %v2447
        %v3024 = vpack.c.b16 %v2456, %v2448
        %v3025 = vpack.c.b16 %v2457, %v2449
        %v3026 = vpack.c.b16 %v2458, %v2450
        %v3027 = vpack.c.b16 %v2459, %v2451
        %v3028 = vpack.c.b16 %v2460, %v2452
        %v3029 = vpack.c.b16 %v2461, %v2453
        %v3030 = vpack.c.b16 %v2470, %v2462
        %v3031 = vpack.c.b16 %v2471, %v2463
        %v3032 = vpack.c.b16 %v2472, %v2464
        %v3033 = vpack.c.b16 %v2473, %v2465
        %v3034 = vpack.c.b16 %v2474, %v2466
        %v3035 = vpack.c.b16 %v2475, %v2467
        %v3036 = vpack.c.b16 %v2476, %v2468
        %v3037 = vpack.c.b16 %v2477, %v2469
        %v3038 = vpack.c.b16 %v2486, %v2478
        %v3039 = vpack.c.b16 %v2487, %v2479
        %v3040 = vpack.c.b16 %v2488, %v2480
        %v3041 = vpack.c.b16 %v2489, %v2481
        %v3042 = vpack.c.b16 %v2490, %v2482
        %v3043 = vpack.c.b16 %v2491, %v2483
        %v3044 = vpack.c.b16 %v2492, %v2484
        %v3045 = vpack.c.b16 %v2493, %v2485
        %v3046 = vpack.c.b16 %v2502, %v2494
        %v3047 = vpack.c.b16 %v2503, %v2495
        %v3048 = vpack.c.b16 %v2504, %v2496
        %v3049 = vpack.c.b16 %v2505, %v2497
        %v3050 = vpack.c.b16 %v2506, %v2498
        %v3051 = vpack.c.b16 %v2507, %v2499
        %v3052 = vpack.c.b16 %v2508, %v2500
        %v3053 = vpack.c.b16 %v2509, %v2501
        %v3054 = vpack.c.b16 %v2518, %v2510
        %v3055 = vpack.c.b16 %v2519, %v2511
        %v3056 = vpack.c.b16 %v2520, %v2512
        %v3057 = vpack.c.b16 %v2521, %v2513
        %v3058 = vpack.c.b16 %v2522, %v2514
        %v3059 = vpack.c.b16 %v2523, %v2515
        %v3060 = vpack.c.b16 %v2524, %v2516
        %v3061 = vpack.c.b16 %v2525, %v2517
        %v3062 = vpack.c.b16 %v2534, %v2526
        %v3063 = vpack.c.b16 %v2535, %v2527
        %v3064 = vpack.c.b16 %v2536, %v2528
        %v3065 = vpack.c.b16 %v2537, %v2529
        %v3066 = vpack.c.b16 %v2538, %v2530
        %v3067 = vpack.c.b16 %v2539, %v2531
        %v3068 = vpack.c.b16 %v2540, %v2532
        %v3069 = vpack.c.b16 %v2541, %v2533
        %v3070 = vpack.c.b16 %v2550, %v2542
        %v3071 = vpack.c.b16 %v2551, %v2543
        %v3072 = vpack.c.b16 %v2552, %v2544
        %v3073 = vpack.c.b16 %v2553, %v2545
        %v3074 = vpack.c.b16 %v2554, %v2546
        %v3075 = vpack.c.b16 %v2555, %v2547
        %v3076 = vpack.c.b16 %v2556, %v2548
        %v3077 = vpack.c.b16 %v2557, %v2549
        %v3078 = vpack.c.b16 %v2566, %v2558
        %v3079 = vpack.c.b16 %v2567, %v2559
        %v3080 = vpack.c.b16 %v2568, %v2560
        %v3081 = vpack.c.b16 %v2569, %v2561
        %v3082 = vpack.c.b16 %v2570, %v2562
        %v3083 = vpack.c.b16 %v2571, %v2563
        %v3084 = vpack.c.b16 %v2572, %v2564
        %v3085 = vpack.c.b16 %v2573, %v2565
        %3598 = vmatprep.subr.bf16.mxu0 %v2631
        %3599 = vmatpush1.bf16.msra.mxu0 %v2630
        %3600 = vmatprep.subr.bf16.mxu0 %v2623
        %3601 = vmatpush1.bf16.msra.mxu0 %v2622
        %3602 = vmatprep.subr.bf16.mxu0 %v2615
        %3603 = vmatpush1.bf16.msra.mxu0 %v2614
        %3604 = vmatprep.subr.bf16.mxu0 %v2607
        %3605 = vmatpush1.bf16.msra.mxu0 %v2606
        %3606 = vmatprep.subr.bf16.mxu0 %v2599
        %3607 = vmatpush1.bf16.msra.mxu0 %v2598
        %3608 = vmatprep.subr.bf16.mxu0 %v2591
        %3609 = vmatpush1.bf16.msra.mxu0 %v2590
        %3610 = vmatprep.subr.bf16.mxu0 %v2583
        %3611 = vmatpush1.bf16.msra.mxu0 %v2582
        %3612 = vmatprep.subr.bf16.mxu0 %v2575
        %3613 = vmatpush1.bf16.msra.mxu0 %v2574
        %3614 = vmatprep.subr.bf16.mxu0 %v2695
        %3615 = vmatpush2.bf16.msra.mxu0 %v2694
        %3616 = vmatprep.subr.bf16.mxu0 %v2687
        %3617 = vmatpush2.bf16.msra.mxu0 %v2686
        %3618 = vmatprep.subr.bf16.mxu0 %v2679
        %3619 = vmatpush2.bf16.msra.mxu0 %v2678
        %3620 = vmatprep.subr.bf16.mxu0 %v2671
        %3621 = vmatpush2.bf16.msra.mxu0 %v2670
        %3622 = vmatprep.subr.bf16.mxu0 %v2663
        %3623 = vmatpush2.bf16.msra.mxu0 %v2662
        %3624 = vmatprep.subr.bf16.mxu0 %v2655
        %3625 = vmatpush2.bf16.msra.mxu0 %v2654
        %3626 = vmatprep.subr.bf16.mxu0 %v2647
        %3627 = vmatpush2.bf16.msra.mxu0 %v2646
        %3628 = vmatprep.subr.bf16.mxu0 %v2639
        %3629 = vmatpush2.bf16.msra.mxu0 %v2638
        %3630 = vmatprep.mubr.bf16.mxu0 %v1023
        %3631 = vmatmul.mubr.bf16.gmra.mxu0 %v1022
        %v3632 = vpop.f32.mrf.mxu0
        %v3633 = vadd.f32 0.0, %v3632
        %v3634 = vpop.f32.mrf.mxu0
        %v3635 = vadd.f32 0.0, %v3634
        %v3636 = vpop.f32.mrf.mxu0
        %v3637 = vpop.f32.mrf.mxu0
        %3638 = vdwg.mxu0
        %3639 = vmatprep.subr.bf16.mxu0 %v2759
        %3640 = vmatpush1.bf16.msra.mxu0 %v2758
        %3641 = vmatprep.subr.bf16.mxu0 %v2751
        %3642 = vmatpush1.bf16.msra.mxu0 %v2750
        %3643 = vmatprep.subr.bf16.mxu0 %v2743
        %3644 = vmatpush1.bf16.msra.mxu0 %v2742
        %3645 = vmatprep.subr.bf16.mxu0 %v2735
        %3646 = vmatpush1.bf16.msra.mxu0 %v2734
        %3647 = vmatprep.subr.bf16.mxu0 %v2727
        %3648 = vmatpush1.bf16.msra.mxu0 %v2726
        %3649 = vmatprep.subr.bf16.mxu0 %v2719
        %3650 = vmatpush1.bf16.msra.mxu0 %v2718
        %3651 = vmatprep.subr.bf16.mxu0 %v2711
        %3652 = vmatpush1.bf16.msra.mxu0 %v2710
        %3653 = vmatprep.subr.bf16.mxu0 %v2703
        %3654 = vmatpush1.bf16.msra.mxu0 %v2702
        %3655 = vmatprep.subr.bf16.mxu0 %v2823
        %3656 = vmatpush2.bf16.msra.mxu0 %v2822
        %3657 = vmatprep.subr.bf16.mxu0 %v2815
        %3658 = vmatpush2.bf16.msra.mxu0 %v2814
        %3659 = vmatprep.subr.bf16.mxu0 %v2807
        %3660 = vmatpush2.bf16.msra.mxu0 %v2806
        %3661 = vmatprep.subr.bf16.mxu0 %v2799
        %3662 = vmatpush2.bf16.msra.mxu0 %v2798
        %3663 = vmatprep.subr.bf16.mxu0 %v2791
        %3664 = vmatpush2.bf16.msra.mxu0 %v2790
        %3665 = vmatprep.subr.bf16.mxu0 %v2783
        %3666 = vmatpush2.bf16.msra.mxu0 %v2782
        %3667 = vmatprep.subr.bf16.mxu0 %v2775
        %3668 = vmatpush2.bf16.msra.mxu0 %v2774
        %3669 = vmatprep.subr.bf16.mxu0 %v2767
        %3670 = vmatpush2.bf16.msra.mxu0 %v2766
        %3671 = vmatprep.mubr.bf16.mxu0 %v1025
        %3672 = vmatmul.mubr.bf16.gmra.mxu0 %v1024
        %v3673 = vpop.f32.mrf.mxu0
        %v3674 = vadd.f32 %v3633, %v3673
        %v3675 = vpop.f32.mrf.mxu0
        %v3676 = vadd.f32 %v3635, %v3675
        %v3677 = vpop.f32.mrf.mxu0
        %v3678 = vpop.f32.mrf.mxu0
        %3679 = vdwg.mxu0
        %3680 = vmatprep.subr.bf16.mxu0 %v2887
        %3681 = vmatpush1.bf16.msra.mxu0 %v2886
        %3682 = vmatprep.subr.bf16.mxu0 %v2879
        %3683 = vmatpush1.bf16.msra.mxu0 %v2878
        %3684 = vmatprep.subr.bf16.mxu0 %v2871
        %3685 = vmatpush1.bf16.msra.mxu0 %v2870
        %3686 = vmatprep.subr.bf16.mxu0 %v2863
        %3687 = vmatpush1.bf16.msra.mxu0 %v2862
        %3688 = vmatprep.subr.bf16.mxu0 %v2855
        %3689 = vmatpush1.bf16.msra.mxu0 %v2854
        %3690 = vmatprep.subr.bf16.mxu0 %v2847
        %3691 = vmatpush1.bf16.msra.mxu0 %v2846
        %3692 = vmatprep.subr.bf16.mxu0 %v2839
        %3693 = vmatpush1.bf16.msra.mxu0 %v2838
        %3694 = vmatprep.subr.bf16.mxu0 %v2831
        %3695 = vmatpush1.bf16.msra.mxu0 %v2830
        %3696 = vmatprep.subr.bf16.mxu0 %v2951
        %3697 = vmatpush2.bf16.msra.mxu0 %v2950
        %3698 = vmatprep.subr.bf16.mxu0 %v2943
        %3699 = vmatpush2.bf16.msra.mxu0 %v2942
        %3700 = vmatprep.subr.bf16.mxu0 %v2935
        %3701 = vmatpush2.bf16.msra.mxu0 %v2934
        %3702 = vmatprep.subr.bf16.mxu0 %v2927
        %3703 = vmatpush2.bf16.msra.mxu0 %v2926
        %3704 = vmatprep.subr.bf16.mxu0 %v2919
        %3705 = vmatpush2.bf16.msra.mxu0 %v2918
        %3706 = vmatprep.subr.bf16.mxu0 %v2911
        %3707 = vmatpush2.bf16.msra.mxu0 %v2910
        %3708 = vmatprep.subr.bf16.mxu0 %v2903
        %3709 = vmatpush2.bf16.msra.mxu0 %v2902
        %3710 = vmatprep.subr.bf16.mxu0 %v2895
        %3711 = vmatpush2.bf16.msra.mxu0 %v2894
        %3712 = vmatprep.mubr.bf16.mxu0 %v1027
        %3713 = vmatmul.mubr.bf16.gmra.mxu0 %v1026
        %v3714 = vpop.f32.mrf.mxu0
        %v3715 = vadd.f32 %v3674, %v3714
        %v3716 = vpop.f32.mrf.mxu0
        %v3717 = vadd.f32 %v3676, %v3716
        %v3718 = vpop.f32.mrf.mxu0
        %v3719 = vpop.f32.mrf.mxu0
        %3720 = vdwg.mxu0
        %3721 = vmatprep.subr.bf16.mxu0 %v3015
        %3722 = vmatpush1.bf16.msra.mxu0 %v3014
        %3723 = vmatprep.subr.bf16.mxu0 %v3007
        %3724 = vmatpush1.bf16.msra.mxu0 %v3006
        %3725 = vmatprep.subr.bf16.mxu0 %v2999
        %3726 = vmatpush1.bf16.msra.mxu0 %v2998
        %3727 = vmatprep.subr.bf16.mxu0 %v2991
        %3728 = vmatpush1.bf16.msra.mxu0 %v2990
        %3729 = vmatprep.subr.bf16.mxu0 %v2983
        %3730 = vmatpush1.bf16.msra.mxu0 %v2982
        %3731 = vmatprep.subr.bf16.mxu0 %v2975
        %3732 = vmatpush1.bf16.msra.mxu0 %v2974
        %3733 = vmatprep.subr.bf16.mxu0 %v2967
        %3734 = vmatpush1.bf16.msra.mxu0 %v2966
        %3735 = vmatprep.subr.bf16.mxu0 %v2959
        %3736 = vmatpush1.bf16.msra.mxu0 %v2958
        %3737 = vmatprep.subr.bf16.mxu0 %v3079
        %3738 = vmatpush2.bf16.msra.mxu0 %v3078
        %3739 = vmatprep.subr.bf16.mxu0 %v3071
        %3740 = vmatpush2.bf16.msra.mxu0 %v3070
        %3741 = vmatprep.subr.bf16.mxu0 %v3063
        %3742 = vmatpush2.bf16.msra.mxu0 %v3062
        %3743 = vmatprep.subr.bf16.mxu0 %v3055
        %3744 = vmatpush2.bf16.msra.mxu0 %v3054
        %3745 = vmatprep.subr.bf16.mxu0 %v3047
        %3746 = vmatpush2.bf16.msra.mxu0 %v3046
        %3747 = vmatprep.subr.bf16.mxu0 %v3039
        %3748 = vmatpush2.bf16.msra.mxu0 %v3038
        %3749 = vmatprep.subr.bf16.mxu0 %v3031
        %3750 = vmatpush2.bf16.msra.mxu0 %v3030
        %3751 = vmatprep.subr.bf16.mxu0 %v3023
        %3752 = vmatpush2.bf16.msra.mxu0 %v3022
        %3753 = vmatprep.mubr.bf16.mxu0 %v1029
        %3754 = vmatmul.mubr.bf16.gmra.mxu0 %v1028
        %v3755 = vpop.f32.mrf.mxu0
        %v3756 = vadd.f32 %v3715, %v3755
        %v3757 = vpop.f32.mrf.mxu0
        %v3758 = vadd.f32 %v3717, %v3757
        %v3759 = vpop.f32.mrf.mxu0
        %v3760 = vpop.f32.mrf.mxu0
        %3761 = vdwg.mxu0
        %3762 = vmatprep.subr.bf16.mxu0 %v2633
        %3763 = vmatpush1.bf16.msra.mxu0 %v2632
        %3764 = vmatprep.subr.bf16.mxu0 %v2625
        %3765 = vmatpush1.bf16.msra.mxu0 %v2624
        %3766 = vmatprep.subr.bf16.mxu0 %v2617
        %3767 = vmatpush1.bf16.msra.mxu0 %v2616
        %3768 = vmatprep.subr.bf16.mxu0 %v2609
        %3769 = vmatpush1.bf16.msra.mxu0 %v2608
        %3770 = vmatprep.subr.bf16.mxu0 %v2601
        %3771 = vmatpush1.bf16.msra.mxu0 %v2600
        %3772 = vmatprep.subr.bf16.mxu0 %v2593
        %3773 = vmatpush1.bf16.msra.mxu0 %v2592
        %3774 = vmatprep.subr.bf16.mxu0 %v2585
        %3775 = vmatpush1.bf16.msra.mxu0 %v2584
        %3776 = vmatprep.subr.bf16.mxu0 %v2577
        %3777 = vmatpush1.bf16.msra.mxu0 %v2576
        %3778 = vmatprep.subr.bf16.mxu0 %v2697
        %3779 = vmatpush2.bf16.msra.mxu0 %v2696
        %3780 = vmatprep.subr.bf16.mxu0 %v2689
        %3781 = vmatpush2.bf16.msra.mxu0 %v2688
        %3782 = vmatprep.subr.bf16.mxu0 %v2681
        %3783 = vmatpush2.bf16.msra.mxu0 %v2680
        %3784 = vmatprep.subr.bf16.mxu0 %v2673
        %3785 = vmatpush2.bf16.msra.mxu0 %v2672
        %3786 = vmatprep.subr.bf16.mxu0 %v2665
        %3787 = vmatpush2.bf16.msra.mxu0 %v2664
        %3788 = vmatprep.subr.bf16.mxu0 %v2657
        %3789 = vmatpush2.bf16.msra.mxu0 %v2656
        %3790 = vmatprep.subr.bf16.mxu0 %v2649
        %3791 = vmatpush2.bf16.msra.mxu0 %v2648
        %3792 = vmatprep.subr.bf16.mxu0 %v2641
        %3793 = vmatpush2.bf16.msra.mxu0 %v2640
        %3794 = vmatprep.mubr.bf16.mxu0 %v1023
        %3795 = vmatmul.mubr.bf16.gmra.mxu0 %v1022
        %v3796 = vpop.f32.mrf.mxu0
        %v3797 = vadd.f32 0.0, %v3796
        %v3798 = vpop.f32.mrf.mxu0
        %v3799 = vadd.f32 0.0, %v3798
        %v3800 = vpop.f32.mrf.mxu0
        %v3801 = vpop.f32.mrf.mxu0
        %3802 = vdwg.mxu0
        %3803 = vmatprep.subr.bf16.mxu0 %v2761
        %3804 = vmatpush1.bf16.msra.mxu0 %v2760
        %3805 = vmatprep.subr.bf16.mxu0 %v2753
        %3806 = vmatpush1.bf16.msra.mxu0 %v2752
        %3807 = vmatprep.subr.bf16.mxu0 %v2745
        %3808 = vmatpush1.bf16.msra.mxu0 %v2744
        %3809 = vmatprep.subr.bf16.mxu0 %v2737
        %3810 = vmatpush1.bf16.msra.mxu0 %v2736
        %3811 = vmatprep.subr.bf16.mxu0 %v2729
        %3812 = vmatpush1.bf16.msra.mxu0 %v2728
        %3813 = vmatprep.subr.bf16.mxu0 %v2721
        %3814 = vmatpush1.bf16.msra.mxu0 %v2720
        %3815 = vmatprep.subr.bf16.mxu0 %v2713
        %3816 = vmatpush1.bf16.msra.mxu0 %v2712
        %3817 = vmatprep.subr.bf16.mxu0 %v2705
        %3818 = vmatpush1.bf16.msra.mxu0 %v2704
        %3819 = vmatprep.subr.bf16.mxu0 %v2825
        %3820 = vmatpush2.bf16.msra.mxu0 %v2824
        %3821 = vmatprep.subr.bf16.mxu0 %v2817
        %3822 = vmatpush2.bf16.msra.mxu0 %v2816
        %3823 = vmatprep.subr.bf16.mxu0 %v2809
        %3824 = vmatpush2.bf16.msra.mxu0 %v2808
        %3825 = vmatprep.subr.bf16.mxu0 %v2801
        %3826 = vmatpush2.bf16.msra.mxu0 %v2800
        %3827 = vmatprep.subr.bf16.mxu0 %v2793
        %3828 = vmatpush2.bf16.msra.mxu0 %v2792
        %3829 = vmatprep.subr.bf16.mxu0 %v2785
        %3830 = vmatpush2.bf16.msra.mxu0 %v2784
        %3831 = vmatprep.subr.bf16.mxu0 %v2777
        %3832 = vmatpush2.bf16.msra.mxu0 %v2776
        %3833 = vmatprep.subr.bf16.mxu0 %v2769
        %3834 = vmatpush2.bf16.msra.mxu0 %v2768
        %3835 = vmatprep.mubr.bf16.mxu0 %v1025
        %3836 = vmatmul.mubr.bf16.gmra.mxu0 %v1024
        %v3837 = vpop.f32.mrf.mxu0
        %v3838 = vadd.f32 %v3797, %v3837
        %v3839 = vpop.f32.mrf.mxu0
        %v3840 = vadd.f32 %v3799, %v3839
        %v3841 = vpop.f32.mrf.mxu0
        %v3842 = vpop.f32.mrf.mxu0
        %3843 = vdwg.mxu0
        %3844 = vmatprep.subr.bf16.mxu0 %v2889
        %3845 = vmatpush1.bf16.msra.mxu0 %v2888
        %3846 = vmatprep.subr.bf16.mxu0 %v2881
        %3847 = vmatpush1.bf16.msra.mxu0 %v2880
        %3848 = vmatprep.subr.bf16.mxu0 %v2873
        %3849 = vmatpush1.bf16.msra.mxu0 %v2872
        %3850 = vmatprep.subr.bf16.mxu0 %v2865
        %3851 = vmatpush1.bf16.msra.mxu0 %v2864
        %3852 = vmatprep.subr.bf16.mxu0 %v2857
        %3853 = vmatpush1.bf16.msra.mxu0 %v2856
        %3854 = vmatprep.subr.bf16.mxu0 %v2849
        %3855 = vmatpush1.bf16.msra.mxu0 %v2848
        %3856 = vmatprep.subr.bf16.mxu0 %v2841
        %3857 = vmatpush1.bf16.msra.mxu0 %v2840
        %3858 = vmatprep.subr.bf16.mxu0 %v2833
        %3859 = vmatpush1.bf16.msra.mxu0 %v2832
        %3860 = vmatprep.subr.bf16.mxu0 %v2953
        %3861 = vmatpush2.bf16.msra.mxu0 %v2952
        %3862 = vmatprep.subr.bf16.mxu0 %v2945
        %3863 = vmatpush2.bf16.msra.mxu0 %v2944
        %3864 = vmatprep.subr.bf16.mxu0 %v2937
        %3865 = vmatpush2.bf16.msra.mxu0 %v2936
        %3866 = vmatprep.subr.bf16.mxu0 %v2929
        %3867 = vmatpush2.bf16.msra.mxu0 %v2928
        %3868 = vmatprep.subr.bf16.mxu0 %v2921
        %3869 = vmatpush2.bf16.msra.mxu0 %v2920
        %3870 = vmatprep.subr.bf16.mxu0 %v2913
        %3871 = vmatpush2.bf16.msra.mxu0 %v2912
        %3872 = vmatprep.subr.bf16.mxu0 %v2905
        %3873 = vmatpush2.bf16.msra.mxu0 %v2904
        %3874 = vmatprep.subr.bf16.mxu0 %v2897
        %3875 = vmatpush2.bf16.msra.mxu0 %v2896
        %3876 = vmatprep.mubr.bf16.mxu0 %v1027
        %3877 = vmatmul.mubr.bf16.gmra.mxu0 %v1026
        %v3878 = vpop.f32.mrf.mxu0
        %v3879 = vadd.f32 %v3838, %v3878
        %v3880 = vpop.f32.mrf.mxu0
        %v3881 = vadd.f32 %v3840, %v3880
        %v3882 = vpop.f32.mrf.mxu0
        %v3883 = vpop.f32.mrf.mxu0
        %3884 = vdwg.mxu0
        %3885 = vmatprep.subr.bf16.mxu0 %v3017
        %3886 = vmatpush1.bf16.msra.mxu0 %v3016
        %3887 = vmatprep.subr.bf16.mxu0 %v3009
        %3888 = vmatpush1.bf16.msra.mxu0 %v3008
        %3889 = vmatprep.subr.bf16.mxu0 %v3001
        %3890 = vmatpush1.bf16.msra.mxu0 %v3000
        %3891 = vmatprep.subr.bf16.mxu0 %v2993
        %3892 = vmatpush1.bf16.msra.mxu0 %v2992
        %3893 = vmatprep.subr.bf16.mxu0 %v2985
        %3894 = vmatpush1.bf16.msra.mxu0 %v2984
        %3895 = vmatprep.subr.bf16.mxu0 %v2977
        %3896 = vmatpush1.bf16.msra.mxu0 %v2976
        %3897 = vmatprep.subr.bf16.mxu0 %v2969
        %3898 = vmatpush1.bf16.msra.mxu0 %v2968
        %3899 = vmatprep.subr.bf16.mxu0 %v2961
        %3900 = vmatpush1.bf16.msra.mxu0 %v2960
        %3901 = vmatprep.subr.bf16.mxu0 %v3081
        %3902 = vmatpush2.bf16.msra.mxu0 %v3080
        %3903 = vmatprep.subr.bf16.mxu0 %v3073
        %3904 = vmatpush2.bf16.msra.mxu0 %v3072
        %3905 = vmatprep.subr.bf16.mxu0 %v3065
        %3906 = vmatpush2.bf16.msra.mxu0 %v3064
        %3907 = vmatprep.subr.bf16.mxu0 %v3057
        %3908 = vmatpush2.bf16.msra.mxu0 %v3056
        %3909 = vmatprep.subr.bf16.mxu0 %v3049
        %3910 = vmatpush2.bf16.msra.mxu0 %v3048
        %3911 = vmatprep.subr.bf16.mxu0 %v3041
        %3912 = vmatpush2.bf16.msra.mxu0 %v3040
        %3913 = vmatprep.subr.bf16.mxu0 %v3033
        %3914 = vmatpush2.bf16.msra.mxu0 %v3032
        %3915 = vmatprep.subr.bf16.mxu0 %v3025
        %3916 = vmatpush2.bf16.msra.mxu0 %v3024
        %3917 = vmatprep.mubr.bf16.mxu0 %v1029
        %3918 = vmatmul.mubr.bf16.gmra.mxu0 %v1028
        %v3919 = vpop.f32.mrf.mxu0
        %v3920 = vadd.f32 %v3879, %v3919
        %v3921 = vpop.f32.mrf.mxu0
        %v3922 = vadd.f32 %v3881, %v3921
        %v3923 = vpop.f32.mrf.mxu0
        %v3924 = vpop.f32.mrf.mxu0
        %3925 = vdwg.mxu0
        %3926 = vmatprep.subr.bf16.mxu0 %v2635
        %3927 = vmatpush1.bf16.msra.mxu0 %v2634
        %3928 = vmatprep.subr.bf16.mxu0 %v2627
        %3929 = vmatpush1.bf16.msra.mxu0 %v2626
        %3930 = vmatprep.subr.bf16.mxu0 %v2619
        %3931 = vmatpush1.bf16.msra.mxu0 %v2618
        %3932 = vmatprep.subr.bf16.mxu0 %v2611
        %3933 = vmatpush1.bf16.msra.mxu0 %v2610
        %3934 = vmatprep.subr.bf16.mxu0 %v2603
        %3935 = vmatpush1.bf16.msra.mxu0 %v2602
        %3936 = vmatprep.subr.bf16.mxu0 %v2595
        %3937 = vmatpush1.bf16.msra.mxu0 %v2594
        %3938 = vmatprep.subr.bf16.mxu0 %v2587
        %3939 = vmatpush1.bf16.msra.mxu0 %v2586
        %3940 = vmatprep.subr.bf16.mxu0 %v2579
        %3941 = vmatpush1.bf16.msra.mxu0 %v2578
        %3942 = vmatprep.subr.bf16.mxu0 %v2699
        %3943 = vmatpush2.bf16.msra.mxu0 %v2698
        %3944 = vmatprep.subr.bf16.mxu0 %v2691
        %3945 = vmatpush2.bf16.msra.mxu0 %v2690
        %3946 = vmatprep.subr.bf16.mxu0 %v2683
        %3947 = vmatpush2.bf16.msra.mxu0 %v2682
        %3948 = vmatprep.subr.bf16.mxu0 %v2675
        %3949 = vmatpush2.bf16.msra.mxu0 %v2674
        %3950 = vmatprep.subr.bf16.mxu0 %v2667
        %3951 = vmatpush2.bf16.msra.mxu0 %v2666
        %3952 = vmatprep.subr.bf16.mxu0 %v2659
        %3953 = vmatpush2.bf16.msra.mxu0 %v2658
        %3954 = vmatprep.subr.bf16.mxu0 %v2651
        %3955 = vmatpush2.bf16.msra.mxu0 %v2650
        %3956 = vmatprep.subr.bf16.mxu0 %v2643
        %3957 = vmatpush2.bf16.msra.mxu0 %v2642
        %3958 = vmatprep.mubr.bf16.mxu0 %v1023
        %3959 = vmatmul.mubr.bf16.gmra.mxu0 %v1022
        %v3960 = vpop.f32.mrf.mxu0
        %v3961 = vadd.f32 0.0, %v3960
        %v3962 = vpop.f32.mrf.mxu0
        %v3963 = vadd.f32 0.0, %v3962
        %v3964 = vpop.f32.mrf.mxu0
        %v3965 = vpop.f32.mrf.mxu0
        %3966 = vdwg.mxu0
        %3967 = vmatprep.subr.bf16.mxu0 %v2763
        %3968 = vmatpush1.bf16.msra.mxu0 %v2762
        %3969 = vmatprep.subr.bf16.mxu0 %v2755
        %3970 = vmatpush1.bf16.msra.mxu0 %v2754
        %3971 = vmatprep.subr.bf16.mxu0 %v2747
        %3972 = vmatpush1.bf16.msra.mxu0 %v2746
        %3973 = vmatprep.subr.bf16.mxu0 %v2739
        %3974 = vmatpush1.bf16.msra.mxu0 %v2738
        %3975 = vmatprep.subr.bf16.mxu0 %v2731
        %3976 = vmatpush1.bf16.msra.mxu0 %v2730
        %3977 = vmatprep.subr.bf16.mxu0 %v2723
        %3978 = vmatpush1.bf16.msra.mxu0 %v2722
        %3979 = vmatprep.subr.bf16.mxu0 %v2715
        %3980 = vmatpush1.bf16.msra.mxu0 %v2714
        %3981 = vmatprep.subr.bf16.mxu0 %v2707
        %3982 = vmatpush1.bf16.msra.mxu0 %v2706
        %3983 = vmatprep.subr.bf16.mxu0 %v2827
        %3984 = vmatpush2.bf16.msra.mxu0 %v2826
        %3985 = vmatprep.subr.bf16.mxu0 %v2819
        %3986 = vmatpush2.bf16.msra.mxu0 %v2818
        %3987 = vmatprep.subr.bf16.mxu0 %v2811
        %3988 = vmatpush2.bf16.msra.mxu0 %v2810
        %3989 = vmatprep.subr.bf16.mxu0 %v2803
        %3990 = vmatpush2.bf16.msra.mxu0 %v2802
        %3991 = vmatprep.subr.bf16.mxu0 %v2795
        %3992 = vmatpush2.bf16.msra.mxu0 %v2794
        %3993 = vmatprep.subr.bf16.mxu0 %v2787
        %3994 = vmatpush2.bf16.msra.mxu0 %v2786
        %3995 = vmatprep.subr.bf16.mxu0 %v2779
        %3996 = vmatpush2.bf16.msra.mxu0 %v2778
        %3997 = vmatprep.subr.bf16.mxu0 %v2771
        %3998 = vmatpush2.bf16.msra.mxu0 %v2770
        %3999 = vmatprep.mubr.bf16.mxu0 %v1025
        %4000 = vmatmul.mubr.bf16.gmra.mxu0 %v1024
        %v4001 = vpop.f32.mrf.mxu0
        %v4002 = vadd.f32 %v3961, %v4001
        %v4003 = vpop.f32.mrf.mxu0
        %v4004 = vadd.f32 %v3963, %v4003
        %v4005 = vpop.f32.mrf.mxu0
        %v4006 = vpop.f32.mrf.mxu0
        %4007 = vdwg.mxu0
        %4008 = vmatprep.subr.bf16.mxu0 %v2891
        %4009 = vmatpush1.bf16.msra.mxu0 %v2890
        %4010 = vmatprep.subr.bf16.mxu0 %v2883
        %4011 = vmatpush1.bf16.msra.mxu0 %v2882
        %4012 = vmatprep.subr.bf16.mxu0 %v2875
        %4013 = vmatpush1.bf16.msra.mxu0 %v2874
        %4014 = vmatprep.subr.bf16.mxu0 %v2867
        %4015 = vmatpush1.bf16.msra.mxu0 %v2866
        %4016 = vmatprep.subr.bf16.mxu0 %v2859
        %4017 = vmatpush1.bf16.msra.mxu0 %v2858
        %4018 = vmatprep.subr.bf16.mxu0 %v2851
        %4019 = vmatpush1.bf16.msra.mxu0 %v2850
        %4020 = vmatprep.subr.bf16.mxu0 %v2843
        %4021 = vmatpush1.bf16.msra.mxu0 %v2842
        %4022 = vmatprep.subr.bf16.mxu0 %v2835
        %4023 = vmatpush1.bf16.msra.mxu0 %v2834
        %4024 = vmatprep.subr.bf16.mxu0 %v2955
        %4025 = vmatpush2.bf16.msra.mxu0 %v2954
        %4026 = vmatprep.subr.bf16.mxu0 %v2947
        %4027 = vmatpush2.bf16.msra.mxu0 %v2946
        %4028 = vmatprep.subr.bf16.mxu0 %v2939
        %4029 = vmatpush2.bf16.msra.mxu0 %v2938
        %4030 = vmatprep.subr.bf16.mxu0 %v2931
        %4031 = vmatpush2.bf16.msra.mxu0 %v2930
        %4032 = vmatprep.subr.bf16.mxu0 %v2923
        %4033 = vmatpush2.bf16.msra.mxu0 %v2922
        %4034 = vmatprep.subr.bf16.mxu0 %v2915
        %4035 = vmatpush2.bf16.msra.mxu0 %v2914
        %4036 = vmatprep.subr.bf16.mxu0 %v2907
        %4037 = vmatpush2.bf16.msra.mxu0 %v2906
        %4038 = vmatprep.subr.bf16.mxu0 %v2899
        %4039 = vmatpush2.bf16.msra.mxu0 %v2898
        %4040 = vmatprep.mubr.bf16.mxu0 %v1027
        %4041 = vmatmul.mubr.bf16.gmra.mxu0 %v1026
        %v4042 = vpop.f32.mrf.mxu0
        %v4043 = vadd.f32 %v4002, %v4042
        %v4044 = vpop.f32.mrf.mxu0
        %v4045 = vadd.f32 %v4004, %v4044
        %v4046 = vpop.f32.mrf.mxu0
        %v4047 = vpop.f32.mrf.mxu0
        %4048 = vdwg.mxu0
        %4049 = vmatprep.subr.bf16.mxu0 %v3019
        %4050 = vmatpush1.bf16.msra.mxu0 %v3018
        %4051 = vmatprep.subr.bf16.mxu0 %v3011
        %4052 = vmatpush1.bf16.msra.mxu0 %v3010
        %4053 = vmatprep.subr.bf16.mxu0 %v3003
        %4054 = vmatpush1.bf16.msra.mxu0 %v3002
        %4055 = vmatprep.subr.bf16.mxu0 %v2995
        %4056 = vmatpush1.bf16.msra.mxu0 %v2994
        %4057 = vmatprep.subr.bf16.mxu0 %v2987
        %4058 = vmatpush1.bf16.msra.mxu0 %v2986
        %4059 = vmatprep.subr.bf16.mxu0 %v2979
        %4060 = vmatpush1.bf16.msra.mxu0 %v2978
        %4061 = vmatprep.subr.bf16.mxu0 %v2971
        %4062 = vmatpush1.bf16.msra.mxu0 %v2970
        %4063 = vmatprep.subr.bf16.mxu0 %v2963
        %4064 = vmatpush1.bf16.msra.mxu0 %v2962
        %4065 = vmatprep.subr.bf16.mxu0 %v3083
        %4066 = vmatpush2.bf16.msra.mxu0 %v3082
        %4067 = vmatprep.subr.bf16.mxu0 %v3075
        %4068 = vmatpush2.bf16.msra.mxu0 %v3074
        %4069 = vmatprep.subr.bf16.mxu0 %v3067
        %4070 = vmatpush2.bf16.msra.mxu0 %v3066
        %4071 = vmatprep.subr.bf16.mxu0 %v3059
        %4072 = vmatpush2.bf16.msra.mxu0 %v3058
        %4073 = vmatprep.subr.bf16.mxu0 %v3051
        %4074 = vmatpush2.bf16.msra.mxu0 %v3050
        %4075 = vmatprep.subr.bf16.mxu0 %v3043
        %4076 = vmatpush2.bf16.msra.mxu0 %v3042
        %4077 = vmatprep.subr.bf16.mxu0 %v3035
        %4078 = vmatpush2.bf16.msra.mxu0 %v3034
        %4079 = vmatprep.subr.bf16.mxu0 %v3027
        %4080 = vmatpush2.bf16.msra.mxu0 %v3026
        %4081 = vmatprep.mubr.bf16.mxu0 %v1029
        %4082 = vmatmul.mubr.bf16.gmra.mxu0 %v1028
        %v4083 = vpop.f32.mrf.mxu0
        %v4084 = vadd.f32 %v4043, %v4083
        %v4085 = vpop.f32.mrf.mxu0
        %v4086 = vadd.f32 %v4045, %v4085
        %v4087 = vpop.f32.mrf.mxu0
        %v4088 = vpop.f32.mrf.mxu0
        %4089 = vdwg.mxu0
        %4090 = vmatprep.subr.bf16.mxu0 %v2637
        %4091 = vmatpush1.bf16.msra.mxu0 %v2636
        %4092 = vmatprep.subr.bf16.mxu0 %v2629
        %4093 = vmatpush1.bf16.msra.mxu0 %v2628
        %4094 = vmatprep.subr.bf16.mxu0 %v2621
        %4095 = vmatpush1.bf16.msra.mxu0 %v2620
        %4096 = vmatprep.subr.bf16.mxu0 %v2613
        %4097 = vmatpush1.bf16.msra.mxu0 %v2612
        %4098 = vmatprep.subr.bf16.mxu0 %v2605
        %4099 = vmatpush1.bf16.msra.mxu0 %v2604
        %4100 = vmatprep.subr.bf16.mxu0 %v2597
        %4101 = vmatpush1.bf16.msra.mxu0 %v2596
        %4102 = vmatprep.subr.bf16.mxu0 %v2589
        %4103 = vmatpush1.bf16.msra.mxu0 %v2588
        %4104 = vmatprep.subr.bf16.mxu0 %v2581
        %4105 = vmatpush1.bf16.msra.mxu0 %v2580
        %4106 = vmatprep.subr.bf16.mxu0 %v2701
        %4107 = vmatpush2.bf16.msra.mxu0 %v2700
        %4108 = vmatprep.subr.bf16.mxu0 %v2693
        %4109 = vmatpush2.bf16.msra.mxu0 %v2692
        %4110 = vmatprep.subr.bf16.mxu0 %v2685
        %4111 = vmatpush2.bf16.msra.mxu0 %v2684
        %4112 = vmatprep.subr.bf16.mxu0 %v2677
        %4113 = vmatpush2.bf16.msra.mxu0 %v2676
        %4114 = vmatprep.subr.bf16.mxu0 %v2669
        %4115 = vmatpush2.bf16.msra.mxu0 %v2668
        %4116 = vmatprep.subr.bf16.mxu0 %v2661
        %4117 = vmatpush2.bf16.msra.mxu0 %v2660
        %4118 = vmatprep.subr.bf16.mxu0 %v2653
        %4119 = vmatpush2.bf16.msra.mxu0 %v2652
        %4120 = vmatprep.subr.bf16.mxu0 %v2645
        %4121 = vmatpush2.bf16.msra.mxu0 %v2644
        %4122 = vmatprep.mubr.bf16.mxu0 %v1023
        %4123 = vmatmul.mubr.bf16.gmra.mxu0 %v1022
        %v4124 = vpop.f32.mrf.mxu0
        %v4125 = vadd.f32 0.0, %v4124
        %v4126 = vpop.f32.mrf.mxu0
        %v4127 = vadd.f32 0.0, %v4126
        %v4128 = vpop.f32.mrf.mxu0
        %v4129 = vpop.f32.mrf.mxu0
        %4130 = vdwg.mxu0
        %4131 = vmatprep.subr.bf16.mxu0 %v2765
        %4132 = vmatpush1.bf16.msra.mxu0 %v2764
        %4133 = vmatprep.subr.bf16.mxu0 %v2757
        %4134 = vmatpush1.bf16.msra.mxu0 %v2756
        %4135 = vmatprep.subr.bf16.mxu0 %v2749
        %4136 = vmatpush1.bf16.msra.mxu0 %v2748
        %4137 = vmatprep.subr.bf16.mxu0 %v2741
        %4138 = vmatpush1.bf16.msra.mxu0 %v2740
        %4139 = vmatprep.subr.bf16.mxu0 %v2733
        %4140 = vmatpush1.bf16.msra.mxu0 %v2732
        %4141 = vmatprep.subr.bf16.mxu0 %v2725
        %4142 = vmatpush1.bf16.msra.mxu0 %v2724
        %4143 = vmatprep.subr.bf16.mxu0 %v2717
        %4144 = vmatpush1.bf16.msra.mxu0 %v2716
        %4145 = vmatprep.subr.bf16.mxu0 %v2709
        %4146 = vmatpush1.bf16.msra.mxu0 %v2708
        %4147 = vmatprep.subr.bf16.mxu0 %v2829
        %4148 = vmatpush2.bf16.msra.mxu0 %v2828
        %4149 = vmatprep.subr.bf16.mxu0 %v2821
        %4150 = vmatpush2.bf16.msra.mxu0 %v2820
        %4151 = vmatprep.subr.bf16.mxu0 %v2813
        %4152 = vmatpush2.bf16.msra.mxu0 %v2812
        %4153 = vmatprep.subr.bf16.mxu0 %v2805
        %4154 = vmatpush2.bf16.msra.mxu0 %v2804
        %4155 = vmatprep.subr.bf16.mxu0 %v2797
        %4156 = vmatpush2.bf16.msra.mxu0 %v2796
        %4157 = vmatprep.subr.bf16.mxu0 %v2789
        %4158 = vmatpush2.bf16.msra.mxu0 %v2788
        %4159 = vmatprep.subr.bf16.mxu0 %v2781
        %4160 = vmatpush2.bf16.msra.mxu0 %v2780
        %4161 = vmatprep.subr.bf16.mxu0 %v2773
        %4162 = vmatpush2.bf16.msra.mxu0 %v2772
        %4163 = vmatprep.mubr.bf16.mxu0 %v1025
        %4164 = vmatmul.mubr.bf16.gmra.mxu0 %v1024
        %v4165 = vpop.f32.mrf.mxu0
        %v4166 = vadd.f32 %v4125, %v4165
        %v4167 = vpop.f32.mrf.mxu0
        %v4168 = vadd.f32 %v4127, %v4167
        %v4169 = vpop.f32.mrf.mxu0
        %v4170 = vpop.f32.mrf.mxu0
        %4171 = vdwg.mxu0
        %4172 = vmatprep.subr.bf16.mxu0 %v2893
        %4173 = vmatpush1.bf16.msra.mxu0 %v2892
        %4174 = vmatprep.subr.bf16.mxu0 %v2885
        %4175 = vmatpush1.bf16.msra.mxu0 %v2884
        %4176 = vmatprep.subr.bf16.mxu0 %v2877
        %4177 = vmatpush1.bf16.msra.mxu0 %v2876
        %4178 = vmatprep.subr.bf16.mxu0 %v2869
        %4179 = vmatpush1.bf16.msra.mxu0 %v2868
        %4180 = vmatprep.subr.bf16.mxu0 %v2861
        %4181 = vmatpush1.bf16.msra.mxu0 %v2860
        %4182 = vmatprep.subr.bf16.mxu0 %v2853
        %4183 = vmatpush1.bf16.msra.mxu0 %v2852
        %4184 = vmatprep.subr.bf16.mxu0 %v2845
        %4185 = vmatpush1.bf16.msra.mxu0 %v2844
        %4186 = vmatprep.subr.bf16.mxu0 %v2837
        %4187 = vmatpush1.bf16.msra.mxu0 %v2836
        %4188 = vmatprep.subr.bf16.mxu0 %v2957
        %4189 = vmatpush2.bf16.msra.mxu0 %v2956
        %4190 = vmatprep.subr.bf16.mxu0 %v2949
        %4191 = vmatpush2.bf16.msra.mxu0 %v2948
        %4192 = vmatprep.subr.bf16.mxu0 %v2941
        %4193 = vmatpush2.bf16.msra.mxu0 %v2940
        %4194 = vmatprep.subr.bf16.mxu0 %v2933
        %4195 = vmatpush2.bf16.msra.mxu0 %v2932
        %4196 = vmatprep.subr.bf16.mxu0 %v2925
        %4197 = vmatpush2.bf16.msra.mxu0 %v2924
        %4198 = vmatprep.subr.bf16.mxu0 %v2917
        %4199 = vmatpush2.bf16.msra.mxu0 %v2916
        %4200 = vmatprep.subr.bf16.mxu0 %v2909
        %4201 = vmatpush2.bf16.msra.mxu0 %v2908
        %4202 = vmatprep.subr.bf16.mxu0 %v2901
        %4203 = vmatpush2.bf16.msra.mxu0 %v2900
        %4204 = vmatprep.mubr.bf16.mxu0 %v1027
        %4205 = vmatmul.mubr.bf16.gmra.mxu0 %v1026
        %v4206 = vpop.f32.mrf.mxu0
        %v4207 = vadd.f32 %v4166, %v4206
        %v4208 = vpop.f32.mrf.mxu0
        %v4209 = vadd.f32 %v4168, %v4208
        %v4210 = vpop.f32.mrf.mxu0
        %v4211 = vpop.f32.mrf.mxu0
        %4212 = vdwg.mxu0
        %4213 = vmatprep.subr.bf16.mxu0 %v3021
        %4214 = vmatpush1.bf16.msra.mxu0 %v3020
        %4215 = vmatprep.subr.bf16.mxu0 %v3013
        %4216 = vmatpush1.bf16.msra.mxu0 %v3012
        %4217 = vmatprep.subr.bf16.mxu0 %v3005
        %4218 = vmatpush1.bf16.msra.mxu0 %v3004
        %4219 = vmatprep.subr.bf16.mxu0 %v2997
        %4220 = vmatpush1.bf16.msra.mxu0 %v2996
        %4221 = vmatprep.subr.bf16.mxu0 %v2989
        %4222 = vmatpush1.bf16.msra.mxu0 %v2988
        %4223 = vmatprep.subr.bf16.mxu0 %v2981
        %4224 = vmatpush1.bf16.msra.mxu0 %v2980
        %4225 = vmatprep.subr.bf16.mxu0 %v2973
        %4226 = vmatpush1.bf16.msra.mxu0 %v2972
        %4227 = vmatprep.subr.bf16.mxu0 %v2965
        %4228 = vmatpush1.bf16.msra.mxu0 %v2964
        %4229 = vmatprep.subr.bf16.mxu0 %v3085
        %4230 = vmatpush2.bf16.msra.mxu0 %v3084
        %4231 = vmatprep.subr.bf16.mxu0 %v3077
        %4232 = vmatpush2.bf16.msra.mxu0 %v3076
        %4233 = vmatprep.subr.bf16.mxu0 %v3069
        %4234 = vmatpush2.bf16.msra.mxu0 %v3068
        %4235 = vmatprep.subr.bf16.mxu0 %v3061
        %4236 = vmatpush2.bf16.msra.mxu0 %v3060
        %4237 = vmatprep.subr.bf16.mxu0 %v3053
        %4238 = vmatpush2.bf16.msra.mxu0 %v3052
        %4239 = vmatprep.subr.bf16.mxu0 %v3045
        %4240 = vmatpush2.bf16.msra.mxu0 %v3044
        %4241 = vmatprep.subr.bf16.mxu0 %v3037
        %4242 = vmatpush2.bf16.msra.mxu0 %v3036
        %4243 = vmatprep.subr.bf16.mxu0 %v3029
        %4244 = vmatpush2.bf16.msra.mxu0 %v3028
        %4245 = vmatprep.mubr.bf16.mxu0 %v1029
        %4246 = vmatmul.mubr.bf16.gmra.mxu0 %v1028
        %v4247 = vpop.f32.mrf.mxu0
        %v4248 = vadd.f32 %v4207, %v4247
        %v4249 = vpop.f32.mrf.mxu0
        %v4250 = vadd.f32 %v4209, %v4249
        %v4251 = vpop.f32.mrf.mxu0
        %v4252 = vpop.f32.mrf.mxu0
        %4253 = vdwg.mxu0
        %v4254 = vadd.f32 %v486, %v3756
        %v4255 = vadd.f32 %v487, %v3758
        %v4256 = vadd.f32 %v488, %v3920
        %v4257 = vadd.f32 %v489, %v3922
        %v4258 = vadd.f32 %v490, %v4084
        %v4259 = vadd.f32 %v491, %v4086
        %v4260 = vadd.f32 %v492, %v4248
        %v4261 = vadd.f32 %v493, %v4250
        %4262 = vst [vmem:[#allocation2] sm:$0xff] %v4254
        %4263 = vst [vmem:[#allocation2 + $0x8] sm:$0xff] %v4255
        %4264 = vst [vmem:[#allocation2 + $0x10] sm:$0xff] %v4256
        %4265 = vst [vmem:[#allocation2 + $0x18] sm:$0xff] %v4257
        %4266 = vst [vmem:[#allocation2 + $0x20] sm:$0xff] %v4258
        %4267 = vst [vmem:[#allocation2 + $0x28] sm:$0xff] %v4259
        %4268 = vst [vmem:[#allocation2 + $0x30] sm:$0xff] %v4260
        %4269 = vst [vmem:[#allocation2 + $0x38] sm:$0xff] %v4261
        %p4270 = scmp.eq.s32.totalorder %s30, 2
        // Predicated region
        $region97: #{tpu_custom_call.1} parent=55 // pred_check
          %p4271 = pneg %p4270
        $region98: #{tpu_custom_call.1} parent=55 // pred_check_branch
          %4273 = sbr.rel (%p4271) target = $region100
        $region99: #{tpu_custom_call.1} parent=55 // pred_region
          %v4274 = vld [vmem:[#allocation2] sm:$0xff]
          %v4275 = vld [vmem:[#allocation2 + $0x8] sm:$0xff]
          %v4276 = vld [vmem:[#allocation2 + $0x10] sm:$0xff]
          %v4277 = vld [vmem:[#allocation2 + $0x18] sm:$0xff]
          %v4278 = vld [vmem:[#allocation2 + $0x20] sm:$0xff]
          %v4279 = vld [vmem:[#allocation2 + $0x28] sm:$0xff]
          %v4280 = vld [vmem:[#allocation2 + $0x30] sm:$0xff]
          %v4281 = vld [vmem:[#allocation2 + $0x38] sm:$0xff]
          %v4282 = vld [vmem:[#allocation8] ss:$2 sm:$0xff]
          %s4283 = scalar_lea.vmem [#allocation8], 1
          %v4284 = vld [vmem:[%s4283] ss:$2 sm:$0xff]
          %v4285 = vrot.slane %v4274, 4
          %v4286 = vadd.f32 %v4274, %v4285
          %v4287 = vrot.slane %v4286, 2
          %v4288 = vadd.f32 %v4286, %v4287
          %v4289 = vrot.slane %v4288, 1
          %v4290 = vadd.f32 %v4288, %v4289
          %v4291 = vrot.slane %v4275, 4
          %v4292 = vadd.f32 %v4275, %v4291
          %v4293 = vrot.slane %v4292, 2
          %v4294 = vadd.f32 %v4292, %v4293
          %v4295 = vrot.slane %v4294, 1
          %v4296 = vadd.f32 %v4294, %v4295
          %v4297 = vrot.slane %v4276, 4
          %v4298 = vadd.f32 %v4276, %v4297
          %v4299 = vrot.slane %v4298, 2
          %v4300 = vadd.f32 %v4298, %v4299
          %v4301 = vrot.slane %v4300, 1
          %v4302 = vadd.f32 %v4300, %v4301
          %v4303 = vrot.slane %v4277, 4
          %v4304 = vadd.f32 %v4277, %v4303
          %v4305 = vrot.slane %v4304, 2
          %v4306 = vadd.f32 %v4304, %v4305
          %v4307 = vrot.slane %v4306, 1
          %v4308 = vadd.f32 %v4306, %v4307
          %v4309 = vrot.slane %v4278, 4
          %v4310 = vadd.f32 %v4278, %v4309
          %v4311 = vrot.slane %v4310, 2
          %v4312 = vadd.f32 %v4310, %v4311
          %v4313 = vrot.slane %v4312, 1
          %v4314 = vadd.f32 %v4312, %v4313
          %v4315 = vrot.slane %v4279, 4
          %v4316 = vadd.f32 %v4279, %v4315
          %v4317 = vrot.slane %v4316, 2
          %v4318 = vadd.f32 %v4316, %v4317
          %v4319 = vrot.slane %v4318, 1
          %v4320 = vadd.f32 %v4318, %v4319
          %v4321 = vrot.slane %v4280, 4
          %v4322 = vadd.f32 %v4280, %v4321
          %v4323 = vrot.slane %v4322, 2
          %v4324 = vadd.f32 %v4322, %v4323
          %v4325 = vrot.slane %v4324, 1
          %v4326 = vadd.f32 %v4324, %v4325
          %v4327 = vrot.slane %v4281, 4
          %v4328 = vadd.f32 %v4281, %v4327
          %v4329 = vrot.slane %v4328, 2
          %v4330 = vadd.f32 %v4328, %v4329
          %v4331 = vrot.slane %v4330, 1
          %v4332 = vadd.f32 %v4330, %v4331
          %v4333 = vrcp.pop 8.0
          %v4334 = vmul.f32 %v4290, %v4333
          %v4335 = vmul.f32 %v4296, %v4333
          %v4336 = vmul.f32 %v4302, %v4333
          %v4337 = vmul.f32 %v4308, %v4333
          %v4338 = vmul.f32 %v4314, %v4333
          %v4339 = vmul.f32 %v4320, %v4333
          %v4340 = vmul.f32 %v4326, %v4333
          %v4341 = vmul.f32 %v4332, %v4333
          %v4342 = vsub.f32 %v4274, %v4334
          %v4343 = vsub.f32 %v4275, %v4335
          %v4344 = vsub.f32 %v4276, %v4336
          %v4345 = vsub.f32 %v4277, %v4337
          %v4346 = vsub.f32 %v4278, %v4338
          %v4347 = vsub.f32 %v4279, %v4339
          %v4348 = vsub.f32 %v4280, %v4340
          %v4349 = vsub.f32 %v4281, %v4341
          %v4350 = vmul.f32 %v4342, %v4342
          %v4351 = vmul.f32 %v4343, %v4343
          %v4352 = vmul.f32 %v4344, %v4344
          %v4353 = vmul.f32 %v4345, %v4345
          %v4354 = vmul.f32 %v4346, %v4346
          %v4355 = vmul.f32 %v4347, %v4347
          %v4356 = vmul.f32 %v4348, %v4348
          %v4357 = vmul.f32 %v4349, %v4349
          %v4358 = vrot.slane %v4350, 4
          %v4359 = vadd.f32 %v4350, %v4358
          %v4360 = vrot.slane %v4359, 2
          %v4361 = vadd.f32 %v4359, %v4360
          %v4362 = vrot.slane %v4361, 1
          %v4363 = vadd.f32 %v4361, %v4362
          %v4364 = vrot.slane %v4351, 4
          %v4365 = vadd.f32 %v4351, %v4364
          %v4366 = vrot.slane %v4365, 2
          %v4367 = vadd.f32 %v4365, %v4366
          %v4368 = vrot.slane %v4367, 1
          %v4369 = vadd.f32 %v4367, %v4368
          %v4370 = vrot.slane %v4352, 4
          %v4371 = vadd.f32 %v4352, %v4370
          %v4372 = vrot.slane %v4371, 2
          %v4373 = vadd.f32 %v4371, %v4372
          %v4374 = vrot.slane %v4373, 1
          %v4375 = vadd.f32 %v4373, %v4374
          %v4376 = vrot.slane %v4353, 4
          %v4377 = vadd.f32 %v4353, %v4376
          %v4378 = vrot.slane %v4377, 2
          %v4379 = vadd.f32 %v4377, %v4378
          %v4380 = vrot.slane %v4379, 1
          %v4381 = vadd.f32 %v4379, %v4380
          %v4382 = vrot.slane %v4354, 4
          %v4383 = vadd.f32 %v4354, %v4382
          %v4384 = vrot.slane %v4383, 2
          %v4385 = vadd.f32 %v4383, %v4384
          %v4386 = vrot.slane %v4385, 1
          %v4387 = vadd.f32 %v4385, %v4386
          %v4388 = vrot.slane %v4355, 4
          %v4389 = vadd.f32 %v4355, %v4388
          %v4390 = vrot.slane %v4389, 2
          %v4391 = vadd.f32 %v4389, %v4390
          %v4392 = vrot.slane %v4391, 1
          %v4393 = vadd.f32 %v4391, %v4392
          %v4394 = vrot.slane %v4356, 4
          %v4395 = vadd.f32 %v4356, %v4394
          %v4396 = vrot.slane %v4395, 2
          %v4397 = vadd.f32 %v4395, %v4396
          %v4398 = vrot.slane %v4397, 1
          %v4399 = vadd.f32 %v4397, %v4398
          %v4400 = vrot.slane %v4357, 4
          %v4401 = vadd.f32 %v4357, %v4400
          %v4402 = vrot.slane %v4401, 2
          %v4403 = vadd.f32 %v4401, %v4402
          %v4404 = vrot.slane %v4403, 1
          %v4405 = vadd.f32 %v4403, %v4404
          %v4406 = vmul.f32 %v4363, %v4333
          %v4407 = vmul.f32 %v4369, %v4333
          %v4408 = vmul.f32 %v4375, %v4333
          %v4409 = vmul.f32 %v4381, %v4333
          %v4410 = vmul.f32 %v4387, %v4333
          %v4411 = vmul.f32 %v4393, %v4333
          %v4412 = vmul.f32 %v4399, %v4333
          %v4413 = vmul.f32 %v4405, %v4333
          %v4414 = vadd.f32 %v4406, 1e-05
          %v4415 = vadd.f32 %v4407, 1e-05
          %v4416 = vadd.f32 %v4408, 1e-05
          %v4417 = vadd.f32 %v4409, 1e-05
          %v4418 = vadd.f32 %v4410, 1e-05
          %v4419 = vadd.f32 %v4411, 1e-05
          %v4420 = vadd.f32 %v4412, 1e-05
          %v4421 = vadd.f32 %v4413, 1e-05
          %v4422 = vrsqrt.pop %v4414
          %v4423 = vrsqrt.pop %v4415
          %v4424 = vrsqrt.pop %v4416
          %v4425 = vrsqrt.pop %v4417
          %v4426 = vrsqrt.pop %v4418
          %v4427 = vrsqrt.pop %v4419
          %v4428 = vrsqrt.pop %v4420
          %v4429 = vrsqrt.pop %v4421
          %v4438 = vcombine.low %v4422, %v4423
          %v4439 = vcombine.low %v4424, %v4425
          %v4440 = vcombine.low %v4426, %v4427
          %v4441 = vcombine.low %v4428, %v4429
          %v4443 = vunpack.c.l.s4 1966171168
          %v4444 = vunpack.c.0.s8 %v4443
          %v4445 = vlaneseq
          %v4446 = vshrl.u32 %v4445, 7
          %v4447 = vsub.s32 %v4444, %v4446
          %v4448 = vrot.slane %v4438, %v4447
          %v4450 = vunpack.c.l.s4 1966171168
          %v4451 = vunpack.c.0.s8 %v4450
          %v4452 = vlaneseq
          %v4453 = vshrl.u32 %v4452, 7
          %v4454 = vsub.s32 %v4451, %v4453
          %v4455 = vrot.slane %v4439, %v4454
          %v4457 = vunpack.c.l.s4 1966171168
          %v4458 = vunpack.c.0.s8 %v4457
          %v4459 = vlaneseq
          %v4460 = vshrl.u32 %v4459, 7
          %v4461 = vsub.s32 %v4458, %v4460
          %v4462 = vrot.slane %v4440, %v4461
          %v4464 = vunpack.c.l.s4 1966171168
          %v4465 = vunpack.c.0.s8 %v4464
          %v4466 = vlaneseq
          %v4467 = vshrl.u32 %v4466, 7
          %v4468 = vsub.s32 %v4465, %v4467
          %v4469 = vrot.slane %v4441, %v4468
          %v4470 = vcombine.low %v4448, %v4455
          %v4471 = vcombine.low %v4462, %v4469
          %v4473 = vunpack.c.l.s4 1966171168
          %v4474 = vunpack.c.0.s8 %v4473
          %v4475 = vlaneseq
          %v4476 = vshrl.u32 %v4475, 7
          %v4477 = vsub.s32 %v4474, %v4476
          %v4478 = vrot.slane %v4470, %v4477
          %v4480 = vunpack.c.l.s4 1966171168
          %v4481 = vunpack.c.0.s8 %v4480
          %v4482 = vlaneseq
          %v4483 = vshrl.u32 %v4482, 7
          %v4484 = vsub.s32 %v4481, %v4483
          %v4485 = vrot.slane %v4471, %v4484
          %v4486 = vcombine.low %v4478, %v4485
          %v4488 = vmul.f32 %v4282, %v4486
          %v4490 = vlaneseq
          %v4491 = vshrl.u32 %v4490, 7
          %v4492 = vsub.s32 0, %v4491
          %v4493 = vrot.slane %v4488, %v4492
          %v4494 = vlaneseq
          %v4495 = vshrl.u32 %v4494, 7
          %v4496 = vsub.s32 1, %v4495
          %v4497 = vrot.slane %v4488, %v4496
          %v4498 = vlaneseq
          %v4499 = vshrl.u32 %v4498, 7
          %v4500 = vsub.s32 2, %v4499
          %v4501 = vrot.slane %v4488, %v4500
          %v4502 = vlaneseq
          %v4503 = vshrl.u32 %v4502, 7
          %v4504 = vsub.s32 3, %v4503
          %v4505 = vrot.slane %v4488, %v4504
          %v4506 = vlaneseq
          %v4507 = vshrl.u32 %v4506, 7
          %v4508 = vsub.s32 4, %v4507
          %v4509 = vrot.slane %v4488, %v4508
          %v4510 = vlaneseq
          %v4511 = vshrl.u32 %v4510, 7
          %v4512 = vsub.s32 5, %v4511
          %v4513 = vrot.slane %v4488, %v4512
          %v4514 = vlaneseq
          %v4515 = vshrl.u32 %v4514, 7
          %v4516 = vsub.s32 6, %v4515
          %v4517 = vrot.slane %v4488, %v4516
          %v4518 = vlaneseq
          %v4519 = vshrl.u32 %v4518, 7
          %v4520 = vsub.s32 7, %v4519
          %v4521 = vrot.slane %v4488, %v4520
          %v4530 = vmul.f32 %v4342, %v4493
          %v4531 = vmul.f32 %v4343, %v4497
          %v4532 = vmul.f32 %v4344, %v4501
          %v4533 = vmul.f32 %v4345, %v4505
          %v4534 = vmul.f32 %v4346, %v4509
          %v4535 = vmul.f32 %v4347, %v4513
          %v4536 = vmul.f32 %v4348, %v4517
          %v4537 = vmul.f32 %v4349, %v4521
          %v4539 = vlaneseq
          %v4540 = vshrl.u32 %v4539, 7
          %v4541 = vsub.s32 0, %v4540
          %v4542 = vrot.slane %v4284, %v4541
          %v4543 = vlaneseq
          %v4544 = vshrl.u32 %v4543, 7
          %v4545 = vsub.s32 1, %v4544
          %v4546 = vrot.slane %v4284, %v4545
          %v4547 = vlaneseq
          %v4548 = vshrl.u32 %v4547, 7
          %v4549 = vsub.s32 2, %v4548
          %v4550 = vrot.slane %v4284, %v4549
          %v4551 = vlaneseq
          %v4552 = vshrl.u32 %v4551, 7
          %v4553 = vsub.s32 3, %v4552
          %v4554 = vrot.slane %v4284, %v4553
          %v4555 = vlaneseq
          %v4556 = vshrl.u32 %v4555, 7
          %v4557 = vsub.s32 4, %v4556
          %v4558 = vrot.slane %v4284, %v4557
          %v4559 = vlaneseq
          %v4560 = vshrl.u32 %v4559, 7
          %v4561 = vsub.s32 5, %v4560
          %v4562 = vrot.slane %v4284, %v4561
          %v4563 = vlaneseq
          %v4564 = vshrl.u32 %v4563, 7
          %v4565 = vsub.s32 6, %v4564
          %v4566 = vrot.slane %v4284, %v4565
          %v4567 = vlaneseq
          %v4568 = vshrl.u32 %v4567, 7
          %v4569 = vsub.s32 7, %v4568
          %v4570 = vrot.slane %v4284, %v4569
          %v4579 = vadd.f32 %v4530, %v4542
          %v4580 = vadd.f32 %v4531, %v4546
          %v4581 = vadd.f32 %v4532, %v4550
          %v4582 = vadd.f32 %v4533, %v4554
          %v4583 = vadd.f32 %v4534, %v4558
          %v4584 = vadd.f32 %v4535, %v4562
          %v4585 = vadd.f32 %v4536, %v4566
          %v4586 = vadd.f32 %v4537, %v4570
          %v4587 = vmax.f32 %v4579, 0.0
          %v4588 = vmax.f32 %v4580, 0.0
          %v4589 = vmax.f32 %v4581, 0.0
          %v4590 = vmax.f32 %v4582, 0.0
          %v4591 = vmax.f32 %v4583, 0.0
          %v4592 = vmax.f32 %v4584, 0.0
          %v4593 = vmax.f32 %v4585, 0.0
          %v4594 = vmax.f32 %v4586, 0.0
          %v4595 = vpack.c.bf16 %v4587, %v4587
          %v4596 = vpack.c.bf16 %v4588, %v4588
          %v4597 = vpack.c.bf16 %v4589, %v4589
          %v4598 = vpack.c.bf16 %v4590, %v4590
          %v4599 = vpack.c.bf16 %v4591, %v4591
          %v4600 = vpack.c.bf16 %v4592, %v4592
          %v4601 = vpack.c.bf16 %v4593, %v4593
          %v4602 = vpack.c.bf16 %v4594, %v4594
          %v4603 = vld [vmem:[#allocation9] sm:$0xff]
          %v4604 = vld [vmem:[#allocation9 + $0x8] sm:$0xff]
          %v4605 = vld [vmem:[#allocation9 + $0x10] sm:$0xff]
          %v4606 = vld [vmem:[#allocation9 + $0x18] sm:$0xff]
          %v4607 = vld [vmem:[#allocation9 + $0x20] sm:$0xff]
          %v4608 = vld [vmem:[#allocation9 + $0x28] sm:$0xff]
          %v4609 = vld [vmem:[#allocation9 + $0x30] sm:$0xff]
          %v4610 = vld [vmem:[#allocation9 + $0x38] sm:$0xff]
          %v4611 = vld [vmem:[#allocation9 + $0x40] sm:$0xff]
          %v4612 = vld [vmem:[#allocation9 + $0x48] sm:$0xff]
          %v4613 = vld [vmem:[#allocation9 + $0x50] sm:$0xff]
          %v4614 = vld [vmem:[#allocation9 + $0x58] sm:$0xff]
          %v4615 = vld [vmem:[#allocation9 + $0x60] sm:$0xff]
          %v4616 = vld [vmem:[#allocation9 + $0x68] sm:$0xff]
          %v4617 = vld [vmem:[#allocation9 + $0x70] sm:$0xff]
          %v4618 = vld [vmem:[#allocation9 + $0x78] sm:$0xff]
          %v4619 = vld [vmem:[#allocation9 + $0x80] sm:$0xff]
          %v4620 = vld [vmem:[#allocation9 + $0x88] sm:$0xff]
          %v4621 = vld [vmem:[#allocation9 + $0x90] sm:$0xff]
          %v4622 = vld [vmem:[#allocation9 + $0x98] sm:$0xff]
          %v4623 = vld [vmem:[#allocation9 + $0xa0] sm:$0xff]
          %v4624 = vld [vmem:[#allocation9 + $0xa8] sm:$0xff]
          %v4625 = vld [vmem:[#allocation9 + $0xb0] sm:$0xff]
          %v4626 = vld [vmem:[#allocation9 + $0xb8] sm:$0xff]
          %v4627 = vld [vmem:[#allocation9 + $0xc0] sm:$0xff]
          %v4628 = vld [vmem:[#allocation9 + $0xc8] sm:$0xff]
          %v4629 = vld [vmem:[#allocation9 + $0xd0] sm:$0xff]
          %v4630 = vld [vmem:[#allocation9 + $0xd8] sm:$0xff]
          %v4631 = vld [vmem:[#allocation9 + $0xe0] sm:$0xff]
          %v4632 = vld [vmem:[#allocation9 + $0xe8] sm:$0xff]
          %v4633 = vld [vmem:[#allocation9 + $0xf0] sm:$0xff]
          %v4634 = vld [vmem:[#allocation9 + $0xf8] sm:$0xff]
          %v4635 = vld [vmem:[#allocation9 + $0x100] sm:$0xff]
          %v4636 = vld [vmem:[#allocation9 + $0x108] sm:$0xff]
          %v4637 = vld [vmem:[#allocation9 + $0x110] sm:$0xff]
          %v4638 = vld [vmem:[#allocation9 + $0x118] sm:$0xff]
          %v4639 = vld [vmem:[#allocation9 + $0x120] sm:$0xff]
          %v4640 = vld [vmem:[#allocation9 + $0x128] sm:$0xff]
          %v4641 = vld [vmem:[#allocation9 + $0x130] sm:$0xff]
          %v4642 = vld [vmem:[#allocation9 + $0x138] sm:$0xff]
          %v4643 = vld [vmem:[#allocation9 + $0x140] sm:$0xff]
          %v4644 = vld [vmem:[#allocation9 + $0x148] sm:$0xff]
          %v4645 = vld [vmem:[#allocation9 + $0x150] sm:$0xff]
          %v4646 = vld [vmem:[#allocation9 + $0x158] sm:$0xff]
          %v4647 = vld [vmem:[#allocation9 + $0x160] sm:$0xff]
          %v4648 = vld [vmem:[#allocation9 + $0x168] sm:$0xff]
          %v4649 = vld [vmem:[#allocation9 + $0x170] sm:$0xff]
          %v4650 = vld [vmem:[#allocation9 + $0x178] sm:$0xff]
          %v4651 = vld [vmem:[#allocation9 + $0x180] sm:$0xff]
          %v4652 = vld [vmem:[#allocation9 + $0x188] sm:$0xff]
          %v4653 = vld [vmem:[#allocation9 + $0x190] sm:$0xff]
          %v4654 = vld [vmem:[#allocation9 + $0x198] sm:$0xff]
          %v4655 = vld [vmem:[#allocation9 + $0x1a0] sm:$0xff]
          %v4656 = vld [vmem:[#allocation9 + $0x1a8] sm:$0xff]
          %v4657 = vld [vmem:[#allocation9 + $0x1b0] sm:$0xff]
          %v4658 = vld [vmem:[#allocation9 + $0x1b8] sm:$0xff]
          %v4659 = vld [vmem:[#allocation9 + $0x1c0] sm:$0xff]
          %v4660 = vld [vmem:[#allocation9 + $0x1c8] sm:$0xff]
          %v4661 = vld [vmem:[#allocation9 + $0x1d0] sm:$0xff]
          %v4662 = vld [vmem:[#allocation9 + $0x1d8] sm:$0xff]
          %v4663 = vld [vmem:[#allocation9 + $0x1e0] sm:$0xff]
          %v4664 = vld [vmem:[#allocation9 + $0x1e8] sm:$0xff]
          %v4665 = vld [vmem:[#allocation9 + $0x1f0] sm:$0xff]
          %v4666 = vld [vmem:[#allocation9 + $0x1f8] sm:$0xff]
          %v4667 = vld [vmem:[#allocation9 + $0x200] sm:$0xff]
          %v4668 = vld [vmem:[#allocation9 + $0x208] sm:$0xff]
          %v4669 = vld [vmem:[#allocation9 + $0x210] sm:$0xff]
          %v4670 = vld [vmem:[#allocation9 + $0x218] sm:$0xff]
          %v4671 = vld [vmem:[#allocation9 + $0x220] sm:$0xff]
          %v4672 = vld [vmem:[#allocation9 + $0x228] sm:$0xff]
          %v4673 = vld [vmem:[#allocation9 + $0x230] sm:$0xff]
          %v4674 = vld [vmem:[#allocation9 + $0x238] sm:$0xff]
          %v4675 = vld [vmem:[#allocation9 + $0x240] sm:$0xff]
          %v4676 = vld [vmem:[#allocation9 + $0x248] sm:$0xff]
          %v4677 = vld [vmem:[#allocation9 + $0x250] sm:$0xff]
          %v4678 = vld [vmem:[#allocation9 + $0x258] sm:$0xff]
          %v4679 = vld [vmem:[#allocation9 + $0x260] sm:$0xff]
          %v4680 = vld [vmem:[#allocation9 + $0x268] sm:$0xff]
          %v4681 = vld [vmem:[#allocation9 + $0x270] sm:$0xff]
          %v4682 = vld [vmem:[#allocation9 + $0x278] sm:$0xff]
          %v4683 = vld [vmem:[#allocation9 + $0x280] sm:$0xff]
          %v4684 = vld [vmem:[#allocation9 + $0x288] sm:$0xff]
          %v4685 = vld [vmem:[#allocation9 + $0x290] sm:$0xff]
          %v4686 = vld [vmem:[#allocation9 + $0x298] sm:$0xff]
          %v4687 = vld [vmem:[#allocation9 + $0x2a0] sm:$0xff]
          %v4688 = vld [vmem:[#allocation9 + $0x2a8] sm:$0xff]
          %v4689 = vld [vmem:[#allocation9 + $0x2b0] sm:$0xff]
          %v4690 = vld [vmem:[#allocation9 + $0x2b8] sm:$0xff]
          %v4691 = vld [vmem:[#allocation9 + $0x2c0] sm:$0xff]
          %v4692 = vld [vmem:[#allocation9 + $0x2c8] sm:$0xff]
          %v4693 = vld [vmem:[#allocation9 + $0x2d0] sm:$0xff]
          %v4694 = vld [vmem:[#allocation9 + $0x2d8] sm:$0xff]
          %v4695 = vld [vmem:[#allocation9 + $0x2e0] sm:$0xff]
          %v4696 = vld [vmem:[#allocation9 + $0x2e8] sm:$0xff]
          %v4697 = vld [vmem:[#allocation9 + $0x2f0] sm:$0xff]
          %v4698 = vld [vmem:[#allocation9 + $0x2f8] sm:$0xff]
          %v4699 = vld [vmem:[#allocation9 + $0x300] sm:$0xff]
          %v4700 = vld [vmem:[#allocation9 + $0x308] sm:$0xff]
          %v4701 = vld [vmem:[#allocation9 + $0x310] sm:$0xff]
          %v4702 = vld [vmem:[#allocation9 + $0x318] sm:$0xff]
          %v4703 = vld [vmem:[#allocation9 + $0x320] sm:$0xff]
          %v4704 = vld [vmem:[#allocation9 + $0x328] sm:$0xff]
          %v4705 = vld [vmem:[#allocation9 + $0x330] sm:$0xff]
          %v4706 = vld [vmem:[#allocation9 + $0x338] sm:$0xff]
          %v4707 = vld [vmem:[#allocation9 + $0x340] sm:$0xff]
          %v4708 = vld [vmem:[#allocation9 + $0x348] sm:$0xff]
          %v4709 = vld [vmem:[#allocation9 + $0x350] sm:$0xff]
          %v4710 = vld [vmem:[#allocation9 + $0x358] sm:$0xff]
          %v4711 = vld [vmem:[#allocation9 + $0x360] sm:$0xff]
          %v4712 = vld [vmem:[#allocation9 + $0x368] sm:$0xff]
          %v4713 = vld [vmem:[#allocation9 + $0x370] sm:$0xff]
          %v4714 = vld [vmem:[#allocation9 + $0x378] sm:$0xff]
          %v4715 = vld [vmem:[#allocation9 + $0x380] sm:$0xff]
          %v4716 = vld [vmem:[#allocation9 + $0x388] sm:$0xff]
          %v4717 = vld [vmem:[#allocation9 + $0x390] sm:$0xff]
          %v4718 = vld [vmem:[#allocation9 + $0x398] sm:$0xff]
          %v4719 = vld [vmem:[#allocation9 + $0x3a0] sm:$0xff]
          %v4720 = vld [vmem:[#allocation9 + $0x3a8] sm:$0xff]
          %v4721 = vld [vmem:[#allocation9 + $0x3b0] sm:$0xff]
          %v4722 = vld [vmem:[#allocation9 + $0x3b8] sm:$0xff]
          %v4723 = vld [vmem:[#allocation9 + $0x3c0] sm:$0xff]
          %v4724 = vld [vmem:[#allocation9 + $0x3c8] sm:$0xff]
          %v4725 = vld [vmem:[#allocation9 + $0x3d0] sm:$0xff]
          %v4726 = vld [vmem:[#allocation9 + $0x3d8] sm:$0xff]
          %v4727 = vld [vmem:[#allocation9 + $0x3e0] sm:$0xff]
          %v4728 = vld [vmem:[#allocation9 + $0x3e8] sm:$0xff]
          %v4729 = vld [vmem:[#allocation9 + $0x3f0] sm:$0xff]
          %v4730 = vld [vmem:[#allocation9 + $0x3f8] sm:$0xff]
          %v4731 = vld [vmem:[#allocation9 + $0x400] sm:$0xff]
          %v4732 = vld [vmem:[#allocation9 + $0x408] sm:$0xff]
          %v4733 = vld [vmem:[#allocation9 + $0x410] sm:$0xff]
          %v4734 = vld [vmem:[#allocation9 + $0x418] sm:$0xff]
          %v4735 = vld [vmem:[#allocation9 + $0x420] sm:$0xff]
          %v4736 = vld [vmem:[#allocation9 + $0x428] sm:$0xff]
          %v4737 = vld [vmem:[#allocation9 + $0x430] sm:$0xff]
          %v4738 = vld [vmem:[#allocation9 + $0x438] sm:$0xff]
          %v4739 = vld [vmem:[#allocation9 + $0x440] sm:$0xff]
          %v4740 = vld [vmem:[#allocation9 + $0x448] sm:$0xff]
          %v4741 = vld [vmem:[#allocation9 + $0x450] sm:$0xff]
          %v4742 = vld [vmem:[#allocation9 + $0x458] sm:$0xff]
          %v4743 = vld [vmem:[#allocation9 + $0x460] sm:$0xff]
          %v4744 = vld [vmem:[#allocation9 + $0x468] sm:$0xff]
          %v4745 = vld [vmem:[#allocation9 + $0x470] sm:$0xff]
          %v4746 = vld [vmem:[#allocation9 + $0x478] sm:$0xff]
          %v4747 = vld [vmem:[#allocation9 + $0x480] sm:$0xff]
          %v4748 = vld [vmem:[#allocation9 + $0x488] sm:$0xff]
          %v4749 = vld [vmem:[#allocation9 + $0x490] sm:$0xff]
          %v4750 = vld [vmem:[#allocation9 + $0x498] sm:$0xff]
          %v4751 = vld [vmem:[#allocation9 + $0x4a0] sm:$0xff]
          %v4752 = vld [vmem:[#allocation9 + $0x4a8] sm:$0xff]
          %v4753 = vld [vmem:[#allocation9 + $0x4b0] sm:$0xff]
          %v4754 = vld [vmem:[#allocation9 + $0x4b8] sm:$0xff]
          %v4755 = vld [vmem:[#allocation9 + $0x4c0] sm:$0xff]
          %v4756 = vld [vmem:[#allocation9 + $0x4c8] sm:$0xff]
          %v4757 = vld [vmem:[#allocation9 + $0x4d0] sm:$0xff]
          %v4758 = vld [vmem:[#allocation9 + $0x4d8] sm:$0xff]
          %v4759 = vld [vmem:[#allocation9 + $0x4e0] sm:$0xff]
          %v4760 = vld [vmem:[#allocation9 + $0x4e8] sm:$0xff]
          %v4761 = vld [vmem:[#allocation9 + $0x4f0] sm:$0xff]
          %v4762 = vld [vmem:[#allocation9 + $0x4f8] sm:$0xff]
          %v4763 = vld [vmem:[#allocation9 + $0x500] sm:$0xff]
          %v4764 = vld [vmem:[#allocation9 + $0x508] sm:$0xff]
          %v4765 = vld [vmem:[#allocation9 + $0x510] sm:$0xff]
          %v4766 = vld [vmem:[#allocation9 + $0x518] sm:$0xff]
          %v4767 = vld [vmem:[#allocation9 + $0x520] sm:$0xff]
          %v4768 = vld [vmem:[#allocation9 + $0x528] sm:$0xff]
          %v4769 = vld [vmem:[#allocation9 + $0x530] sm:$0xff]
          %v4770 = vld [vmem:[#allocation9 + $0x538] sm:$0xff]
          %v4771 = vld [vmem:[#allocation9 + $0x540] sm:$0xff]
          %v4772 = vld [vmem:[#allocation9 + $0x548] sm:$0xff]
          %v4773 = vld [vmem:[#allocation9 + $0x550] sm:$0xff]
          %v4774 = vld [vmem:[#allocation9 + $0x558] sm:$0xff]
          %v4775 = vld [vmem:[#allocation9 + $0x560] sm:$0xff]
          %v4776 = vld [vmem:[#allocation9 + $0x568] sm:$0xff]
          %v4777 = vld [vmem:[#allocation9 + $0x570] sm:$0xff]
          %v4778 = vld [vmem:[#allocation9 + $0x578] sm:$0xff]
          %v4779 = vld [vmem:[#allocation9 + $0x580] sm:$0xff]
          %v4780 = vld [vmem:[#allocation9 + $0x588] sm:$0xff]
          %v4781 = vld [vmem:[#allocation9 + $0x590] sm:$0xff]
          %v4782 = vld [vmem:[#allocation9 + $0x598] sm:$0xff]
          %v4783 = vld [vmem:[#allocation9 + $0x5a0] sm:$0xff]
          %v4784 = vld [vmem:[#allocation9 + $0x5a8] sm:$0xff]
          %v4785 = vld [vmem:[#allocation9 + $0x5b0] sm:$0xff]
          %v4786 = vld [vmem:[#allocation9 + $0x5b8] sm:$0xff]
          %v4787 = vld [vmem:[#allocation9 + $0x5c0] sm:$0xff]
          %v4788 = vld [vmem:[#allocation9 + $0x5c8] sm:$0xff]
          %v4789 = vld [vmem:[#allocation9 + $0x5d0] sm:$0xff]
          %v4790 = vld [vmem:[#allocation9 + $0x5d8] sm:$0xff]
          %v4791 = vld [vmem:[#allocation9 + $0x5e0] sm:$0xff]
          %v4792 = vld [vmem:[#allocation9 + $0x5e8] sm:$0xff]
          %v4793 = vld [vmem:[#allocation9 + $0x5f0] sm:$0xff]
          %v4794 = vld [vmem:[#allocation9 + $0x5f8] sm:$0xff]
          %v4795 = vld [vmem:[#allocation9 + $0x600] sm:$0xff]
          %v4796 = vld [vmem:[#allocation9 + $0x608] sm:$0xff]
          %v4797 = vld [vmem:[#allocation9 + $0x610] sm:$0xff]
          %v4798 = vld [vmem:[#allocation9 + $0x618] sm:$0xff]
          %v4799 = vld [vmem:[#allocation9 + $0x620] sm:$0xff]
          %v4800 = vld [vmem:[#allocation9 + $0x628] sm:$0xff]
          %v4801 = vld [vmem:[#allocation9 + $0x630] sm:$0xff]
          %v4802 = vld [vmem:[#allocation9 + $0x638] sm:$0xff]
          %v4803 = vld [vmem:[#allocation9 + $0x640] sm:$0xff]
          %v4804 = vld [vmem:[#allocation9 + $0x648] sm:$0xff]
          %v4805 = vld [vmem:[#allocation9 + $0x650] sm:$0xff]
          %v4806 = vld [vmem:[#allocation9 + $0x658] sm:$0xff]
          %v4807 = vld [vmem:[#allocation9 + $0x660] sm:$0xff]
          %v4808 = vld [vmem:[#allocation9 + $0x668] sm:$0xff]
          %v4809 = vld [vmem:[#allocation9 + $0x670] sm:$0xff]
          %v4810 = vld [vmem:[#allocation9 + $0x678] sm:$0xff]
          %v4811 = vld [vmem:[#allocation9 + $0x680] sm:$0xff]
          %v4812 = vld [vmem:[#allocation9 + $0x688] sm:$0xff]
          %v4813 = vld [vmem:[#allocation9 + $0x690] sm:$0xff]
          %v4814 = vld [vmem:[#allocation9 + $0x698] sm:$0xff]
          %v4815 = vld [vmem:[#allocation9 + $0x6a0] sm:$0xff]
          %v4816 = vld [vmem:[#allocation9 + $0x6a8] sm:$0xff]
          %v4817 = vld [vmem:[#allocation9 + $0x6b0] sm:$0xff]
          %v4818 = vld [vmem:[#allocation9 + $0x6b8] sm:$0xff]
          %v4819 = vld [vmem:[#allocation9 + $0x6c0] sm:$0xff]
          %v4820 = vld [vmem:[#allocation9 + $0x6c8] sm:$0xff]
          %v4821 = vld [vmem:[#allocation9 + $0x6d0] sm:$0xff]
          %v4822 = vld [vmem:[#allocation9 + $0x6d8] sm:$0xff]
          %v4823 = vld [vmem:[#allocation9 + $0x6e0] sm:$0xff]
          %v4824 = vld [vmem:[#allocation9 + $0x6e8] sm:$0xff]
          %v4825 = vld [vmem:[#allocation9 + $0x6f0] sm:$0xff]
          %v4826 = vld [vmem:[#allocation9 + $0x6f8] sm:$0xff]
          %v4827 = vld [vmem:[#allocation9 + $0x700] sm:$0xff]
          %v4828 = vld [vmem:[#allocation9 + $0x708] sm:$0xff]
          %v4829 = vld [vmem:[#allocation9 + $0x710] sm:$0xff]
          %v4830 = vld [vmem:[#allocation9 + $0x718] sm:$0xff]
          %v4831 = vld [vmem:[#allocation9 + $0x720] sm:$0xff]
          %v4832 = vld [vmem:[#allocation9 + $0x728] sm:$0xff]
          %v4833 = vld [vmem:[#allocation9 + $0x730] sm:$0xff]
          %v4834 = vld [vmem:[#allocation9 + $0x738] sm:$0xff]
          %v4835 = vld [vmem:[#allocation9 + $0x740] sm:$0xff]
          %v4836 = vld [vmem:[#allocation9 + $0x748] sm:$0xff]
          %v4837 = vld [vmem:[#allocation9 + $0x750] sm:$0xff]
          %v4838 = vld [vmem:[#allocation9 + $0x758] sm:$0xff]
          %v4839 = vld [vmem:[#allocation9 + $0x760] sm:$0xff]
          %v4840 = vld [vmem:[#allocation9 + $0x768] sm:$0xff]
          %v4841 = vld [vmem:[#allocation9 + $0x770] sm:$0xff]
          %v4842 = vld [vmem:[#allocation9 + $0x778] sm:$0xff]
          %v4843 = vld [vmem:[#allocation9 + $0x780] sm:$0xff]
          %v4844 = vld [vmem:[#allocation9 + $0x788] sm:$0xff]
          %v4845 = vld [vmem:[#allocation9 + $0x790] sm:$0xff]
          %v4846 = vld [vmem:[#allocation9 + $0x798] sm:$0xff]
          %v4847 = vld [vmem:[#allocation9 + $0x7a0] sm:$0xff]
          %v4848 = vld [vmem:[#allocation9 + $0x7a8] sm:$0xff]
          %v4849 = vld [vmem:[#allocation9 + $0x7b0] sm:$0xff]
          %v4850 = vld [vmem:[#allocation9 + $0x7b8] sm:$0xff]
          %v4851 = vld [vmem:[#allocation9 + $0x7c0] sm:$0xff]
          %v4852 = vld [vmem:[#allocation9 + $0x7c8] sm:$0xff]
          %v4853 = vld [vmem:[#allocation9 + $0x7d0] sm:$0xff]
          %v4854 = vld [vmem:[#allocation9 + $0x7d8] sm:$0xff]
          %v4855 = vld [vmem:[#allocation9 + $0x7e0] sm:$0xff]
          %v4856 = vld [vmem:[#allocation9 + $0x7e8] sm:$0xff]
          %v4857 = vld [vmem:[#allocation9 + $0x7f0] sm:$0xff]
          %v4858 = vld [vmem:[#allocation9 + $0x7f8] sm:$0xff]
          %v5115 = vunpack.c.l.b16 %v4603
          %v5116 = vunpack.c.h.b16 %v4603
          %v5117 = vunpack.c.l.b16 %v4604
          %v5118 = vunpack.c.h.b16 %v4604
          %v5119 = vunpack.c.l.b16 %v4605
          %v5120 = vunpack.c.h.b16 %v4605
          %v5121 = vunpack.c.l.b16 %v4606
          %v5122 = vunpack.c.h.b16 %v4606
          %v5123 = vunpack.c.l.b16 %v4607
          %v5124 = vunpack.c.h.b16 %v4607
          %v5125 = vunpack.c.l.b16 %v4608
          %v5126 = vunpack.c.h.b16 %v4608
          %v5127 = vunpack.c.l.b16 %v4609
          %v5128 = vunpack.c.h.b16 %v4609
          %v5129 = vunpack.c.l.b16 %v4610
          %v5130 = vunpack.c.h.b16 %v4610
          %v5131 = vunpack.c.l.b16 %v4611
          %v5132 = vunpack.c.h.b16 %v4611
          %v5133 = vunpack.c.l.b16 %v4612
          %v5134 = vunpack.c.h.b16 %v4612
          %v5135 = vunpack.c.l.b16 %v4613
          %v5136 = vunpack.c.h.b16 %v4613
          %v5137 = vunpack.c.l.b16 %v4614
          %v5138 = vunpack.c.h.b16 %v4614
          %v5139 = vunpack.c.l.b16 %v4615
          %v5140 = vunpack.c.h.b16 %v4615
          %v5141 = vunpack.c.l.b16 %v4616
          %v5142 = vunpack.c.h.b16 %v4616
          %v5143 = vunpack.c.l.b16 %v4617
          %v5144 = vunpack.c.h.b16 %v4617
          %v5145 = vunpack.c.l.b16 %v4618
          %v5146 = vunpack.c.h.b16 %v4618
          %v5147 = vunpack.c.l.b16 %v4619
          %v5148 = vunpack.c.h.b16 %v4619
          %v5149 = vunpack.c.l.b16 %v4620
          %v5150 = vunpack.c.h.b16 %v4620
          %v5151 = vunpack.c.l.b16 %v4621
          %v5152 = vunpack.c.h.b16 %v4621
          %v5153 = vunpack.c.l.b16 %v4622
          %v5154 = vunpack.c.h.b16 %v4622
          %v5155 = vunpack.c.l.b16 %v4623
          %v5156 = vunpack.c.h.b16 %v4623
          %v5157 = vunpack.c.l.b16 %v4624
          %v5158 = vunpack.c.h.b16 %v4624
          %v5159 = vunpack.c.l.b16 %v4625
          %v5160 = vunpack.c.h.b16 %v4625
          %v5161 = vunpack.c.l.b16 %v4626
          %v5162 = vunpack.c.h.b16 %v4626
          %v5163 = vunpack.c.l.b16 %v4627
          %v5164 = vunpack.c.h.b16 %v4627
          %v5165 = vunpack.c.l.b16 %v4628
          %v5166 = vunpack.c.h.b16 %v4628
          %v5167 = vunpack.c.l.b16 %v4629
          %v5168 = vunpack.c.h.b16 %v4629
          %v5169 = vunpack.c.l.b16 %v4630
          %v5170 = vunpack.c.h.b16 %v4630
          %v5171 = vunpack.c.l.b16 %v4631
          %v5172 = vunpack.c.h.b16 %v4631
          %v5173 = vunpack.c.l.b16 %v4632
          %v5174 = vunpack.c.h.b16 %v4632
          %v5175 = vunpack.c.l.b16 %v4633
          %v5176 = vunpack.c.h.b16 %v4633
          %v5177 = vunpack.c.l.b16 %v4634
          %v5178 = vunpack.c.h.b16 %v4634
          %v5179 = vunpack.c.l.b16 %v4635
          %v5180 = vunpack.c.h.b16 %v4635
          %v5181 = vunpack.c.l.b16 %v4636
          %v5182 = vunpack.c.h.b16 %v4636
          %v5183 = vunpack.c.l.b16 %v4637
          %v5184 = vunpack.c.h.b16 %v4637
          %v5185 = vunpack.c.l.b16 %v4638
          %v5186 = vunpack.c.h.b16 %v4638
          %v5187 = vunpack.c.l.b16 %v4639
          %v5188 = vunpack.c.h.b16 %v4639
          %v5189 = vunpack.c.l.b16 %v4640
          %v5190 = vunpack.c.h.b16 %v4640
          %v5191 = vunpack.c.l.b16 %v4641
          %v5192 = vunpack.c.h.b16 %v4641
          %v5193 = vunpack.c.l.b16 %v4642
          %v5194 = vunpack.c.h.b16 %v4642
          %v5195 = vunpack.c.l.b16 %v4643
          %v5196 = vunpack.c.h.b16 %v4643
          %v5197 = vunpack.c.l.b16 %v4644
          %v5198 = vunpack.c.h.b16 %v4644
          %v5199 = vunpack.c.l.b16 %v4645
          %v5200 = vunpack.c.h.b16 %v4645
          %v5201 = vunpack.c.l.b16 %v4646
          %v5202 = vunpack.c.h.b16 %v4646
          %v5203 = vunpack.c.l.b16 %v4647
          %v5204 = vunpack.c.h.b16 %v4647
          %v5205 = vunpack.c.l.b16 %v4648
          %v5206 = vunpack.c.h.b16 %v4648
          %v5207 = vunpack.c.l.b16 %v4649
          %v5208 = vunpack.c.h.b16 %v4649
          %v5209 = vunpack.c.l.b16 %v4650
          %v5210 = vunpack.c.h.b16 %v4650
          %v5211 = vunpack.c.l.b16 %v4651
          %v5212 = vunpack.c.h.b16 %v4651
          %v5213 = vunpack.c.l.b16 %v4652
          %v5214 = vunpack.c.h.b16 %v4652
          %v5215 = vunpack.c.l.b16 %v4653
          %v5216 = vunpack.c.h.b16 %v4653
          %v5217 = vunpack.c.l.b16 %v4654
          %v5218 = vunpack.c.h.b16 %v4654
          %v5219 = vunpack.c.l.b16 %v4655
          %v5220 = vunpack.c.h.b16 %v4655
          %v5221 = vunpack.c.l.b16 %v4656
          %v5222 = vunpack.c.h.b16 %v4656
          %v5223 = vunpack.c.l.b16 %v4657
          %v5224 = vunpack.c.h.b16 %v4657
          %v5225 = vunpack.c.l.b16 %v4658
          %v5226 = vunpack.c.h.b16 %v4658
          %v5227 = vunpack.c.l.b16 %v4659
          %v5228 = vunpack.c.h.b16 %v4659
          %v5229 = vunpack.c.l.b16 %v4660
          %v5230 = vunpack.c.h.b16 %v4660
          %v5231 = vunpack.c.l.b16 %v4661
          %v5232 = vunpack.c.h.b16 %v4661
          %v5233 = vunpack.c.l.b16 %v4662
          %v5234 = vunpack.c.h.b16 %v4662
          %v5235 = vunpack.c.l.b16 %v4663
          %v5236 = vunpack.c.h.b16 %v4663
          %v5237 = vunpack.c.l.b16 %v4664
          %v5238 = vunpack.c.h.b16 %v4664
          %v5239 = vunpack.c.l.b16 %v4665
          %v5240 = vunpack.c.h.b16 %v4665
          %v5241 = vunpack.c.l.b16 %v4666
          %v5242 = vunpack.c.h.b16 %v4666
          %v5243 = vunpack.c.l.b16 %v4667
          %v5244 = vunpack.c.h.b16 %v4667
          %v5245 = vunpack.c.l.b16 %v4668
          %v5246 = vunpack.c.h.b16 %v4668
          %v5247 = vunpack.c.l.b16 %v4669
          %v5248 = vunpack.c.h.b16 %v4669
          %v5249 = vunpack.c.l.b16 %v4670
          %v5250 = vunpack.c.h.b16 %v4670
          %v5251 = vunpack.c.l.b16 %v4671
          %v5252 = vunpack.c.h.b16 %v4671
          %v5253 = vunpack.c.l.b16 %v4672
          %v5254 = vunpack.c.h.b16 %v4672
          %v5255 = vunpack.c.l.b16 %v4673
          %v5256 = vunpack.c.h.b16 %v4673
          %v5257 = vunpack.c.l.b16 %v4674
          %v5258 = vunpack.c.h.b16 %v4674
          %v5259 = vunpack.c.l.b16 %v4675
          %v5260 = vunpack.c.h.b16 %v4675
          %v5261 = vunpack.c.l.b16 %v4676
          %v5262 = vunpack.c.h.b16 %v4676
          %v5263 = vunpack.c.l.b16 %v4677
          %v5264 = vunpack.c.h.b16 %v4677
          %v5265 = vunpack.c.l.b16 %v4678
          %v5266 = vunpack.c.h.b16 %v4678
          %v5267 = vunpack.c.l.b16 %v4679
          %v5268 = vunpack.c.h.b16 %v4679
          %v5269 = vunpack.c.l.b16 %v4680
          %v5270 = vunpack.c.h.b16 %v4680
          %v5271 = vunpack.c.l.b16 %v4681
          %v5272 = vunpack.c.h.b16 %v4681
          %v5273 = vunpack.c.l.b16 %v4682
          %v5274 = vunpack.c.h.b16 %v4682
          %v5275 = vunpack.c.l.b16 %v4683
          %v5276 = vunpack.c.h.b16 %v4683
          %v5277 = vunpack.c.l.b16 %v4684
          %v5278 = vunpack.c.h.b16 %v4684
          %v5279 = vunpack.c.l.b16 %v4685
          %v5280 = vunpack.c.h.b16 %v4685
          %v5281 = vunpack.c.l.b16 %v4686
          %v5282 = vunpack.c.h.b16 %v4686
          %v5283 = vunpack.c.l.b16 %v4687
          %v5284 = vunpack.c.h.b16 %v4687
          %v5285 = vunpack.c.l.b16 %v4688
          %v5286 = vunpack.c.h.b16 %v4688
          %v5287 = vunpack.c.l.b16 %v4689
          %v5288 = vunpack.c.h.b16 %v4689
          %v5289 = vunpack.c.l.b16 %v4690
          %v5290 = vunpack.c.h.b16 %v4690
          %v5291 = vunpack.c.l.b16 %v4691
          %v5292 = vunpack.c.h.b16 %v4691
          %v5293 = vunpack.c.l.b16 %v4692
          %v5294 = vunpack.c.h.b16 %v4692
          %v5295 = vunpack.c.l.b16 %v4693
          %v5296 = vunpack.c.h.b16 %v4693
          %v5297 = vunpack.c.l.b16 %v4694
          %v5298 = vunpack.c.h.b16 %v4694
          %v5299 = vunpack.c.l.b16 %v4695
          %v5300 = vunpack.c.h.b16 %v4695
          %v5301 = vunpack.c.l.b16 %v4696
          %v5302 = vunpack.c.h.b16 %v4696
          %v5303 = vunpack.c.l.b16 %v4697
          %v5304 = vunpack.c.h.b16 %v4697
          %v5305 = vunpack.c.l.b16 %v4698
          %v5306 = vunpack.c.h.b16 %v4698
          %v5307 = vunpack.c.l.b16 %v4699
          %v5308 = vunpack.c.h.b16 %v4699
          %v5309 = vunpack.c.l.b16 %v4700
          %v5310 = vunpack.c.h.b16 %v4700
          %v5311 = vunpack.c.l.b16 %v4701
          %v5312 = vunpack.c.h.b16 %v4701
          %v5313 = vunpack.c.l.b16 %v4702
          %v5314 = vunpack.c.h.b16 %v4702
          %v5315 = vunpack.c.l.b16 %v4703
          %v5316 = vunpack.c.h.b16 %v4703
          %v5317 = vunpack.c.l.b16 %v4704
          %v5318 = vunpack.c.h.b16 %v4704
          %v5319 = vunpack.c.l.b16 %v4705
          %v5320 = vunpack.c.h.b16 %v4705
          %v5321 = vunpack.c.l.b16 %v4706
          %v5322 = vunpack.c.h.b16 %v4706
          %v5323 = vunpack.c.l.b16 %v4707
          %v5324 = vunpack.c.h.b16 %v4707
          %v5325 = vunpack.c.l.b16 %v4708
          %v5326 = vunpack.c.h.b16 %v4708
          %v5327 = vunpack.c.l.b16 %v4709
          %v5328 = vunpack.c.h.b16 %v4709
          %v5329 = vunpack.c.l.b16 %v4710
          %v5330 = vunpack.c.h.b16 %v4710
          %v5331 = vunpack.c.l.b16 %v4711
          %v5332 = vunpack.c.h.b16 %v4711
          %v5333 = vunpack.c.l.b16 %v4712
          %v5334 = vunpack.c.h.b16 %v4712
          %v5335 = vunpack.c.l.b16 %v4713
          %v5336 = vunpack.c.h.b16 %v4713
          %v5337 = vunpack.c.l.b16 %v4714
          %v5338 = vunpack.c.h.b16 %v4714
          %v5339 = vunpack.c.l.b16 %v4715
          %v5340 = vunpack.c.h.b16 %v4715
          %v5341 = vunpack.c.l.b16 %v4716
          %v5342 = vunpack.c.h.b16 %v4716
          %v5343 = vunpack.c.l.b16 %v4717
          %v5344 = vunpack.c.h.b16 %v4717
          %v5345 = vunpack.c.l.b16 %v4718
          %v5346 = vunpack.c.h.b16 %v4718
          %v5347 = vunpack.c.l.b16 %v4719
          %v5348 = vunpack.c.h.b16 %v4719
          %v5349 = vunpack.c.l.b16 %v4720
          %v5350 = vunpack.c.h.b16 %v4720
          %v5351 = vunpack.c.l.b16 %v4721
          %v5352 = vunpack.c.h.b16 %v4721
          %v5353 = vunpack.c.l.b16 %v4722
          %v5354 = vunpack.c.h.b16 %v4722
          %v5355 = vunpack.c.l.b16 %v4723
          %v5356 = vunpack.c.h.b16 %v4723
          %v5357 = vunpack.c.l.b16 %v4724
          %v5358 = vunpack.c.h.b16 %v4724
          %v5359 = vunpack.c.l.b16 %v4725
          %v5360 = vunpack.c.h.b16 %v4725
          %v5361 = vunpack.c.l.b16 %v4726
          %v5362 = vunpack.c.h.b16 %v4726
          %v5363 = vunpack.c.l.b16 %v4727
          %v5364 = vunpack.c.h.b16 %v4727
          %v5365 = vunpack.c.l.b16 %v4728
          %v5366 = vunpack.c.h.b16 %v4728
          %v5367 = vunpack.c.l.b16 %v4729
          %v5368 = vunpack.c.h.b16 %v4729
          %v5369 = vunpack.c.l.b16 %v4730
          %v5370 = vunpack.c.h.b16 %v4730
          %v5371 = vunpack.c.l.b16 %v4731
          %v5372 = vunpack.c.h.b16 %v4731
          %v5373 = vunpack.c.l.b16 %v4732
          %v5374 = vunpack.c.h.b16 %v4732
          %v5375 = vunpack.c.l.b16 %v4733
          %v5376 = vunpack.c.h.b16 %v4733
          %v5377 = vunpack.c.l.b16 %v4734
          %v5378 = vunpack.c.h.b16 %v4734
          %v5379 = vunpack.c.l.b16 %v4735
          %v5380 = vunpack.c.h.b16 %v4735
          %v5381 = vunpack.c.l.b16 %v4736
          %v5382 = vunpack.c.h.b16 %v4736
          %v5383 = vunpack.c.l.b16 %v4737
          %v5384 = vunpack.c.h.b16 %v4737
          %v5385 = vunpack.c.l.b16 %v4738
          %v5386 = vunpack.c.h.b16 %v4738
          %v5387 = vunpack.c.l.b16 %v4739
          %v5388 = vunpack.c.h.b16 %v4739
          %v5389 = vunpack.c.l.b16 %v4740
          %v5390 = vunpack.c.h.b16 %v4740
          %v5391 = vunpack.c.l.b16 %v4741
          %v5392 = vunpack.c.h.b16 %v4741
          %v5393 = vunpack.c.l.b16 %v4742
          %v5394 = vunpack.c.h.b16 %v4742
          %v5395 = vunpack.c.l.b16 %v4743
          %v5396 = vunpack.c.h.b16 %v4743
          %v5397 = vunpack.c.l.b16 %v4744
          %v5398 = vunpack.c.h.b16 %v4744
          %v5399 = vunpack.c.l.b16 %v4745
          %v5400 = vunpack.c.h.b16 %v4745
          %v5401 = vunpack.c.l.b16 %v4746
          %v5402 = vunpack.c.h.b16 %v4746
          %v5403 = vunpack.c.l.b16 %v4747
          %v5404 = vunpack.c.h.b16 %v4747
          %v5405 = vunpack.c.l.b16 %v4748
          %v5406 = vunpack.c.h.b16 %v4748
          %v5407 = vunpack.c.l.b16 %v4749
          %v5408 = vunpack.c.h.b16 %v4749
          %v5409 = vunpack.c.l.b16 %v4750
          %v5410 = vunpack.c.h.b16 %v4750
          %v5411 = vunpack.c.l.b16 %v4751
          %v5412 = vunpack.c.h.b16 %v4751
          %v5413 = vunpack.c.l.b16 %v4752
          %v5414 = vunpack.c.h.b16 %v4752
          %v5415 = vunpack.c.l.b16 %v4753
          %v5416 = vunpack.c.h.b16 %v4753
          %v5417 = vunpack.c.l.b16 %v4754
          %v5418 = vunpack.c.h.b16 %v4754
          %v5419 = vunpack.c.l.b16 %v4755
          %v5420 = vunpack.c.h.b16 %v4755
          %v5421 = vunpack.c.l.b16 %v4756
          %v5422 = vunpack.c.h.b16 %v4756
          %v5423 = vunpack.c.l.b16 %v4757
          %v5424 = vunpack.c.h.b16 %v4757
          %v5425 = vunpack.c.l.b16 %v4758
          %v5426 = vunpack.c.h.b16 %v4758
          %v5427 = vunpack.c.l.b16 %v4759
          %v5428 = vunpack.c.h.b16 %v4759
          %v5429 = vunpack.c.l.b16 %v4760
          %v5430 = vunpack.c.h.b16 %v4760
          %v5431 = vunpack.c.l.b16 %v4761
          %v5432 = vunpack.c.h.b16 %v4761
          %v5433 = vunpack.c.l.b16 %v4762
          %v5434 = vunpack.c.h.b16 %v4762
          %v5435 = vunpack.c.l.b16 %v4763
          %v5436 = vunpack.c.h.b16 %v4763
          %v5437 = vunpack.c.l.b16 %v4764
          %v5438 = vunpack.c.h.b16 %v4764
          %v5439 = vunpack.c.l.b16 %v4765
          %v5440 = vunpack.c.h.b16 %v4765
          %v5441 = vunpack.c.l.b16 %v4766
          %v5442 = vunpack.c.h.b16 %v4766
          %v5443 = vunpack.c.l.b16 %v4767
          %v5444 = vunpack.c.h.b16 %v4767
          %v5445 = vunpack.c.l.b16 %v4768
          %v5446 = vunpack.c.h.b16 %v4768
          %v5447 = vunpack.c.l.b16 %v4769
          %v5448 = vunpack.c.h.b16 %v4769
          %v5449 = vunpack.c.l.b16 %v4770
          %v5450 = vunpack.c.h.b16 %v4770
          %v5451 = vunpack.c.l.b16 %v4771
          %v5452 = vunpack.c.h.b16 %v4771
          %v5453 = vunpack.c.l.b16 %v4772
          %v5454 = vunpack.c.h.b16 %v4772
          %v5455 = vunpack.c.l.b16 %v4773
          %v5456 = vunpack.c.h.b16 %v4773
          %v5457 = vunpack.c.l.b16 %v4774
          %v5458 = vunpack.c.h.b16 %v4774
          %v5459 = vunpack.c.l.b16 %v4775
          %v5460 = vunpack.c.h.b16 %v4775
          %v5461 = vunpack.c.l.b16 %v4776
          %v5462 = vunpack.c.h.b16 %v4776
          %v5463 = vunpack.c.l.b16 %v4777
          %v5464 = vunpack.c.h.b16 %v4777
          %v5465 = vunpack.c.l.b16 %v4778
          %v5466 = vunpack.c.h.b16 %v4778
          %v5467 = vunpack.c.l.b16 %v4779
          %v5468 = vunpack.c.h.b16 %v4779
          %v5469 = vunpack.c.l.b16 %v4780
          %v5470 = vunpack.c.h.b16 %v4780
          %v5471 = vunpack.c.l.b16 %v4781
          %v5472 = vunpack.c.h.b16 %v4781
          %v5473 = vunpack.c.l.b16 %v4782
          %v5474 = vunpack.c.h.b16 %v4782
          %v5475 = vunpack.c.l.b16 %v4783
          %v5476 = vunpack.c.h.b16 %v4783
          %v5477 = vunpack.c.l.b16 %v4784
          %v5478 = vunpack.c.h.b16 %v4784
          %v5479 = vunpack.c.l.b16 %v4785
          %v5480 = vunpack.c.h.b16 %v4785
          %v5481 = vunpack.c.l.b16 %v4786
          %v5482 = vunpack.c.h.b16 %v4786
          %v5483 = vunpack.c.l.b16 %v4787
          %v5484 = vunpack.c.h.b16 %v4787
          %v5485 = vunpack.c.l.b16 %v4788
          %v5486 = vunpack.c.h.b16 %v4788
          %v5487 = vunpack.c.l.b16 %v4789
          %v5488 = vunpack.c.h.b16 %v4789
          %v5489 = vunpack.c.l.b16 %v4790
          %v5490 = vunpack.c.h.b16 %v4790
          %v5491 = vunpack.c.l.b16 %v4791
          %v5492 = vunpack.c.h.b16 %v4791
          %v5493 = vunpack.c.l.b16 %v4792
          %v5494 = vunpack.c.h.b16 %v4792
          %v5495 = vunpack.c.l.b16 %v4793
          %v5496 = vunpack.c.h.b16 %v4793
          %v5497 = vunpack.c.l.b16 %v4794
          %v5498 = vunpack.c.h.b16 %v4794
          %v5499 = vunpack.c.l.b16 %v4795
          %v5500 = vunpack.c.h.b16 %v4795
          %v5501 = vunpack.c.l.b16 %v4796
          %v5502 = vunpack.c.h.b16 %v4796
          %v5503 = vunpack.c.l.b16 %v4797
          %v5504 = vunpack.c.h.b16 %v4797
          %v5505 = vunpack.c.l.b16 %v4798
          %v5506 = vunpack.c.h.b16 %v4798
          %v5507 = vunpack.c.l.b16 %v4799
          %v5508 = vunpack.c.h.b16 %v4799
          %v5509 = vunpack.c.l.b16 %v4800
          %v5510 = vunpack.c.h.b16 %v4800
          %v5511 = vunpack.c.l.b16 %v4801
          %v5512 = vunpack.c.h.b16 %v4801
          %v5513 = vunpack.c.l.b16 %v4802
          %v5514 = vunpack.c.h.b16 %v4802
          %v5515 = vunpack.c.l.b16 %v4803
          %v5516 = vunpack.c.h.b16 %v4803
          %v5517 = vunpack.c.l.b16 %v4804
          %v5518 = vunpack.c.h.b16 %v4804
          %v5519 = vunpack.c.l.b16 %v4805
          %v5520 = vunpack.c.h.b16 %v4805
          %v5521 = vunpack.c.l.b16 %v4806
          %v5522 = vunpack.c.h.b16 %v4806
          %v5523 = vunpack.c.l.b16 %v4807
          %v5524 = vunpack.c.h.b16 %v4807
          %v5525 = vunpack.c.l.b16 %v4808
          %v5526 = vunpack.c.h.b16 %v4808
          %v5527 = vunpack.c.l.b16 %v4809
          %v5528 = vunpack.c.h.b16 %v4809
          %v5529 = vunpack.c.l.b16 %v4810
          %v5530 = vunpack.c.h.b16 %v4810
          %v5531 = vunpack.c.l.b16 %v4811
          %v5532 = vunpack.c.h.b16 %v4811
          %v5533 = vunpack.c.l.b16 %v4812
          %v5534 = vunpack.c.h.b16 %v4812
          %v5535 = vunpack.c.l.b16 %v4813
          %v5536 = vunpack.c.h.b16 %v4813
          %v5537 = vunpack.c.l.b16 %v4814
          %v5538 = vunpack.c.h.b16 %v4814
          %v5539 = vunpack.c.l.b16 %v4815
          %v5540 = vunpack.c.h.b16 %v4815
          %v5541 = vunpack.c.l.b16 %v4816
          %v5542 = vunpack.c.h.b16 %v4816
          %v5543 = vunpack.c.l.b16 %v4817
          %v5544 = vunpack.c.h.b16 %v4817
          %v5545 = vunpack.c.l.b16 %v4818
          %v5546 = vunpack.c.h.b16 %v4818
          %v5547 = vunpack.c.l.b16 %v4819
          %v5548 = vunpack.c.h.b16 %v4819
          %v5549 = vunpack.c.l.b16 %v4820
          %v5550 = vunpack.c.h.b16 %v4820
          %v5551 = vunpack.c.l.b16 %v4821
          %v5552 = vunpack.c.h.b16 %v4821
          %v5553 = vunpack.c.l.b16 %v4822
          %v5554 = vunpack.c.h.b16 %v4822
          %v5555 = vunpack.c.l.b16 %v4823
          %v5556 = vunpack.c.h.b16 %v4823
          %v5557 = vunpack.c.l.b16 %v4824
          %v5558 = vunpack.c.h.b16 %v4824
          %v5559 = vunpack.c.l.b16 %v4825
          %v5560 = vunpack.c.h.b16 %v4825
          %v5561 = vunpack.c.l.b16 %v4826
          %v5562 = vunpack.c.h.b16 %v4826
          %v5563 = vunpack.c.l.b16 %v4827
          %v5564 = vunpack.c.h.b16 %v4827
          %v5565 = vunpack.c.l.b16 %v4828
          %v5566 = vunpack.c.h.b16 %v4828
          %v5567 = vunpack.c.l.b16 %v4829
          %v5568 = vunpack.c.h.b16 %v4829
          %v5569 = vunpack.c.l.b16 %v4830
          %v5570 = vunpack.c.h.b16 %v4830
          %v5571 = vunpack.c.l.b16 %v4831
          %v5572 = vunpack.c.h.b16 %v4831
          %v5573 = vunpack.c.l.b16 %v4832
          %v5574 = vunpack.c.h.b16 %v4832
          %v5575 = vunpack.c.l.b16 %v4833
          %v5576 = vunpack.c.h.b16 %v4833
          %v5577 = vunpack.c.l.b16 %v4834
          %v5578 = vunpack.c.h.b16 %v4834
          %v5579 = vunpack.c.l.b16 %v4835
          %v5580 = vunpack.c.h.b16 %v4835
          %v5581 = vunpack.c.l.b16 %v4836
          %v5582 = vunpack.c.h.b16 %v4836
          %v5583 = vunpack.c.l.b16 %v4837
          %v5584 = vunpack.c.h.b16 %v4837
          %v5585 = vunpack.c.l.b16 %v4838
          %v5586 = vunpack.c.h.b16 %v4838
          %v5587 = vunpack.c.l.b16 %v4839
          %v5588 = vunpack.c.h.b16 %v4839
          %v5589 = vunpack.c.l.b16 %v4840
          %v5590 = vunpack.c.h.b16 %v4840
          %v5591 = vunpack.c.l.b16 %v4841
          %v5592 = vunpack.c.h.b16 %v4841
          %v5593 = vunpack.c.l.b16 %v4842
          %v5594 = vunpack.c.h.b16 %v4842
          %v5595 = vunpack.c.l.b16 %v4843
          %v5596 = vunpack.c.h.b16 %v4843
          %v5597 = vunpack.c.l.b16 %v4844
          %v5598 = vunpack.c.h.b16 %v4844
          %v5599 = vunpack.c.l.b16 %v4845
          %v5600 = vunpack.c.h.b16 %v4845
          %v5601 = vunpack.c.l.b16 %v4846
          %v5602 = vunpack.c.h.b16 %v4846
          %v5603 = vunpack.c.l.b16 %v4847
          %v5604 = vunpack.c.h.b16 %v4847
          %v5605 = vunpack.c.l.b16 %v4848
          %v5606 = vunpack.c.h.b16 %v4848
          %v5607 = vunpack.c.l.b16 %v4849
          %v5608 = vunpack.c.h.b16 %v4849
          %v5609 = vunpack.c.l.b16 %v4850
          %v5610 = vunpack.c.h.b16 %v4850
          %v5611 = vunpack.c.l.b16 %v4851
          %v5612 = vunpack.c.h.b16 %v4851
          %v5613 = vunpack.c.l.b16 %v4852
          %v5614 = vunpack.c.h.b16 %v4852
          %v5615 = vunpack.c.l.b16 %v4853
          %v5616 = vunpack.c.h.b16 %v4853
          %v5617 = vunpack.c.l.b16 %v4854
          %v5618 = vunpack.c.h.b16 %v4854
          %v5619 = vunpack.c.l.b16 %v4855
          %v5620 = vunpack.c.h.b16 %v4855
          %v5621 = vunpack.c.l.b16 %v4856
          %v5622 = vunpack.c.h.b16 %v4856
          %v5623 = vunpack.c.l.b16 %v4857
          %v5624 = vunpack.c.h.b16 %v4857
          %v5625 = vunpack.c.l.b16 %v4858
          %v5626 = vunpack.c.h.b16 %v4858
          %v5627 = vpack.c.b16 %v5119, %v5115
          %v5628 = vpack.c.b16 %v5120, %v5116
          %v5629 = vpack.c.b16 %v5121, %v5117
          %v5630 = vpack.c.b16 %v5122, %v5118
          %v5631 = vpack.c.b16 %v5127, %v5123
          %v5632 = vpack.c.b16 %v5128, %v5124
          %v5633 = vpack.c.b16 %v5129, %v5125
          %v5634 = vpack.c.b16 %v5130, %v5126
          %v5635 = vpack.c.b16 %v5135, %v5131
          %v5636 = vpack.c.b16 %v5136, %v5132
          %v5637 = vpack.c.b16 %v5137, %v5133
          %v5638 = vpack.c.b16 %v5138, %v5134
          %v5639 = vpack.c.b16 %v5143, %v5139
          %v5640 = vpack.c.b16 %v5144, %v5140
          %v5641 = vpack.c.b16 %v5145, %v5141
          %v5642 = vpack.c.b16 %v5146, %v5142
          %v5643 = vpack.c.b16 %v5151, %v5147
          %v5644 = vpack.c.b16 %v5152, %v5148
          %v5645 = vpack.c.b16 %v5153, %v5149
          %v5646 = vpack.c.b16 %v5154, %v5150
          %v5647 = vpack.c.b16 %v5159, %v5155
          %v5648 = vpack.c.b16 %v5160, %v5156
          %v5649 = vpack.c.b16 %v5161, %v5157
          %v5650 = vpack.c.b16 %v5162, %v5158
          %v5651 = vpack.c.b16 %v5167, %v5163
          %v5652 = vpack.c.b16 %v5168, %v5164
          %v5653 = vpack.c.b16 %v5169, %v5165
          %v5654 = vpack.c.b16 %v5170, %v5166
          %v5655 = vpack.c.b16 %v5175, %v5171
          %v5656 = vpack.c.b16 %v5176, %v5172
          %v5657 = vpack.c.b16 %v5177, %v5173
          %v5658 = vpack.c.b16 %v5178, %v5174
          %v5659 = vpack.c.b16 %v5183, %v5179
          %v5660 = vpack.c.b16 %v5184, %v5180
          %v5661 = vpack.c.b16 %v5185, %v5181
          %v5662 = vpack.c.b16 %v5186, %v5182
          %v5663 = vpack.c.b16 %v5191, %v5187
          %v5664 = vpack.c.b16 %v5192, %v5188
          %v5665 = vpack.c.b16 %v5193, %v5189
          %v5666 = vpack.c.b16 %v5194, %v5190
          %v5667 = vpack.c.b16 %v5199, %v5195
          %v5668 = vpack.c.b16 %v5200, %v5196
          %v5669 = vpack.c.b16 %v5201, %v5197
          %v5670 = vpack.c.b16 %v5202, %v5198
          %v5671 = vpack.c.b16 %v5207, %v5203
          %v5672 = vpack.c.b16 %v5208, %v5204
          %v5673 = vpack.c.b16 %v5209, %v5205
          %v5674 = vpack.c.b16 %v5210, %v5206
          %v5675 = vpack.c.b16 %v5215, %v5211
          %v5676 = vpack.c.b16 %v5216, %v5212
          %v5677 = vpack.c.b16 %v5217, %v5213
          %v5678 = vpack.c.b16 %v5218, %v5214
          %v5679 = vpack.c.b16 %v5223, %v5219
          %v5680 = vpack.c.b16 %v5224, %v5220
          %v5681 = vpack.c.b16 %v5225, %v5221
          %v5682 = vpack.c.b16 %v5226, %v5222
          %v5683 = vpack.c.b16 %v5231, %v5227
          %v5684 = vpack.c.b16 %v5232, %v5228
          %v5685 = vpack.c.b16 %v5233, %v5229
          %v5686 = vpack.c.b16 %v5234, %v5230
          %v5687 = vpack.c.b16 %v5239, %v5235
          %v5688 = vpack.c.b16 %v5240, %v5236
          %v5689 = vpack.c.b16 %v5241, %v5237
          %v5690 = vpack.c.b16 %v5242, %v5238
          %v5691 = vpack.c.b16 %v5247, %v5243
          %v5692 = vpack.c.b16 %v5248, %v5244
          %v5693 = vpack.c.b16 %v5249, %v5245
          %v5694 = vpack.c.b16 %v5250, %v5246
          %v5695 = vpack.c.b16 %v5255, %v5251
          %v5696 = vpack.c.b16 %v5256, %v5252
          %v5697 = vpack.c.b16 %v5257, %v5253
          %v5698 = vpack.c.b16 %v5258, %v5254
          %v5699 = vpack.c.b16 %v5263, %v5259
          %v5700 = vpack.c.b16 %v5264, %v5260
          %v5701 = vpack.c.b16 %v5265, %v5261
          %v5702 = vpack.c.b16 %v5266, %v5262
          %v5703 = vpack.c.b16 %v5271, %v5267
          %v5704 = vpack.c.b16 %v5272, %v5268
          %v5705 = vpack.c.b16 %v5273, %v5269
          %v5706 = vpack.c.b16 %v5274, %v5270
          %v5707 = vpack.c.b16 %v5279, %v5275
          %v5708 = vpack.c.b16 %v5280, %v5276
          %v5709 = vpack.c.b16 %v5281, %v5277
          %v5710 = vpack.c.b16 %v5282, %v5278
          %v5711 = vpack.c.b16 %v5287, %v5283
          %v5712 = vpack.c.b16 %v5288, %v5284
          %v5713 = vpack.c.b16 %v5289, %v5285
          %v5714 = vpack.c.b16 %v5290, %v5286
          %v5715 = vpack.c.b16 %v5295, %v5291
          %v5716 = vpack.c.b16 %v5296, %v5292
          %v5717 = vpack.c.b16 %v5297, %v5293
          %v5718 = vpack.c.b16 %v5298, %v5294
          %v5719 = vpack.c.b16 %v5303, %v5299
          %v5720 = vpack.c.b16 %v5304, %v5300
          %v5721 = vpack.c.b16 %v5305, %v5301
          %v5722 = vpack.c.b16 %v5306, %v5302
          %v5723 = vpack.c.b16 %v5311, %v5307
          %v5724 = vpack.c.b16 %v5312, %v5308
          %v5725 = vpack.c.b16 %v5313, %v5309
          %v5726 = vpack.c.b16 %v5314, %v5310
          %v5727 = vpack.c.b16 %v5319, %v5315
          %v5728 = vpack.c.b16 %v5320, %v5316
          %v5729 = vpack.c.b16 %v5321, %v5317
          %v5730 = vpack.c.b16 %v5322, %v5318
          %v5731 = vpack.c.b16 %v5327, %v5323
          %v5732 = vpack.c.b16 %v5328, %v5324
          %v5733 = vpack.c.b16 %v5329, %v5325
          %v5734 = vpack.c.b16 %v5330, %v5326
          %v5735 = vpack.c.b16 %v5335, %v5331
          %v5736 = vpack.c.b16 %v5336, %v5332
          %v5737 = vpack.c.b16 %v5337, %v5333
          %v5738 = vpack.c.b16 %v5338, %v5334
          %v5739 = vpack.c.b16 %v5343, %v5339
          %v5740 = vpack.c.b16 %v5344, %v5340
          %v5741 = vpack.c.b16 %v5345, %v5341
          %v5742 = vpack.c.b16 %v5346, %v5342
          %v5743 = vpack.c.b16 %v5351, %v5347
          %v5744 = vpack.c.b16 %v5352, %v5348
          %v5745 = vpack.c.b16 %v5353, %v5349
          %v5746 = vpack.c.b16 %v5354, %v5350
          %v5747 = vpack.c.b16 %v5359, %v5355
          %v5748 = vpack.c.b16 %v5360, %v5356
          %v5749 = vpack.c.b16 %v5361, %v5357
          %v5750 = vpack.c.b16 %v5362, %v5358
          %v5751 = vpack.c.b16 %v5367, %v5363
          %v5752 = vpack.c.b16 %v5368, %v5364
          %v5753 = vpack.c.b16 %v5369, %v5365
          %v5754 = vpack.c.b16 %v5370, %v5366
          %v5755 = vpack.c.b16 %v5375, %v5371
          %v5756 = vpack.c.b16 %v5376, %v5372
          %v5757 = vpack.c.b16 %v5377, %v5373
          %v5758 = vpack.c.b16 %v5378, %v5374
          %v5759 = vpack.c.b16 %v5383, %v5379
          %v5760 = vpack.c.b16 %v5384, %v5380
          %v5761 = vpack.c.b16 %v5385, %v5381
          %v5762 = vpack.c.b16 %v5386, %v5382
          %v5763 = vpack.c.b16 %v5391, %v5387
          %v5764 = vpack.c.b16 %v5392, %v5388
          %v5765 = vpack.c.b16 %v5393, %v5389
          %v5766 = vpack.c.b16 %v5394, %v5390
          %v5767 = vpack.c.b16 %v5399, %v5395
          %v5768 = vpack.c.b16 %v5400, %v5396
          %v5769 = vpack.c.b16 %v5401, %v5397
          %v5770 = vpack.c.b16 %v5402, %v5398
          %v5771 = vpack.c.b16 %v5407, %v5403
          %v5772 = vpack.c.b16 %v5408, %v5404
          %v5773 = vpack.c.b16 %v5409, %v5405
          %v5774 = vpack.c.b16 %v5410, %v5406
          %v5775 = vpack.c.b16 %v5415, %v5411
          %v5776 = vpack.c.b16 %v5416, %v5412
          %v5777 = vpack.c.b16 %v5417, %v5413
          %v5778 = vpack.c.b16 %v5418, %v5414
          %v5779 = vpack.c.b16 %v5423, %v5419
          %v5780 = vpack.c.b16 %v5424, %v5420
          %v5781 = vpack.c.b16 %v5425, %v5421
          %v5782 = vpack.c.b16 %v5426, %v5422
          %v5783 = vpack.c.b16 %v5431, %v5427
          %v5784 = vpack.c.b16 %v5432, %v5428
          %v5785 = vpack.c.b16 %v5433, %v5429
          %v5786 = vpack.c.b16 %v5434, %v5430
          %v5787 = vpack.c.b16 %v5439, %v5435
          %v5788 = vpack.c.b16 %v5440, %v5436
          %v5789 = vpack.c.b16 %v5441, %v5437
          %v5790 = vpack.c.b16 %v5442, %v5438
          %v5791 = vpack.c.b16 %v5447, %v5443
          %v5792 = vpack.c.b16 %v5448, %v5444
          %v5793 = vpack.c.b16 %v5449, %v5445
          %v5794 = vpack.c.b16 %v5450, %v5446
          %v5795 = vpack.c.b16 %v5455, %v5451
          %v5796 = vpack.c.b16 %v5456, %v5452
          %v5797 = vpack.c.b16 %v5457, %v5453
          %v5798 = vpack.c.b16 %v5458, %v5454
          %v5799 = vpack.c.b16 %v5463, %v5459
          %v5800 = vpack.c.b16 %v5464, %v5460
          %v5801 = vpack.c.b16 %v5465, %v5461
          %v5802 = vpack.c.b16 %v5466, %v5462
          %v5803 = vpack.c.b16 %v5471, %v5467
          %v5804 = vpack.c.b16 %v5472, %v5468
          %v5805 = vpack.c.b16 %v5473, %v5469
          %v5806 = vpack.c.b16 %v5474, %v5470
          %v5807 = vpack.c.b16 %v5479, %v5475
          %v5808 = vpack.c.b16 %v5480, %v5476
          %v5809 = vpack.c.b16 %v5481, %v5477
          %v5810 = vpack.c.b16 %v5482, %v5478
          %v5811 = vpack.c.b16 %v5487, %v5483
          %v5812 = vpack.c.b16 %v5488, %v5484
          %v5813 = vpack.c.b16 %v5489, %v5485
          %v5814 = vpack.c.b16 %v5490, %v5486
          %v5815 = vpack.c.b16 %v5495, %v5491
          %v5816 = vpack.c.b16 %v5496, %v5492
          %v5817 = vpack.c.b16 %v5497, %v5493
          %v5818 = vpack.c.b16 %v5498, %v5494
          %v5819 = vpack.c.b16 %v5503, %v5499
          %v5820 = vpack.c.b16 %v5504, %v5500
          %v5821 = vpack.c.b16 %v5505, %v5501
          %v5822 = vpack.c.b16 %v5506, %v5502
          %v5823 = vpack.c.b16 %v5511, %v5507
          %v5824 = vpack.c.b16 %v5512, %v5508
          %v5825 = vpack.c.b16 %v5513, %v5509
          %v5826 = vpack.c.b16 %v5514, %v5510
          %v5827 = vpack.c.b16 %v5519, %v5515
          %v5828 = vpack.c.b16 %v5520, %v5516
          %v5829 = vpack.c.b16 %v5521, %v5517
          %v5830 = vpack.c.b16 %v5522, %v5518
          %v5831 = vpack.c.b16 %v5527, %v5523
          %v5832 = vpack.c.b16 %v5528, %v5524
          %v5833 = vpack.c.b16 %v5529, %v5525
          %v5834 = vpack.c.b16 %v5530, %v5526
          %v5835 = vpack.c.b16 %v5535, %v5531
          %v5836 = vpack.c.b16 %v5536, %v5532
          %v5837 = vpack.c.b16 %v5537, %v5533
          %v5838 = vpack.c.b16 %v5538, %v5534
          %v5839 = vpack.c.b16 %v5543, %v5539
          %v5840 = vpack.c.b16 %v5544, %v5540
          %v5841 = vpack.c.b16 %v5545, %v5541
          %v5842 = vpack.c.b16 %v5546, %v5542
          %v5843 = vpack.c.b16 %v5551, %v5547
          %v5844 = vpack.c.b16 %v5552, %v5548
          %v5845 = vpack.c.b16 %v5553, %v5549
          %v5846 = vpack.c.b16 %v5554, %v5550
          %v5847 = vpack.c.b16 %v5559, %v5555
          %v5848 = vpack.c.b16 %v5560, %v5556
          %v5849 = vpack.c.b16 %v5561, %v5557
          %v5850 = vpack.c.b16 %v5562, %v5558
          %v5851 = vpack.c.b16 %v5567, %v5563
          %v5852 = vpack.c.b16 %v5568, %v5564
          %v5853 = vpack.c.b16 %v5569, %v5565
          %v5854 = vpack.c.b16 %v5570, %v5566
          %v5855 = vpack.c.b16 %v5575, %v5571
          %v5856 = vpack.c.b16 %v5576, %v5572
          %v5857 = vpack.c.b16 %v5577, %v5573
          %v5858 = vpack.c.b16 %v5578, %v5574
          %v5859 = vpack.c.b16 %v5583, %v5579
          %v5860 = vpack.c.b16 %v5584, %v5580
          %v5861 = vpack.c.b16 %v5585, %v5581
          %v5862 = vpack.c.b16 %v5586, %v5582
          %v5863 = vpack.c.b16 %v5591, %v5587
          %v5864 = vpack.c.b16 %v5592, %v5588
          %v5865 = vpack.c.b16 %v5593, %v5589
          %v5866 = vpack.c.b16 %v5594, %v5590
          %v5867 = vpack.c.b16 %v5599, %v5595
          %v5868 = vpack.c.b16 %v5600, %v5596
          %v5869 = vpack.c.b16 %v5601, %v5597
          %v5870 = vpack.c.b16 %v5602, %v5598
          %v5871 = vpack.c.b16 %v5607, %v5603
          %v5872 = vpack.c.b16 %v5608, %v5604
          %v5873 = vpack.c.b16 %v5609, %v5605
          %v5874 = vpack.c.b16 %v5610, %v5606
          %v5875 = vpack.c.b16 %v5615, %v5611
          %v5876 = vpack.c.b16 %v5616, %v5612
          %v5877 = vpack.c.b16 %v5617, %v5613
          %v5878 = vpack.c.b16 %v5618, %v5614
          %v5879 = vpack.c.b16 %v5623, %v5619
          %v5880 = vpack.c.b16 %v5624, %v5620
          %v5881 = vpack.c.b16 %v5625, %v5621
          %v5882 = vpack.c.b16 %v5626, %v5622
          %6139 = vmatprep.subr.bf16.mxu0 %v5656
          %6140 = vmatpush1.bf16.msra.mxu0 %v5655
          %6141 = vmatprep.subr.bf16.mxu0 %v5652
          %6142 = vmatpush1.bf16.msra.mxu0 %v5651
          %6143 = vmatprep.subr.bf16.mxu0 %v5648
          %6144 = vmatpush1.bf16.msra.mxu0 %v5647
          %6145 = vmatprep.subr.bf16.mxu0 %v5644
          %6146 = vmatpush1.bf16.msra.mxu0 %v5643
          %6147 = vmatprep.subr.bf16.mxu0 %v5640
          %6148 = vmatpush1.bf16.msra.mxu0 %v5639
          %6149 = vmatprep.subr.bf16.mxu0 %v5636
          %6150 = vmatpush1.bf16.msra.mxu0 %v5635
          %6151 = vmatprep.subr.bf16.mxu0 %v5632
          %6152 = vmatpush1.bf16.msra.mxu0 %v5631
          %6153 = vmatprep.subr.bf16.mxu0 %v5628
          %6154 = vmatpush1.bf16.msra.mxu0 %v5627
          %6155 = vmatprep.subr.bf16.mxu0 %v5688
          %6156 = vmatpush2.bf16.msra.mxu0 %v5687
          %6157 = vmatprep.subr.bf16.mxu0 %v5684
          %6158 = vmatpush2.bf16.msra.mxu0 %v5683
          %6159 = vmatprep.subr.bf16.mxu0 %v5680
          %6160 = vmatpush2.bf16.msra.mxu0 %v5679
          %6161 = vmatprep.subr.bf16.mxu0 %v5676
          %6162 = vmatpush2.bf16.msra.mxu0 %v5675
          %6163 = vmatprep.subr.bf16.mxu0 %v5672
          %6164 = vmatpush2.bf16.msra.mxu0 %v5671
          %6165 = vmatprep.subr.bf16.mxu0 %v5668
          %6166 = vmatpush2.bf16.msra.mxu0 %v5667
          %6167 = vmatprep.subr.bf16.mxu0 %v5664
          %6168 = vmatpush2.bf16.msra.mxu0 %v5663
          %6169 = vmatprep.subr.bf16.mxu0 %v5660
          %6170 = vmatpush2.bf16.msra.mxu0 %v5659
          %6171 = vmatprep.mubr.bf16.mxu0 %v4596
          %6172 = vmatmul.mubr.bf16.gmra.mxu0 %v4595
          %v6173 = vpop.f32.mrf.mxu0
          %v6174 = vadd.f32 0.0, %v6173
          %v6175 = vpop.f32.mrf.mxu0
          %v6176 = vadd.f32 0.0, %v6175
          %v6177 = vpop.f32.mrf.mxu0
          %v6178 = vpop.f32.mrf.mxu0
          %6179 = vdwg.mxu0
          %6180 = vmatprep.subr.bf16.mxu0 %v5720
          %6181 = vmatpush1.bf16.msra.mxu0 %v5719
          %6182 = vmatprep.subr.bf16.mxu0 %v5716
          %6183 = vmatpush1.bf16.msra.mxu0 %v5715
          %6184 = vmatprep.subr.bf16.mxu0 %v5712
          %6185 = vmatpush1.bf16.msra.mxu0 %v5711
          %6186 = vmatprep.subr.bf16.mxu0 %v5708
          %6187 = vmatpush1.bf16.msra.mxu0 %v5707
          %6188 = vmatprep.subr.bf16.mxu0 %v5704
          %6189 = vmatpush1.bf16.msra.mxu0 %v5703
          %6190 = vmatprep.subr.bf16.mxu0 %v5700
          %6191 = vmatpush1.bf16.msra.mxu0 %v5699
          %6192 = vmatprep.subr.bf16.mxu0 %v5696
          %6193 = vmatpush1.bf16.msra.mxu0 %v5695
          %6194 = vmatprep.subr.bf16.mxu0 %v5692
          %6195 = vmatpush1.bf16.msra.mxu0 %v5691
          %6196 = vmatprep.subr.bf16.mxu0 %v5752
          %6197 = vmatpush2.bf16.msra.mxu0 %v5751
          %6198 = vmatprep.subr.bf16.mxu0 %v5748
          %6199 = vmatpush2.bf16.msra.mxu0 %v5747
          %6200 = vmatprep.subr.bf16.mxu0 %v5744
          %6201 = vmatpush2.bf16.msra.mxu0 %v5743
          %6202 = vmatprep.subr.bf16.mxu0 %v5740
          %6203 = vmatpush2.bf16.msra.mxu0 %v5739
          %6204 = vmatprep.subr.bf16.mxu0 %v5736
          %6205 = vmatpush2.bf16.msra.mxu0 %v5735
          %6206 = vmatprep.subr.bf16.mxu0 %v5732
          %6207 = vmatpush2.bf16.msra.mxu0 %v5731
          %6208 = vmatprep.subr.bf16.mxu0 %v5728
          %6209 = vmatpush2.bf16.msra.mxu0 %v5727
          %6210 = vmatprep.subr.bf16.mxu0 %v5724
          %6211 = vmatpush2.bf16.msra.mxu0 %v5723
          %6212 = vmatprep.mubr.bf16.mxu0 %v4598
          %6213 = vmatmul.mubr.bf16.gmra.mxu0 %v4597
          %v6214 = vpop.f32.mrf.mxu0
          %v6215 = vadd.f32 %v6174, %v6214
          %v6216 = vpop.f32.mrf.mxu0
          %v6217 = vadd.f32 %v6176, %v6216
          %v6218 = vpop.f32.mrf.mxu0
          %v6219 = vpop.f32.mrf.mxu0
          %6220 = vdwg.mxu0
          %6221 = vmatprep.subr.bf16.mxu0 %v5784
          %6222 = vmatpush1.bf16.msra.mxu0 %v5783
          %6223 = vmatprep.subr.bf16.mxu0 %v5780
          %6224 = vmatpush1.bf16.msra.mxu0 %v5779
          %6225 = vmatprep.subr.bf16.mxu0 %v5776
          %6226 = vmatpush1.bf16.msra.mxu0 %v5775
          %6227 = vmatprep.subr.bf16.mxu0 %v5772
          %6228 = vmatpush1.bf16.msra.mxu0 %v5771
          %6229 = vmatprep.subr.bf16.mxu0 %v5768
          %6230 = vmatpush1.bf16.msra.mxu0 %v5767
          %6231 = vmatprep.subr.bf16.mxu0 %v5764
          %6232 = vmatpush1.bf16.msra.mxu0 %v5763
          %6233 = vmatprep.subr.bf16.mxu0 %v5760
          %6234 = vmatpush1.bf16.msra.mxu0 %v5759
          %6235 = vmatprep.subr.bf16.mxu0 %v5756
          %6236 = vmatpush1.bf16.msra.mxu0 %v5755
          %6237 = vmatprep.subr.bf16.mxu0 %v5816
          %6238 = vmatpush2.bf16.msra.mxu0 %v5815
          %6239 = vmatprep.subr.bf16.mxu0 %v5812
          %6240 = vmatpush2.bf16.msra.mxu0 %v5811
          %6241 = vmatprep.subr.bf16.mxu0 %v5808
          %6242 = vmatpush2.bf16.msra.mxu0 %v5807
          %6243 = vmatprep.subr.bf16.mxu0 %v5804
          %6244 = vmatpush2.bf16.msra.mxu0 %v5803
          %6245 = vmatprep.subr.bf16.mxu0 %v5800
          %6246 = vmatpush2.bf16.msra.mxu0 %v5799
          %6247 = vmatprep.subr.bf16.mxu0 %v5796
          %6248 = vmatpush2.bf16.msra.mxu0 %v5795
          %6249 = vmatprep.subr.bf16.mxu0 %v5792
          %6250 = vmatpush2.bf16.msra.mxu0 %v5791
          %6251 = vmatprep.subr.bf16.mxu0 %v5788
          %6252 = vmatpush2.bf16.msra.mxu0 %v5787
          %6253 = vmatprep.mubr.bf16.mxu0 %v4600
          %6254 = vmatmul.mubr.bf16.gmra.mxu0 %v4599
          %v6255 = vpop.f32.mrf.mxu0
          %v6256 = vadd.f32 %v6215, %v6255
          %v6257 = vpop.f32.mrf.mxu0
          %v6258 = vadd.f32 %v6217, %v6257
          %v6259 = vpop.f32.mrf.mxu0
          %v6260 = vpop.f32.mrf.mxu0
          %6261 = vdwg.mxu0
          %6262 = vmatprep.subr.bf16.mxu0 %v5848
          %6263 = vmatpush1.bf16.msra.mxu0 %v5847
          %6264 = vmatprep.subr.bf16.mxu0 %v5844
          %6265 = vmatpush1.bf16.msra.mxu0 %v5843
          %6266 = vmatprep.subr.bf16.mxu0 %v5840
          %6267 = vmatpush1.bf16.msra.mxu0 %v5839
          %6268 = vmatprep.subr.bf16.mxu0 %v5836
          %6269 = vmatpush1.bf16.msra.mxu0 %v5835
          %6270 = vmatprep.subr.bf16.mxu0 %v5832
          %6271 = vmatpush1.bf16.msra.mxu0 %v5831
          %6272 = vmatprep.subr.bf16.mxu0 %v5828
          %6273 = vmatpush1.bf16.msra.mxu0 %v5827
          %6274 = vmatprep.subr.bf16.mxu0 %v5824
          %6275 = vmatpush1.bf16.msra.mxu0 %v5823
          %6276 = vmatprep.subr.bf16.mxu0 %v5820
          %6277 = vmatpush1.bf16.msra.mxu0 %v5819
          %6278 = vmatprep.subr.bf16.mxu0 %v5880
          %6279 = vmatpush2.bf16.msra.mxu0 %v5879
          %6280 = vmatprep.subr.bf16.mxu0 %v5876
          %6281 = vmatpush2.bf16.msra.mxu0 %v5875
          %6282 = vmatprep.subr.bf16.mxu0 %v5872
          %6283 = vmatpush2.bf16.msra.mxu0 %v5871
          %6284 = vmatprep.subr.bf16.mxu0 %v5868
          %6285 = vmatpush2.bf16.msra.mxu0 %v5867
          %6286 = vmatprep.subr.bf16.mxu0 %v5864
          %6287 = vmatpush2.bf16.msra.mxu0 %v5863
          %6288 = vmatprep.subr.bf16.mxu0 %v5860
          %6289 = vmatpush2.bf16.msra.mxu0 %v5859
          %6290 = vmatprep.subr.bf16.mxu0 %v5856
          %6291 = vmatpush2.bf16.msra.mxu0 %v5855
          %6292 = vmatprep.subr.bf16.mxu0 %v5852
          %6293 = vmatpush2.bf16.msra.mxu0 %v5851
          %6294 = vmatprep.mubr.bf16.mxu0 %v4602
          %6295 = vmatmul.mubr.bf16.gmra.mxu0 %v4601
          %v6296 = vpop.f32.mrf.mxu0
          %v6297 = vadd.f32 %v6256, %v6296
          %v6298 = vpop.f32.mrf.mxu0
          %v6299 = vadd.f32 %v6258, %v6298
          %v6300 = vpop.f32.mrf.mxu0
          %v6301 = vpop.f32.mrf.mxu0
          %6302 = vdwg.mxu0
          %6303 = vmatprep.subr.bf16.mxu0 %v5658
          %6304 = vmatpush1.bf16.msra.mxu0 %v5657
          %6305 = vmatprep.subr.bf16.mxu0 %v5654
          %6306 = vmatpush1.bf16.msra.mxu0 %v5653
          %6307 = vmatprep.subr.bf16.mxu0 %v5650
          %6308 = vmatpush1.bf16.msra.mxu0 %v5649
          %6309 = vmatprep.subr.bf16.mxu0 %v5646
          %6310 = vmatpush1.bf16.msra.mxu0 %v5645
          %6311 = vmatprep.subr.bf16.mxu0 %v5642
          %6312 = vmatpush1.bf16.msra.mxu0 %v5641
          %6313 = vmatprep.subr.bf16.mxu0 %v5638
          %6314 = vmatpush1.bf16.msra.mxu0 %v5637
          %6315 = vmatprep.subr.bf16.mxu0 %v5634
          %6316 = vmatpush1.bf16.msra.mxu0 %v5633
          %6317 = vmatprep.subr.bf16.mxu0 %v5630
          %6318 = vmatpush1.bf16.msra.mxu0 %v5629
          %6319 = vmatprep.subr.bf16.mxu0 %v5690
          %6320 = vmatpush2.bf16.msra.mxu0 %v5689
          %6321 = vmatprep.subr.bf16.mxu0 %v5686
          %6322 = vmatpush2.bf16.msra.mxu0 %v5685
          %6323 = vmatprep.subr.bf16.mxu0 %v5682
          %6324 = vmatpush2.bf16.msra.mxu0 %v5681
          %6325 = vmatprep.subr.bf16.mxu0 %v5678
          %6326 = vmatpush2.bf16.msra.mxu0 %v5677
          %6327 = vmatprep.subr.bf16.mxu0 %v5674
          %6328 = vmatpush2.bf16.msra.mxu0 %v5673
          %6329 = vmatprep.subr.bf16.mxu0 %v5670
          %6330 = vmatpush2.bf16.msra.mxu0 %v5669
          %6331 = vmatprep.subr.bf16.mxu0 %v5666
          %6332 = vmatpush2.bf16.msra.mxu0 %v5665
          %6333 = vmatprep.subr.bf16.mxu0 %v5662
          %6334 = vmatpush2.bf16.msra.mxu0 %v5661
          %6335 = vmatprep.mubr.bf16.mxu0 %v4596
          %6336 = vmatmul.mubr.bf16.gmra.mxu0 %v4595
          %v6337 = vpop.f32.mrf.mxu0
          %v6338 = vadd.f32 0.0, %v6337
          %v6339 = vpop.f32.mrf.mxu0
          %v6340 = vadd.f32 0.0, %v6339
          %v6341 = vpop.f32.mrf.mxu0
          %v6342 = vpop.f32.mrf.mxu0
          %6343 = vdwg.mxu0
          %6344 = vmatprep.subr.bf16.mxu0 %v5722
          %6345 = vmatpush1.bf16.msra.mxu0 %v5721
          %6346 = vmatprep.subr.bf16.mxu0 %v5718
          %6347 = vmatpush1.bf16.msra.mxu0 %v5717
          %6348 = vmatprep.subr.bf16.mxu0 %v5714
          %6349 = vmatpush1.bf16.msra.mxu0 %v5713
          %6350 = vmatprep.subr.bf16.mxu0 %v5710
          %6351 = vmatpush1.bf16.msra.mxu0 %v5709
          %6352 = vmatprep.subr.bf16.mxu0 %v5706
          %6353 = vmatpush1.bf16.msra.mxu0 %v5705
          %6354 = vmatprep.subr.bf16.mxu0 %v5702
          %6355 = vmatpush1.bf16.msra.mxu0 %v5701
          %6356 = vmatprep.subr.bf16.mxu0 %v5698
          %6357 = vmatpush1.bf16.msra.mxu0 %v5697
          %6358 = vmatprep.subr.bf16.mxu0 %v5694
          %6359 = vmatpush1.bf16.msra.mxu0 %v5693
          %6360 = vmatprep.subr.bf16.mxu0 %v5754
          %6361 = vmatpush2.bf16.msra.mxu0 %v5753
          %6362 = vmatprep.subr.bf16.mxu0 %v5750
          %6363 = vmatpush2.bf16.msra.mxu0 %v5749
          %6364 = vmatprep.subr.bf16.mxu0 %v5746
          %6365 = vmatpush2.bf16.msra.mxu0 %v5745
          %6366 = vmatprep.subr.bf16.mxu0 %v5742
          %6367 = vmatpush2.bf16.msra.mxu0 %v5741
          %6368 = vmatprep.subr.bf16.mxu0 %v5738
          %6369 = vmatpush2.bf16.msra.mxu0 %v5737
          %6370 = vmatprep.subr.bf16.mxu0 %v5734
          %6371 = vmatpush2.bf16.msra.mxu0 %v5733
          %6372 = vmatprep.subr.bf16.mxu0 %v5730
          %6373 = vmatpush2.bf16.msra.mxu0 %v5729
          %6374 = vmatprep.subr.bf16.mxu0 %v5726
          %6375 = vmatpush2.bf16.msra.mxu0 %v5725
          %6376 = vmatprep.mubr.bf16.mxu0 %v4598
          %6377 = vmatmul.mubr.bf16.gmra.mxu0 %v4597
          %v6378 = vpop.f32.mrf.mxu0
          %v6379 = vadd.f32 %v6338, %v6378
          %v6380 = vpop.f32.mrf.mxu0
          %v6381 = vadd.f32 %v6340, %v6380
          %v6382 = vpop.f32.mrf.mxu0
          %v6383 = vpop.f32.mrf.mxu0
          %6384 = vdwg.mxu0
          %6385 = vmatprep.subr.bf16.mxu0 %v5786
          %6386 = vmatpush1.bf16.msra.mxu0 %v5785
          %6387 = vmatprep.subr.bf16.mxu0 %v5782
          %6388 = vmatpush1.bf16.msra.mxu0 %v5781
          %6389 = vmatprep.subr.bf16.mxu0 %v5778
          %6390 = vmatpush1.bf16.msra.mxu0 %v5777
          %6391 = vmatprep.subr.bf16.mxu0 %v5774
          %6392 = vmatpush1.bf16.msra.mxu0 %v5773
          %6393 = vmatprep.subr.bf16.mxu0 %v5770
          %6394 = vmatpush1.bf16.msra.mxu0 %v5769
          %6395 = vmatprep.subr.bf16.mxu0 %v5766
          %6396 = vmatpush1.bf16.msra.mxu0 %v5765
          %6397 = vmatprep.subr.bf16.mxu0 %v5762
          %6398 = vmatpush1.bf16.msra.mxu0 %v5761
          %6399 = vmatprep.subr.bf16.mxu0 %v5758
          %6400 = vmatpush1.bf16.msra.mxu0 %v5757
          %6401 = vmatprep.subr.bf16.mxu0 %v5818
          %6402 = vmatpush2.bf16.msra.mxu0 %v5817
          %6403 = vmatprep.subr.bf16.mxu0 %v5814
          %6404 = vmatpush2.bf16.msra.mxu0 %v5813
          %6405 = vmatprep.subr.bf16.mxu0 %v5810
          %6406 = vmatpush2.bf16.msra.mxu0 %v5809
          %6407 = vmatprep.subr.bf16.mxu0 %v5806
          %6408 = vmatpush2.bf16.msra.mxu0 %v5805
          %6409 = vmatprep.subr.bf16.mxu0 %v5802
          %6410 = vmatpush2.bf16.msra.mxu0 %v5801
          %6411 = vmatprep.subr.bf16.mxu0 %v5798
          %6412 = vmatpush2.bf16.msra.mxu0 %v5797
          %6413 = vmatprep.subr.bf16.mxu0 %v5794
          %6414 = vmatpush2.bf16.msra.mxu0 %v5793
          %6415 = vmatprep.subr.bf16.mxu0 %v5790
          %6416 = vmatpush2.bf16.msra.mxu0 %v5789
          %6417 = vmatprep.mubr.bf16.mxu0 %v4600
          %6418 = vmatmul.mubr.bf16.gmra.mxu0 %v4599
          %v6419 = vpop.f32.mrf.mxu0
          %v6420 = vadd.f32 %v6379, %v6419
          %v6421 = vpop.f32.mrf.mxu0
          %v6422 = vadd.f32 %v6381, %v6421
          %v6423 = vpop.f32.mrf.mxu0
          %v6424 = vpop.f32.mrf.mxu0
          %6425 = vdwg.mxu0
          %6426 = vmatprep.subr.bf16.mxu0 %v5850
          %6427 = vmatpush1.bf16.msra.mxu0 %v5849
          %6428 = vmatprep.subr.bf16.mxu0 %v5846
          %6429 = vmatpush1.bf16.msra.mxu0 %v5845
          %6430 = vmatprep.subr.bf16.mxu0 %v5842
          %6431 = vmatpush1.bf16.msra.mxu0 %v5841
          %6432 = vmatprep.subr.bf16.mxu0 %v5838
          %6433 = vmatpush1.bf16.msra.mxu0 %v5837
          %6434 = vmatprep.subr.bf16.mxu0 %v5834
          %6435 = vmatpush1.bf16.msra.mxu0 %v5833
          %6436 = vmatprep.subr.bf16.mxu0 %v5830
          %6437 = vmatpush1.bf16.msra.mxu0 %v5829
          %6438 = vmatprep.subr.bf16.mxu0 %v5826
          %6439 = vmatpush1.bf16.msra.mxu0 %v5825
          %6440 = vmatprep.subr.bf16.mxu0 %v5822
          %6441 = vmatpush1.bf16.msra.mxu0 %v5821
          %6442 = vmatprep.subr.bf16.mxu0 %v5882
          %6443 = vmatpush2.bf16.msra.mxu0 %v5881
          %6444 = vmatprep.subr.bf16.mxu0 %v5878
          %6445 = vmatpush2.bf16.msra.mxu0 %v5877
          %6446 = vmatprep.subr.bf16.mxu0 %v5874
          %6447 = vmatpush2.bf16.msra.mxu0 %v5873
          %6448 = vmatprep.subr.bf16.mxu0 %v5870
          %6449 = vmatpush2.bf16.msra.mxu0 %v5869
          %6450 = vmatprep.subr.bf16.mxu0 %v5866
          %6451 = vmatpush2.bf16.msra.mxu0 %v5865
          %6452 = vmatprep.subr.bf16.mxu0 %v5862
          %6453 = vmatpush2.bf16.msra.mxu0 %v5861
          %6454 = vmatprep.subr.bf16.mxu0 %v5858
          %6455 = vmatpush2.bf16.msra.mxu0 %v5857
          %6456 = vmatprep.subr.bf16.mxu0 %v5854
          %6457 = vmatpush2.bf16.msra.mxu0 %v5853
          %6458 = vmatprep.mubr.bf16.mxu0 %v4602
          %6459 = vmatmul.mubr.bf16.gmra.mxu0 %v4601
          %v6460 = vpop.f32.mrf.mxu0
          %v6461 = vadd.f32 %v6420, %v6460
          %v6462 = vpop.f32.mrf.mxu0
          %v6463 = vadd.f32 %v6422, %v6462
          %v6464 = vpop.f32.mrf.mxu0
          %v6465 = vpop.f32.mrf.mxu0
          %6466 = vdwg.mxu0
          %v6467 = vld [vmem:[#allocation11] ss:$2 sm:$0xf]
          %s6468 = scalar_lea.vmem [#allocation11], 1
          %v6469 = vld [vmem:[%s6468] ss:$2 sm:$0xf]
          %v6470 = vrot.slane %v6297, 4
          %v6471 = vadd.f32 %v6297, %v6470
          %v6472 = vrot.slane %v6471, 2
          %v6473 = vadd.f32 %v6471, %v6472
          %v6474 = vrot.slane %v6473, 1
          %v6475 = vadd.f32 %v6473, %v6474
          %v6476 = vrot.slane %v6299, 4
          %v6477 = vadd.f32 %v6299, %v6476
          %v6478 = vrot.slane %v6477, 2
          %v6479 = vadd.f32 %v6477, %v6478
          %v6480 = vrot.slane %v6479, 1
          %v6481 = vadd.f32 %v6479, %v6480
          %v6482 = vrot.slane %v6461, 4
          %v6483 = vadd.f32 %v6461, %v6482
          %v6484 = vrot.slane %v6483, 2
          %v6485 = vadd.f32 %v6483, %v6484
          %v6486 = vrot.slane %v6485, 1
          %v6487 = vadd.f32 %v6485, %v6486
          %v6488 = vrot.slane %v6463, 4
          %v6489 = vadd.f32 %v6463, %v6488
          %v6490 = vrot.slane %v6489, 2
          %v6491 = vadd.f32 %v6489, %v6490
          %v6492 = vrot.slane %v6491, 1
          %v6493 = vadd.f32 %v6491, %v6492
          %v6494 = vmul.f32 %v6475, %v4333
          %v6495 = vmul.f32 %v6481, %v4333
          %v6496 = vmul.f32 %v6487, %v4333
          %v6497 = vmul.f32 %v6493, %v4333
          %v6498 = vsub.f32 %v6297, %v6494
          %v6499 = vsub.f32 %v6299, %v6495
          %v6500 = vsub.f32 %v6461, %v6496
          %v6501 = vsub.f32 %v6463, %v6497
          %v6502 = vmul.f32 %v6498, %v6498
          %v6503 = vmul.f32 %v6499, %v6499
          %v6504 = vmul.f32 %v6500, %v6500
          %v6505 = vmul.f32 %v6501, %v6501
          %v6506 = vrot.slane %v6502, 4
          %v6507 = vadd.f32 %v6502, %v6506
          %v6508 = vrot.slane %v6507, 2
          %v6509 = vadd.f32 %v6507, %v6508
          %v6510 = vrot.slane %v6509, 1
          %v6511 = vadd.f32 %v6509, %v6510
          %v6512 = vrot.slane %v6503, 4
          %v6513 = vadd.f32 %v6503, %v6512
          %v6514 = vrot.slane %v6513, 2
          %v6515 = vadd.f32 %v6513, %v6514
          %v6516 = vrot.slane %v6515, 1
          %v6517 = vadd.f32 %v6515, %v6516
          %v6518 = vrot.slane %v6504, 4
          %v6519 = vadd.f32 %v6504, %v6518
          %v6520 = vrot.slane %v6519, 2
          %v6521 = vadd.f32 %v6519, %v6520
          %v6522 = vrot.slane %v6521, 1
          %v6523 = vadd.f32 %v6521, %v6522
          %v6524 = vrot.slane %v6505, 4
          %v6525 = vadd.f32 %v6505, %v6524
          %v6526 = vrot.slane %v6525, 2
          %v6527 = vadd.f32 %v6525, %v6526
          %v6528 = vrot.slane %v6527, 1
          %v6529 = vadd.f32 %v6527, %v6528
          %v6530 = vmul.f32 %v6511, %v4333
          %v6531 = vmul.f32 %v6517, %v4333
          %v6532 = vmul.f32 %v6523, %v4333
          %v6533 = vmul.f32 %v6529, %v4333
          %v6534 = vadd.f32 %v6530, 1e-05
          %v6535 = vadd.f32 %v6531, 1e-05
          %v6536 = vadd.f32 %v6532, 1e-05
          %v6537 = vadd.f32 %v6533, 1e-05
          %v6538 = vrsqrt.pop %v6534
          %v6539 = vrsqrt.pop %v6535
          %v6540 = vrsqrt.pop %v6536
          %v6541 = vrsqrt.pop %v6537
          %v6546 = vcombine.low %v6538, %v6539
          %v6547 = vcombine.low %v6540, %v6541
          %v6549 = vunpack.c.l.s4 1966171168
          %v6550 = vunpack.c.0.s8 %v6549
          %v6551 = vlaneseq
          %v6552 = vshrl.u32 %v6551, 7
          %v6553 = vsub.s32 %v6550, %v6552
          %v6554 = vrot.slane %v6546, %v6553
          %v6556 = vunpack.c.l.s4 1966171168
          %v6557 = vunpack.c.0.s8 %v6556
          %v6558 = vlaneseq
          %v6559 = vshrl.u32 %v6558, 7
          %v6560 = vsub.s32 %v6557, %v6559
          %v6561 = vrot.slane %v6547, %v6560
          %v6562 = vcombine.low %v6554, %v6561
          %v6564 = vunpack.c.l.s4 1966171168
          %v6565 = vunpack.c.0.s8 %v6564
          %v6566 = vlaneseq
          %v6567 = vshrl.u32 %v6566, 7
          %v6568 = vsub.s32 %v6565, %v6567
          %v6569 = vrot.slane %v6562, %v6568
          %v6571 = vmul.f32 %v6467, %v6569
          %v6573 = vlaneseq
          %v6574 = vshrl.u32 %v6573, 7
          %v6575 = vsub.s32 0, %v6574
          %v6576 = vrot.slane %v6571, %v6575
          %v6577 = vlaneseq
          %v6578 = vshrl.u32 %v6577, 7
          %v6579 = vsub.s32 1, %v6578
          %v6580 = vrot.slane %v6571, %v6579
          %v6581 = vlaneseq
          %v6582 = vshrl.u32 %v6581, 7
          %v6583 = vsub.s32 2, %v6582
          %v6584 = vrot.slane %v6571, %v6583
          %v6585 = vlaneseq
          %v6586 = vshrl.u32 %v6585, 7
          %v6587 = vsub.s32 3, %v6586
          %v6588 = vrot.slane %v6571, %v6587
          %v6593 = vmul.f32 %v6498, %v6576
          %v6594 = vmul.f32 %v6499, %v6580
          %v6595 = vmul.f32 %v6500, %v6584
          %v6596 = vmul.f32 %v6501, %v6588
          %v6598 = vlaneseq
          %v6599 = vshrl.u32 %v6598, 7
          %v6600 = vsub.s32 0, %v6599
          %v6601 = vrot.slane %v6469, %v6600
          %v6602 = vlaneseq
          %v6603 = vshrl.u32 %v6602, 7
          %v6604 = vsub.s32 1, %v6603
          %v6605 = vrot.slane %v6469, %v6604
          %v6606 = vlaneseq
          %v6607 = vshrl.u32 %v6606, 7
          %v6608 = vsub.s32 2, %v6607
          %v6609 = vrot.slane %v6469, %v6608
          %v6610 = vlaneseq
          %v6611 = vshrl.u32 %v6610, 7
          %v6612 = vsub.s32 3, %v6611
          %v6613 = vrot.slane %v6469, %v6612
          %v6618 = vadd.f32 %v6593, %v6601
          %v6619 = vadd.f32 %v6594, %v6605
          %v6620 = vadd.f32 %v6595, %v6609
          %v6621 = vadd.f32 %v6596, %v6613
          %v6622 = vmax.f32 %v6618, 0.0
          %v6623 = vmax.f32 %v6619, 0.0
          %v6624 = vmax.f32 %v6620, 0.0
          %v6625 = vmax.f32 %v6621, 0.0
          %v6626 = vpack.c.bf16 %v6622, %v6622
          %v6627 = vpack.c.bf16 %v6623, %v6623
          %v6628 = vpack.c.bf16 %v6624, %v6624
          %v6629 = vpack.c.bf16 %v6625, %v6625
          %v6630 = vld [vmem:[#allocation12] sm:$0xff]
          %v6631 = vld [vmem:[#allocation12 + $0x8] sm:$0xff]
          %v6632 = vld [vmem:[#allocation12 + $0x10] sm:$0xff]
          %v6633 = vld [vmem:[#allocation12 + $0x18] sm:$0xff]
          %v6634 = vld [vmem:[#allocation12 + $0x20] sm:$0xff]
          %v6635 = vld [vmem:[#allocation12 + $0x28] sm:$0xff]
          %v6636 = vld [vmem:[#allocation12 + $0x30] sm:$0xff]
          %v6637 = vld [vmem:[#allocation12 + $0x38] sm:$0xff]
          %v6638 = vld [vmem:[#allocation12 + $0x40] sm:$0xff]
          %v6639 = vld [vmem:[#allocation12 + $0x48] sm:$0xff]
          %v6640 = vld [vmem:[#allocation12 + $0x50] sm:$0xff]
          %v6641 = vld [vmem:[#allocation12 + $0x58] sm:$0xff]
          %v6642 = vld [vmem:[#allocation12 + $0x60] sm:$0xff]
          %v6643 = vld [vmem:[#allocation12 + $0x68] sm:$0xff]
          %v6644 = vld [vmem:[#allocation12 + $0x70] sm:$0xff]
          %v6645 = vld [vmem:[#allocation12 + $0x78] sm:$0xff]
          %v6646 = vld [vmem:[#allocation12 + $0x80] sm:$0xff]
          %v6647 = vld [vmem:[#allocation12 + $0x88] sm:$0xff]
          %v6648 = vld [vmem:[#allocation12 + $0x90] sm:$0xff]
          %v6649 = vld [vmem:[#allocation12 + $0x98] sm:$0xff]
          %v6650 = vld [vmem:[#allocation12 + $0xa0] sm:$0xff]
          %v6651 = vld [vmem:[#allocation12 + $0xa8] sm:$0xff]
          %v6652 = vld [vmem:[#allocation12 + $0xb0] sm:$0xff]
          %v6653 = vld [vmem:[#allocation12 + $0xb8] sm:$0xff]
          %v6654 = vld [vmem:[#allocation12 + $0xc0] sm:$0xff]
          %v6655 = vld [vmem:[#allocation12 + $0xc8] sm:$0xff]
          %v6656 = vld [vmem:[#allocation12 + $0xd0] sm:$0xff]
          %v6657 = vld [vmem:[#allocation12 + $0xd8] sm:$0xff]
          %v6658 = vld [vmem:[#allocation12 + $0xe0] sm:$0xff]
          %v6659 = vld [vmem:[#allocation12 + $0xe8] sm:$0xff]
          %v6660 = vld [vmem:[#allocation12 + $0xf0] sm:$0xff]
          %v6661 = vld [vmem:[#allocation12 + $0xf8] sm:$0xff]
          %v6662 = vld [vmem:[#allocation12 + $0x100] sm:$0xff]
          %v6663 = vld [vmem:[#allocation12 + $0x108] sm:$0xff]
          %v6664 = vld [vmem:[#allocation12 + $0x110] sm:$0xff]
          %v6665 = vld [vmem:[#allocation12 + $0x118] sm:$0xff]
          %v6666 = vld [vmem:[#allocation12 + $0x120] sm:$0xff]
          %v6667 = vld [vmem:[#allocation12 + $0x128] sm:$0xff]
          %v6668 = vld [vmem:[#allocation12 + $0x130] sm:$0xff]
          %v6669 = vld [vmem:[#allocation12 + $0x138] sm:$0xff]
          %v6670 = vld [vmem:[#allocation12 + $0x140] sm:$0xff]
          %v6671 = vld [vmem:[#allocation12 + $0x148] sm:$0xff]
          %v6672 = vld [vmem:[#allocation12 + $0x150] sm:$0xff]
          %v6673 = vld [vmem:[#allocation12 + $0x158] sm:$0xff]
          %v6674 = vld [vmem:[#allocation12 + $0x160] sm:$0xff]
          %v6675 = vld [vmem:[#allocation12 + $0x168] sm:$0xff]
          %v6676 = vld [vmem:[#allocation12 + $0x170] sm:$0xff]
          %v6677 = vld [vmem:[#allocation12 + $0x178] sm:$0xff]
          %v6678 = vld [vmem:[#allocation12 + $0x180] sm:$0xff]
          %v6679 = vld [vmem:[#allocation12 + $0x188] sm:$0xff]
          %v6680 = vld [vmem:[#allocation12 + $0x190] sm:$0xff]
          %v6681 = vld [vmem:[#allocation12 + $0x198] sm:$0xff]
          %v6682 = vld [vmem:[#allocation12 + $0x1a0] sm:$0xff]
          %v6683 = vld [vmem:[#allocation12 + $0x1a8] sm:$0xff]
          %v6684 = vld [vmem:[#allocation12 + $0x1b0] sm:$0xff]
          %v6685 = vld [vmem:[#allocation12 + $0x1b8] sm:$0xff]
          %v6686 = vld [vmem:[#allocation12 + $0x1c0] sm:$0xff]
          %v6687 = vld [vmem:[#allocation12 + $0x1c8] sm:$0xff]
          %v6688 = vld [vmem:[#allocation12 + $0x1d0] sm:$0xff]
          %v6689 = vld [vmem:[#allocation12 + $0x1d8] sm:$0xff]
          %v6690 = vld [vmem:[#allocation12 + $0x1e0] sm:$0xff]
          %v6691 = vld [vmem:[#allocation12 + $0x1e8] sm:$0xff]
          %v6692 = vld [vmem:[#allocation12 + $0x1f0] sm:$0xff]
          %v6693 = vld [vmem:[#allocation12 + $0x1f8] sm:$0xff]
          %v6758 = vunpack.c.l.b16 %v6630
          %v6759 = vunpack.c.h.b16 %v6630
          %v6760 = vunpack.c.l.b16 %v6631
          %v6761 = vunpack.c.h.b16 %v6631
          %v6762 = vunpack.c.l.b16 %v6632
          %v6763 = vunpack.c.h.b16 %v6632
          %v6764 = vunpack.c.l.b16 %v6633
          %v6765 = vunpack.c.h.b16 %v6633
          %v6766 = vunpack.c.l.b16 %v6634
          %v6767 = vunpack.c.h.b16 %v6634
          %v6768 = vunpack.c.l.b16 %v6635
          %v6769 = vunpack.c.h.b16 %v6635
          %v6770 = vunpack.c.l.b16 %v6636
          %v6771 = vunpack.c.h.b16 %v6636
          %v6772 = vunpack.c.l.b16 %v6637
          %v6773 = vunpack.c.h.b16 %v6637
          %v6774 = vunpack.c.l.b16 %v6638
          %v6775 = vunpack.c.h.b16 %v6638
          %v6776 = vunpack.c.l.b16 %v6639
          %v6777 = vunpack.c.h.b16 %v6639
          %v6778 = vunpack.c.l.b16 %v6640
          %v6779 = vunpack.c.h.b16 %v6640
          %v6780 = vunpack.c.l.b16 %v6641
          %v6781 = vunpack.c.h.b16 %v6641
          %v6782 = vunpack.c.l.b16 %v6642
          %v6783 = vunpack.c.h.b16 %v6642
          %v6784 = vunpack.c.l.b16 %v6643
          %v6785 = vunpack.c.h.b16 %v6643
          %v6786 = vunpack.c.l.b16 %v6644
          %v6787 = vunpack.c.h.b16 %v6644
          %v6788 = vunpack.c.l.b16 %v6645
          %v6789 = vunpack.c.h.b16 %v6645
          %v6790 = vunpack.c.l.b16 %v6646
          %v6791 = vunpack.c.h.b16 %v6646
          %v6792 = vunpack.c.l.b16 %v6647
          %v6793 = vunpack.c.h.b16 %v6647
          %v6794 = vunpack.c.l.b16 %v6648
          %v6795 = vunpack.c.h.b16 %v6648
          %v6796 = vunpack.c.l.b16 %v6649
          %v6797 = vunpack.c.h.b16 %v6649
          %v6798 = vunpack.c.l.b16 %v6650
          %v6799 = vunpack.c.h.b16 %v6650
          %v6800 = vunpack.c.l.b16 %v6651
          %v6801 = vunpack.c.h.b16 %v6651
          %v6802 = vunpack.c.l.b16 %v6652
          %v6803 = vunpack.c.h.b16 %v6652
          %v6804 = vunpack.c.l.b16 %v6653
          %v6805 = vunpack.c.h.b16 %v6653
          %v6806 = vunpack.c.l.b16 %v6654
          %v6807 = vunpack.c.h.b16 %v6654
          %v6808 = vunpack.c.l.b16 %v6655
          %v6809 = vunpack.c.h.b16 %v6655
          %v6810 = vunpack.c.l.b16 %v6656
          %v6811 = vunpack.c.h.b16 %v6656
          %v6812 = vunpack.c.l.b16 %v6657
          %v6813 = vunpack.c.h.b16 %v6657
          %v6814 = vunpack.c.l.b16 %v6658
          %v6815 = vunpack.c.h.b16 %v6658
          %v6816 = vunpack.c.l.b16 %v6659
          %v6817 = vunpack.c.h.b16 %v6659
          %v6818 = vunpack.c.l.b16 %v6660
          %v6819 = vunpack.c.h.b16 %v6660
          %v6820 = vunpack.c.l.b16 %v6661
          %v6821 = vunpack.c.h.b16 %v6661
          %v6822 = vunpack.c.l.b16 %v6662
          %v6823 = vunpack.c.h.b16 %v6662
          %v6824 = vunpack.c.l.b16 %v6663
          %v6825 = vunpack.c.h.b16 %v6663
          %v6826 = vunpack.c.l.b16 %v6664
          %v6827 = vunpack.c.h.b16 %v6664
          %v6828 = vunpack.c.l.b16 %v6665
          %v6829 = vunpack.c.h.b16 %v6665
          %v6830 = vunpack.c.l.b16 %v6666
          %v6831 = vunpack.c.h.b16 %v6666
          %v6832 = vunpack.c.l.b16 %v6667
          %v6833 = vunpack.c.h.b16 %v6667
          %v6834 = vunpack.c.l.b16 %v6668
          %v6835 = vunpack.c.h.b16 %v6668
          %v6836 = vunpack.c.l.b16 %v6669
          %v6837 = vunpack.c.h.b16 %v6669
          %v6838 = vunpack.c.l.b16 %v6670
          %v6839 = vunpack.c.h.b16 %v6670
          %v6840 = vunpack.c.l.b16 %v6671
          %v6841 = vunpack.c.h.b16 %v6671
          %v6842 = vunpack.c.l.b16 %v6672
          %v6843 = vunpack.c.h.b16 %v6672
          %v6844 = vunpack.c.l.b16 %v6673
          %v6845 = vunpack.c.h.b16 %v6673
          %v6846 = vunpack.c.l.b16 %v6674
          %v6847 = vunpack.c.h.b16 %v6674
          %v6848 = vunpack.c.l.b16 %v6675
          %v6849 = vunpack.c.h.b16 %v6675
          %v6850 = vunpack.c.l.b16 %v6676
          %v6851 = vunpack.c.h.b16 %v6676
          %v6852 = vunpack.c.l.b16 %v6677
          %v6853 = vunpack.c.h.b16 %v6677
          %v6854 = vunpack.c.l.b16 %v6678
          %v6855 = vunpack.c.h.b16 %v6678
          %v6856 = vunpack.c.l.b16 %v6679
          %v6857 = vunpack.c.h.b16 %v6679
          %v6858 = vunpack.c.l.b16 %v6680
          %v6859 = vunpack.c.h.b16 %v6680
          %v6860 = vunpack.c.l.b16 %v6681
          %v6861 = vunpack.c.h.b16 %v6681
          %v6862 = vunpack.c.l.b16 %v6682
          %v6863 = vunpack.c.h.b16 %v6682
          %v6864 = vunpack.c.l.b16 %v6683
          %v6865 = vunpack.c.h.b16 %v6683
          %v6866 = vunpack.c.l.b16 %v6684
          %v6867 = vunpack.c.h.b16 %v6684
          %v6868 = vunpack.c.l.b16 %v6685
          %v6869 = vunpack.c.h.b16 %v6685
          %v6870 = vunpack.c.l.b16 %v6686
          %v6871 = vunpack.c.h.b16 %v6686
          %v6872 = vunpack.c.l.b16 %v6687
          %v6873 = vunpack.c.h.b16 %v6687
          %v6874 = vunpack.c.l.b16 %v6688
          %v6875 = vunpack.c.h.b16 %v6688
          %v6876 = vunpack.c.l.b16 %v6689
          %v6877 = vunpack.c.h.b16 %v6689
          %v6878 = vunpack.c.l.b16 %v6690
          %v6879 = vunpack.c.h.b16 %v6690
          %v6880 = vunpack.c.l.b16 %v6691
          %v6881 = vunpack.c.h.b16 %v6691
          %v6882 = vunpack.c.l.b16 %v6692
          %v6883 = vunpack.c.h.b16 %v6692
          %v6884 = vunpack.c.l.b16 %v6693
          %v6885 = vunpack.c.h.b16 %v6693
          %v6886 = vpack.c.b16 %v6760, %v6758
          %v6887 = vpack.c.b16 %v6761, %v6759
          %v6888 = vpack.c.b16 %v6764, %v6762
          %v6889 = vpack.c.b16 %v6765, %v6763
          %v6890 = vpack.c.b16 %v6768, %v6766
          %v6891 = vpack.c.b16 %v6769, %v6767
          %v6892 = vpack.c.b16 %v6772, %v6770
          %v6893 = vpack.c.b16 %v6773, %v6771
          %v6894 = vpack.c.b16 %v6776, %v6774
          %v6895 = vpack.c.b16 %v6777, %v6775
          %v6896 = vpack.c.b16 %v6780, %v6778
          %v6897 = vpack.c.b16 %v6781, %v6779
          %v6898 = vpack.c.b16 %v6784, %v6782
          %v6899 = vpack.c.b16 %v6785, %v6783
          %v6900 = vpack.c.b16 %v6788, %v6786
          %v6901 = vpack.c.b16 %v6789, %v6787
          %v6902 = vpack.c.b16 %v6792, %v6790
          %v6903 = vpack.c.b16 %v6793, %v6791
          %v6904 = vpack.c.b16 %v6796, %v6794
          %v6905 = vpack.c.b16 %v6797, %v6795
          %v6906 = vpack.c.b16 %v6800, %v6798
          %v6907 = vpack.c.b16 %v6801, %v6799
          %v6908 = vpack.c.b16 %v6804, %v6802
          %v6909 = vpack.c.b16 %v6805, %v6803
          %v6910 = vpack.c.b16 %v6808, %v6806
          %v6911 = vpack.c.b16 %v6809, %v6807
          %v6912 = vpack.c.b16 %v6812, %v6810
          %v6913 = vpack.c.b16 %v6813, %v6811
          %v6914 = vpack.c.b16 %v6816, %v6814
          %v6915 = vpack.c.b16 %v6817, %v6815
          %v6916 = vpack.c.b16 %v6820, %v6818
          %v6917 = vpack.c.b16 %v6821, %v6819
          %v6918 = vpack.c.b16 %v6824, %v6822
          %v6919 = vpack.c.b16 %v6825, %v6823
          %v6920 = vpack.c.b16 %v6828, %v6826
          %v6921 = vpack.c.b16 %v6829, %v6827
          %v6922 = vpack.c.b16 %v6832, %v6830
          %v6923 = vpack.c.b16 %v6833, %v6831
          %v6924 = vpack.c.b16 %v6836, %v6834
          %v6925 = vpack.c.b16 %v6837, %v6835
          %v6926 = vpack.c.b16 %v6840, %v6838
          %v6927 = vpack.c.b16 %v6841, %v6839
          %v6928 = vpack.c.b16 %v6844, %v6842
          %v6929 = vpack.c.b16 %v6845, %v6843
          %v6930 = vpack.c.b16 %v6848, %v6846
          %v6931 = vpack.c.b16 %v6849, %v6847
          %v6932 = vpack.c.b16 %v6852, %v6850
          %v6933 = vpack.c.b16 %v6853, %v6851
          %v6934 = vpack.c.b16 %v6856, %v6854
          %v6935 = vpack.c.b16 %v6857, %v6855
          %v6936 = vpack.c.b16 %v6860, %v6858
          %v6937 = vpack.c.b16 %v6861, %v6859
          %v6938 = vpack.c.b16 %v6864, %v6862
          %v6939 = vpack.c.b16 %v6865, %v6863
          %v6940 = vpack.c.b16 %v6868, %v6866
          %v6941 = vpack.c.b16 %v6869, %v6867
          %v6942 = vpack.c.b16 %v6872, %v6870
          %v6943 = vpack.c.b16 %v6873, %v6871
          %v6944 = vpack.c.b16 %v6876, %v6874
          %v6945 = vpack.c.b16 %v6877, %v6875
          %v6946 = vpack.c.b16 %v6880, %v6878
          %v6947 = vpack.c.b16 %v6881, %v6879
          %v6948 = vpack.c.b16 %v6884, %v6882
          %v6949 = vpack.c.b16 %v6885, %v6883
          %7014 = vmatprep.subr.bf16.mxu0 %v6901
          %7015 = vmatpush1.bf16.msra.mxu0 %v6900
          %7016 = vmatprep.subr.bf16.mxu0 %v6899
          %7017 = vmatpush1.bf16.msra.mxu0 %v6898
          %7018 = vmatprep.subr.bf16.mxu0 %v6897
          %7019 = vmatpush1.bf16.msra.mxu0 %v6896
          %7020 = vmatprep.subr.bf16.mxu0 %v6895
          %7021 = vmatpush1.bf16.msra.mxu0 %v6894
          %7022 = vmatprep.subr.bf16.mxu0 %v6893
          %7023 = vmatpush1.bf16.msra.mxu0 %v6892
          %7024 = vmatprep.subr.bf16.mxu0 %v6891
          %7025 = vmatpush1.bf16.msra.mxu0 %v6890
          %7026 = vmatprep.subr.bf16.mxu0 %v6889
          %7027 = vmatpush1.bf16.msra.mxu0 %v6888
          %7028 = vmatprep.subr.bf16.mxu0 %v6887
          %7029 = vmatpush1.bf16.msra.mxu0 %v6886
          %7030 = vmatprep.subr.bf16.mxu0 %v6917
          %7031 = vmatpush2.bf16.msra.mxu0 %v6916
          %7032 = vmatprep.subr.bf16.mxu0 %v6915
          %7033 = vmatpush2.bf16.msra.mxu0 %v6914
          %7034 = vmatprep.subr.bf16.mxu0 %v6913
          %7035 = vmatpush2.bf16.msra.mxu0 %v6912
          %7036 = vmatprep.subr.bf16.mxu0 %v6911
          %7037 = vmatpush2.bf16.msra.mxu0 %v6910
          %7038 = vmatprep.subr.bf16.mxu0 %v6909
          %7039 = vmatpush2.bf16.msra.mxu0 %v6908
          %7040 = vmatprep.subr.bf16.mxu0 %v6907
          %7041 = vmatpush2.bf16.msra.mxu0 %v6906
          %7042 = vmatprep.subr.bf16.mxu0 %v6905
          %7043 = vmatpush2.bf16.msra.mxu0 %v6904
          %7044 = vmatprep.subr.bf16.mxu0 %v6903
          %7045 = vmatpush2.bf16.msra.mxu0 %v6902
          %7046 = vmatprep.mubr.bf16.mxu0 %v6627
          %7047 = vmatmul.mubr.bf16.gmra.mxu0 %v6626
          %v7048 = vpop.f32.mrf.mxu0
          %v7049 = vadd.f32 0.0, %v7048
          %v7050 = vpop.f32.mrf.mxu0
          %v7051 = vadd.f32 0.0, %v7050
          %v7052 = vpop.f32.mrf.mxu0
          %v7053 = vpop.f32.mrf.mxu0
          %7054 = vdwg.mxu0
          %7055 = vmatprep.subr.bf16.mxu0 %v6933
          %7056 = vmatpush1.bf16.msra.mxu0 %v6932
          %7057 = vmatprep.subr.bf16.mxu0 %v6931
          %7058 = vmatpush1.bf16.msra.mxu0 %v6930
          %7059 = vmatprep.subr.bf16.mxu0 %v6929
          %7060 = vmatpush1.bf16.msra.mxu0 %v6928
          %7061 = vmatprep.subr.bf16.mxu0 %v6927
          %7062 = vmatpush1.bf16.msra.mxu0 %v6926
          %7063 = vmatprep.subr.bf16.mxu0 %v6925
          %7064 = vmatpush1.bf16.msra.mxu0 %v6924
          %7065 = vmatprep.subr.bf16.mxu0 %v6923
          %7066 = vmatpush1.bf16.msra.mxu0 %v6922
          %7067 = vmatprep.subr.bf16.mxu0 %v6921
          %7068 = vmatpush1.bf16.msra.mxu0 %v6920
          %7069 = vmatprep.subr.bf16.mxu0 %v6919
          %7070 = vmatpush1.bf16.msra.mxu0 %v6918
          %7071 = vmatprep.subr.bf16.mxu0 %v6949
          %7072 = vmatpush2.bf16.msra.mxu0 %v6948
          %7073 = vmatprep.subr.bf16.mxu0 %v6947
          %7074 = vmatpush2.bf16.msra.mxu0 %v6946
          %7075 = vmatprep.subr.bf16.mxu0 %v6945
          %7076 = vmatpush2.bf16.msra.mxu0 %v6944
          %7077 = vmatprep.subr.bf16.mxu0 %v6943
          %7078 = vmatpush2.bf16.msra.mxu0 %v6942
          %7079 = vmatprep.subr.bf16.mxu0 %v6941
          %7080 = vmatpush2.bf16.msra.mxu0 %v6940
          %7081 = vmatprep.subr.bf16.mxu0 %v6939
          %7082 = vmatpush2.bf16.msra.mxu0 %v6938
          %7083 = vmatprep.subr.bf16.mxu0 %v6937
          %7084 = vmatpush2.bf16.msra.mxu0 %v6936
          %7085 = vmatprep.subr.bf16.mxu0 %v6935
          %7086 = vmatpush2.bf16.msra.mxu0 %v6934
          %7087 = vmatprep.mubr.bf16.mxu0 %v6629
          %7088 = vmatmul.mubr.bf16.gmra.mxu0 %v6628
          %v7089 = vpop.f32.mrf.mxu0
          %v7090 = vadd.f32 %v7049, %v7089
          %v7091 = vpop.f32.mrf.mxu0
          %v7092 = vadd.f32 %v7051, %v7091
          %v7093 = vpop.f32.mrf.mxu0
          %v7094 = vpop.f32.mrf.mxu0
          %7095 = vdwg.mxu0
          %v7096 = vld [vmem:[#allocation14] ss:$2 sm:$0x3]
          %s7097 = scalar_lea.vmem [#allocation14], 1
          %v7098 = vld [vmem:[%s7097] ss:$2 sm:$0x3]
          %v7099 = vrot.slane %v7090, 4
          %v7100 = vadd.f32 %v7090, %v7099
          %v7101 = vrot.slane %v7100, 2
          %v7102 = vadd.f32 %v7100, %v7101
          %v7103 = vrot.slane %v7102, 1
          %v7104 = vadd.f32 %v7102, %v7103
          %v7105 = vrot.slane %v7092, 4
          %v7106 = vadd.f32 %v7092, %v7105
          %v7107 = vrot.slane %v7106, 2
          %v7108 = vadd.f32 %v7106, %v7107
          %v7109 = vrot.slane %v7108, 1
          %v7110 = vadd.f32 %v7108, %v7109
          %v7111 = vmul.f32 %v7104, %v4333
          %v7112 = vmul.f32 %v7110, %v4333
          %v7113 = vsub.f32 %v7090, %v7111
          %v7114 = vsub.f32 %v7092, %v7112
          %v7115 = vmul.f32 %v7113, %v7113
          %v7116 = vmul.f32 %v7114, %v7114
          %v7117 = vrot.slane %v7115, 4
          %v7118 = vadd.f32 %v7115, %v7117
          %v7119 = vrot.slane %v7118, 2
          %v7120 = vadd.f32 %v7118, %v7119
          %v7121 = vrot.slane %v7120, 1
          %v7122 = vadd.f32 %v7120, %v7121
          %v7123 = vrot.slane %v7116, 4
          %v7124 = vadd.f32 %v7116, %v7123
          %v7125 = vrot.slane %v7124, 2
          %v7126 = vadd.f32 %v7124, %v7125
          %v7127 = vrot.slane %v7126, 1
          %v7128 = vadd.f32 %v7126, %v7127
          %v7129 = vmul.f32 %v7122, %v4333
          %v7130 = vmul.f32 %v7128, %v4333
          %v7131 = vadd.f32 %v7129, 1e-05
          %v7132 = vadd.f32 %v7130, 1e-05
          %v7133 = vrsqrt.pop %v7131
          %v7134 = vrsqrt.pop %v7132
          %v7137 = vcombine.low %v7133, %v7134
          %v7139 = vunpack.c.l.s4 1966171168
          %v7140 = vunpack.c.0.s8 %v7139
          %v7141 = vlaneseq
          %v7142 = vshrl.u32 %v7141, 7
          %v7143 = vsub.s32 %v7140, %v7142
          %v7144 = vrot.slane %v7137, %v7143
          %v7146 = vunpack.c.l.s4 1966171168
          %v7147 = vunpack.c.0.s8 %v7146
          %v7148 = vlaneseq
          %v7149 = vshrl.u32 %v7148, 7
          %v7150 = vsub.s32 %v7147, %v7149
          %v7151 = vrot.slane %v7144, %v7150
          %v7153 = vmul.f32 %v7096, %v7151
          %v7155 = vlaneseq
          %v7156 = vshrl.u32 %v7155, 7
          %v7157 = vsub.s32 0, %v7156
          %v7158 = vrot.slane %v7153, %v7157
          %v7159 = vlaneseq
          %v7160 = vshrl.u32 %v7159, 7
          %v7161 = vsub.s32 1, %v7160
          %v7162 = vrot.slane %v7153, %v7161
          %v7165 = vmul.f32 %v7113, %v7158
          %v7166 = vmul.f32 %v7114, %v7162
          %v7168 = vlaneseq
          %v7169 = vshrl.u32 %v7168, 7
          %v7170 = vsub.s32 0, %v7169
          %v7171 = vrot.slane %v7098, %v7170
          %v7172 = vlaneseq
          %v7173 = vshrl.u32 %v7172, 7
          %v7174 = vsub.s32 1, %v7173
          %v7175 = vrot.slane %v7098, %v7174
          %v7178 = vadd.f32 %v7165, %v7171
          %v7179 = vadd.f32 %v7166, %v7175
          %v7180 = vmax.f32 %v7178, 0.0
          %v7181 = vmax.f32 %v7179, 0.0
          %v7182 = vpack.c.bf16 %v7180, %v7180
          %v7183 = vpack.c.bf16 %v7181, %v7181
          %v7184 = vld [vmem:[#allocation15] sm:$0xf]
          %v7185 = vld [vmem:[#allocation15 + $0x4] sm:$0xf]
          %v7186 = vld [vmem:[#allocation15 + $0x8] sm:$0xf]
          %v7187 = vld [vmem:[#allocation15 + $0xc] sm:$0xf]
          %v7188 = vld [vmem:[#allocation15 + $0x10] sm:$0xf]
          %v7189 = vld [vmem:[#allocation15 + $0x14] sm:$0xf]
          %v7190 = vld [vmem:[#allocation15 + $0x18] sm:$0xf]
          %v7191 = vld [vmem:[#allocation15 + $0x1c] sm:$0xf]
          %v7192 = vld [vmem:[#allocation15 + $0x20] sm:$0xf]
          %v7193 = vld [vmem:[#allocation15 + $0x24] sm:$0xf]
          %v7194 = vld [vmem:[#allocation15 + $0x28] sm:$0xf]
          %v7195 = vld [vmem:[#allocation15 + $0x2c] sm:$0xf]
          %v7196 = vld [vmem:[#allocation15 + $0x30] sm:$0xf]
          %v7197 = vld [vmem:[#allocation15 + $0x34] sm:$0xf]
          %v7198 = vld [vmem:[#allocation15 + $0x38] sm:$0xf]
          %v7199 = vld [vmem:[#allocation15 + $0x3c] sm:$0xf]
          %v7200 = vld [vmem:[#allocation15 + $0x40] sm:$0xf]
          %v7201 = vld [vmem:[#allocation15 + $0x44] sm:$0xf]
          %v7202 = vld [vmem:[#allocation15 + $0x48] sm:$0xf]
          %v7203 = vld [vmem:[#allocation15 + $0x4c] sm:$0xf]
          %v7204 = vld [vmem:[#allocation15 + $0x50] sm:$0xf]
          %v7205 = vld [vmem:[#allocation15 + $0x54] sm:$0xf]
          %v7206 = vld [vmem:[#allocation15 + $0x58] sm:$0xf]
          %v7207 = vld [vmem:[#allocation15 + $0x5c] sm:$0xf]
          %v7208 = vld [vmem:[#allocation15 + $0x60] sm:$0xf]
          %v7209 = vld [vmem:[#allocation15 + $0x64] sm:$0xf]
          %v7210 = vld [vmem:[#allocation15 + $0x68] sm:$0xf]
          %v7211 = vld [vmem:[#allocation15 + $0x6c] sm:$0xf]
          %v7212 = vld [vmem:[#allocation15 + $0x70] sm:$0xf]
          %v7213 = vld [vmem:[#allocation15 + $0x74] sm:$0xf]
          %v7214 = vld [vmem:[#allocation15 + $0x78] sm:$0xf]
          %v7215 = vld [vmem:[#allocation15 + $0x7c] sm:$0xf]
          %v7216 = vld [vmem:[#allocation17] sm:$0x1]
          %v7218 = vlaneseq
          %v7219 = vshrl.u32 %v7218, 7
          %v7220 = vsub.s32 0, %v7219
          %v7221 = vrot.slane %v7216, %v7220
          %v7255 = vunpack.c.l.b16 %v7184
          %v7256 = vunpack.c.l.b16 %v7185
          %v7257 = vunpack.c.l.b16 %v7186
          %v7258 = vunpack.c.l.b16 %v7187
          %v7259 = vunpack.c.l.b16 %v7188
          %v7260 = vunpack.c.l.b16 %v7189
          %v7261 = vunpack.c.l.b16 %v7190
          %v7262 = vunpack.c.l.b16 %v7191
          %v7263 = vunpack.c.l.b16 %v7192
          %v7264 = vunpack.c.l.b16 %v7193
          %v7265 = vunpack.c.l.b16 %v7194
          %v7266 = vunpack.c.l.b16 %v7195
          %v7267 = vunpack.c.l.b16 %v7196
          %v7268 = vunpack.c.l.b16 %v7197
          %v7269 = vunpack.c.l.b16 %v7198
          %v7270 = vunpack.c.l.b16 %v7199
          %v7271 = vunpack.c.l.b16 %v7200
          %v7272 = vunpack.c.l.b16 %v7201
          %v7273 = vunpack.c.l.b16 %v7202
          %v7274 = vunpack.c.l.b16 %v7203
          %v7275 = vunpack.c.l.b16 %v7204
          %v7276 = vunpack.c.l.b16 %v7205
          %v7277 = vunpack.c.l.b16 %v7206
          %v7278 = vunpack.c.l.b16 %v7207
          %v7279 = vunpack.c.l.b16 %v7208
          %v7280 = vunpack.c.l.b16 %v7209
          %v7281 = vunpack.c.l.b16 %v7210
          %v7282 = vunpack.c.l.b16 %v7211
          %v7283 = vunpack.c.l.b16 %v7212
          %v7284 = vunpack.c.l.b16 %v7213
          %v7285 = vunpack.c.l.b16 %v7214
          %v7286 = vunpack.c.l.b16 %v7215
          %v7287 = vpack.c.b16 %v7256, %v7255
          %v7288 = vpack.c.b16 %v7258, %v7257
          %v7289 = vpack.c.b16 %v7260, %v7259
          %v7290 = vpack.c.b16 %v7262, %v7261
          %v7291 = vpack.c.b16 %v7264, %v7263
          %v7292 = vpack.c.b16 %v7266, %v7265
          %v7293 = vpack.c.b16 %v7268, %v7267
          %v7294 = vpack.c.b16 %v7270, %v7269
          %v7295 = vpack.c.b16 %v7272, %v7271
          %v7296 = vpack.c.b16 %v7274, %v7273
          %v7297 = vpack.c.b16 %v7276, %v7275
          %v7298 = vpack.c.b16 %v7278, %v7277
          %v7299 = vpack.c.b16 %v7280, %v7279
          %v7300 = vpack.c.b16 %v7282, %v7281
          %v7301 = vpack.c.b16 %v7284, %v7283
          %v7302 = vpack.c.b16 %v7286, %v7285
          %7319 = vmatprep.subr.bf16.mxu0 0
          %7320 = vmatpush1.bf16.msra.mxu0 %v7294
          %7321 = vmatprep.subr.bf16.mxu0 0
          %7322 = vmatpush1.bf16.msra.mxu0 %v7293
          %7323 = vmatprep.subr.bf16.mxu0 0
          %7324 = vmatpush1.bf16.msra.mxu0 %v7292
          %7325 = vmatprep.subr.bf16.mxu0 0
          %7326 = vmatpush1.bf16.msra.mxu0 %v7291
          %7327 = vmatprep.subr.bf16.mxu0 0
          %7328 = vmatpush1.bf16.msra.mxu0 %v7290
          %7329 = vmatprep.subr.bf16.mxu0 0
          %7330 = vmatpush1.bf16.msra.mxu0 %v7289
          %7331 = vmatprep.subr.bf16.mxu0 0
          %7332 = vmatpush1.bf16.msra.mxu0 %v7288
          %7333 = vmatprep.subr.bf16.mxu0 0
          %7334 = vmatpush1.bf16.msra.mxu0 %v7287
          %7335 = vmatprep.subr.bf16.mxu0 0
          %7336 = vmatpush2.bf16.msra.mxu0 %v7302
          %7337 = vmatprep.subr.bf16.mxu0 0
          %7338 = vmatpush2.bf16.msra.mxu0 %v7301
          %7339 = vmatprep.subr.bf16.mxu0 0
          %7340 = vmatpush2.bf16.msra.mxu0 %v7300
          %7341 = vmatprep.subr.bf16.mxu0 0
          %7342 = vmatpush2.bf16.msra.mxu0 %v7299
          %7343 = vmatprep.subr.bf16.mxu0 0
          %7344 = vmatpush2.bf16.msra.mxu0 %v7298
          %7345 = vmatprep.subr.bf16.mxu0 0
          %7346 = vmatpush2.bf16.msra.mxu0 %v7297
          %7347 = vmatprep.subr.bf16.mxu0 0
          %7348 = vmatpush2.bf16.msra.mxu0 %v7296
          %7349 = vmatprep.subr.bf16.mxu0 0
          %7350 = vmatpush2.bf16.msra.mxu0 %v7295
          %7351 = vmatprep.mubr.bf16.mxu0 %v7183
          %7352 = vmatmul.mubr.bf16.gmra.mxu0 %v7182
          %v7353 = vpop.f32.mrf.mxu0
          %v7354 = vadd.f32 %v7221, %v7353
          %v7355 = vpop.f32.mrf.mxu0
          %v7356 = vpop.f32.mrf.mxu0
          %v7357 = vpop.f32.mrf.mxu0
          %7358 = vdwg.mxu0
          %7359 = vst [vmem:[#allocation18] sm:$0xff] %v7354
        $region100: #{tpu_custom_call.1} parent=55 // pred_fallthru
          _
        // Predicated region
        $region101: #{tpu_custom_call.1} parent=55 // pred_check
          %p7360 = pneg %p242
        $region102: #{tpu_custom_call.1} parent=55 // pred_check_branch
          %7362 = sbr.rel (%p7360) target = $region104
        $region103: #{tpu_custom_call.1} parent=55 // pred_region
          %s7364 = ssub.s32 128, 128
          %7365 = vsyncadd [#allocation5], %s7364
          %s7367 = sshll.u32 [#allocation18], 4
          %s7368 = int_to_ptr.vmem [resolvable:$true] %s7367
          %7370 = dma.vmem_to_hbm [thread:$0]  %s7368, 128, %s9, [#allocation5]
        $region104: #{tpu_custom_call.1} parent=55 // pred_fallthru
          _
        // Predicated region
        $region105: #{tpu_custom_call.1} parent=55 // pred_check
          %p7371 = pneg %p242
        $region106: #{tpu_custom_call.1} parent=55 // pred_check_branch
          %7373 = sbr.rel (%p7371) target = $region108
        $region107: #{tpu_custom_call.1} parent=55 // pred_region
          %7374 = dma.done [#allocation5], 128
        $region108: #{tpu_custom_call.1} parent=55 // pred_fallthru
          _
      $region56: #{tpu_custom_call.1} parent=5 // pred_fallthru
        _
      %p7375 = scmp.le.s32.totalorder 2, %s25
      // Predicated region
      $region109: #{tpu_custom_call.1} parent=5 // pred_check
        %p7376 = pneg %p7375
      $region110: #{tpu_custom_call.1} parent=5 // pred_check_branch
        %7378 = sbr.rel (%p7376) target = $region112
      $region111: #{tpu_custom_call.1} parent=5 // pred_region
        %s7379 = ssub.s32 %s25, 2
      $region112: #{tpu_custom_call.1} parent=5 // pred_fallthru
        _
    $region6: #{tpu_custom_call.1} parent=1 // loop_footer
      %s29 = sadd.s32 1, %s25
    $region7: #{tpu_custom_call.1} parent=1 // loop_footer_branch
      %24 = sbr.rel target = $region3
    $region8: #{tpu_custom_call.1} parent=1 // loop_exit
      _
    %7380 = vsyncpa [#allocation4], 1
    %s7381 = scalar_lea.sflag [#allocation4], 1
    %7382 = vsyncpa %s7381, 1
    %7383 = vsyncpa [#allocation7], 1
    %s7384 = scalar_lea.sflag [#allocation7], 1
    %7385 = vsyncpa %s7384, 1
    %7386 = vsyncpa [#allocation10], 1
    %7387 = vsyncpa [#allocation13], 1
    %7388 = vsyncpa [#allocation16], 1
    %7389 = vsyncpa [#allocation5], 1
    %s7390 = scalar_lea.sflag [#allocation5], 1
    %7391 = vsyncpa %s7390, 1

</llo_original>
